<compile_context>
chip_gen: v6e
topology: v6e:2x2x1
jax: 0.10.0
libtpu: 0.0.40
codegen_flags: <defaults>
</compile_context>

<pallas_src>
import functools
import math

import jax
import jax.numpy as jnp
from jax import lax
from jax.experimental import pallas as pl
from jax.experimental.pallas import tpu as pltpu


_LN_EPS = 1e-5


def _layer_norm(x, g, b):
    mu = jnp.mean(x, axis=-1, keepdims=True)
    var = jnp.mean((x - mu) ** 2, axis=-1, keepdims=True)
    return (x - mu) * jax.lax.rsqrt(var + _LN_EPS) * g + b


def _swish(x):
    return x * jax.nn.sigmoid(x)


def _dot_bf16(a_f32, w_bf16):
    # bf16 operands on the MXU, f32 accumulation.
    return jnp.dot(a_f32.astype(jnp.bfloat16), w_bf16,
                   preferred_element_type=jnp.float32)


# Order of the stacked per-layer weight operands passed to the kernel.
_WEIGHT_ORDER = (
    "vecs_d",     # (L, 14, d_model) f32: ln1_g, ln1_b, b12, lna_g, lna_b, bo,
                  #                       lnc_g, lnc_b, pw2_b, ln2_g, ln2_b, b22, lnf_g, lnf_b
    "vecs_ff",    # (L, 2, d_ff)      f32: b11, b21
    "bqkv",       # (L, 3, H*dk)      f32: bq, bk, bv
    "bpw1",       # (L, 1, 2*inner)   f32
    "vecs_conv",  # (L, 3, inner)     f32: dw_bias, bn_scale, bn_shift (BatchNorm folded, eval)
    "w11",        # (L, d_model, d_ff)    bf16
    "w12",        # (L, d_ff, d_model)    bf16
    "wq",         # (L, d_model, H*dk)    bf16
    "wk",         # (L, d_model, H*dk)    bf16
    "wv",         # (L, d_model, H*dk)    bf16
    "wo",         # (L, H*dk, d_model)    bf16
    "pw1",        # (L, d_model, 2*inner) bf16
    "dw",         # (L, K, inner)         f32 (depthwise taps, applied elementwise)
    "pw2",        # (L, inner, d_model)   bf16
    "w21",        # (L, d_model, d_ff)    bf16
    "w22",        # (L, d_ff, d_model)    bf16
)


def decoder_kernel(
    mask_ref, x_ref,
    vecs_d_ref, vecs_ff_ref, bqkv_ref, bpw1_ref, vecs_conv_ref,
    w11_ref, w12_ref, wq_ref, wk_ref, wv_ref, wo_ref,
    pw1_ref, dw_ref, pw2_ref, w21_ref, w22_ref,
    o_ref,
    conv_buf, q_buf, ctx_buf,
    *, n_head, d_k, kernel_size, tq, n_chunks, bb_size,
):
    T = o_ref.shape[1]
    hdk = n_head * d_k
    inner = conv_buf.shape[1]
    pad = (kernel_size - 1) // 2
    right = kernel_size - 1 - pad
    base = ((pad + 7) // 8) * 8 if pad > 0 else 0

    # Layer 0 of each batch block: seed the resident activation slab and zero the conv pad
    # rows once (the scratch persists across the layer axis; pads never get dirtied).
    @pl.when(pl.program_id(1) == 0)
    def _seed():
        o_ref[...] = x_ref[...].astype(jnp.float32)
        if pad > 0:
            conv_buf[0:base, :] = jnp.zeros((base, inner), jnp.float32)
        if right > 0:
            conv_buf[base + T:base + T + right, :] = jnp.zeros((right, inner), jnp.float32)

    # Small per-layer vector slabs (loaded once per grid step).
    vd = vecs_d_ref[0]                          # (14, D)
    vff = vecs_ff_ref[0]                        # (2, d_ff)
    bqkv = bqkv_ref[0]                          # (3, H*dk)
    bpw1 = bpw1_ref[0]                          # (1, 2*inner)
    vconv = vecs_conv_ref[0]                    # (3, inner)
    scale = jnp.float32(1.0 / math.sqrt(d_k))

    def row_body(bb, carry):
        x = o_ref[bb].astype(jnp.float32)       # (T, D), resident across layer steps
        # Additive key mask (1.0 => padded key position).
        key_neg = jnp.where(mask_ref[bb] > 0.5, jnp.float32(-1e9), jnp.float32(0.0))  # (1, T)
        neg = key_neg[None]                     # (1, 1, T)

        # ---------------- FFN1 (macaron, half residual) -------------------
        h = _layer_norm(x, vd[0], vd[1])
        h = _swish(_dot_bf16(h, w11_ref[0]) + vff[0])
        h = _dot_bf16(h, w12_ref[0]) + vd[2]
        x = x + 0.5 * h

        # ---------------- Multi-head self attention -----------------------
        h = _layer_norm(x, vd[3], vd[4])
        q = _dot_bf16(h, wq_ref[0]) + bqkv[0]   # (T, H*dk)
        k = _dot_bf16(h, wk_ref[0]) + bqkv[1]
        v = _dot_bf16(h, wv_ref[0]) + bqkv[2]

        # Single reshape + major-dim transpose per tensor (no per-head lane slices).
        q3 = jnp.transpose(q.reshape(T, n_head, d_k), (1, 0, 2))                       # (H,T,dk) f32
        k3 = jnp.transpose(k.reshape(T, n_head, d_k), (1, 0, 2)).astype(jnp.bfloat16)  # (H,T,dk)
        v3 = jnp.transpose(v.reshape(T, n_head, d_k), (1, 0, 2)).astype(jnp.bfloat16)  # (H,T,dk)

        if n_chunks == 1:
            s = jnp.einsum("hqd,hkd->hqk", q3.astype(jnp.bfloat16), k3,
                           preferred_element_type=jnp.float32) * scale + neg
            s = s - jnp.max(s, axis=-1, keepdims=True)
            p = jnp.exp(s)
            p = p * pl.reciprocal(jnp.sum(p, axis=-1, keepdims=True), approx=True)
            ctx = jnp.einsum("hqk,hkd->hqd", p.astype(jnp.bfloat16), v3,
                             preferred_element_type=jnp.float32)                       # (H,T,dk)
            attn2d = jnp.transpose(ctx, (1, 0, 2)).reshape(T, hdk)
        else:
            # fori_loop bounds the live (H, tq, T) score slab to one chunk; per-chunk
            # context goes straight into a lane-dense (T, H*dk) VMEM scratch.
            q_buf[...] = q3

            def chunk_body(c, cc):
                start = jnp.minimum(c * tq, T - tq)       # clamp => last chunk may overlap
                if T % 8 == 0:
                    start = pl.multiple_of(start, 8)      # tq is a multiple of 8
                qc = q_buf[:, pl.ds(start, tq), :].astype(jnp.bfloat16)
                s = jnp.einsum("hqd,hkd->hqk", qc, k3,
                               preferred_element_type=jnp.float32) * scale + neg
                s = s - jnp.max(s, axis=-1, keepdims=True)
                p = jnp.exp(s)
                p = p * pl.reciprocal(jnp.sum(p, axis=-1, keepdims=True), approx=True)
                ctxc = jnp.einsum("hqk,hkd->hqd", p.astype(jnp.bfloat16), v3,
                                  preferred_element_type=jnp.float32)                  # (H,tq,dk)
                ctx_buf[pl.ds(start, tq), :] = jnp.transpose(ctxc, (1, 0, 2)).reshape(tq, hdk)
                return cc

            lax.fori_loop(0, n_chunks, chunk_body, 0)
            attn2d = ctx_buf[...]                                                      # (T, H*dk)

        attn2d = _dot_bf16(attn2d, wo_ref[0]) + vd[5]
        x = x + attn2d

        # ---------------- Convolution module -------------------------------
        h = _layer_norm(x, vd[6], vd[7])
        h = _dot_bf16(h, pw1_ref[0]) + bpw1[0]              # (T, 2*inner)
        h = h[:, :inner] * jax.nn.sigmoid(h[:, inner:])     # GLU

        # Depthwise conv over time via the sublane-aligned padded VMEM scratch ("same", odd K).
        # TODO(synk): even kernel_size would need PyTorch Conv1d's asymmetric padding semantics.
        conv_buf[base:base + T, :] = h
        dw = dw_ref[0]                                      # (K, inner)
        acc = jnp.zeros((T, inner), jnp.float32)
        for kk in range(kernel_size):
            st = base - pad + kk
            acc = acc + conv_buf[st:st + T, :] * dw[kk]
        h = acc + vconv[0]
        h = h * vconv[1] + vconv[2]                         # BatchNorm1d (eval, folded)
        h = _swish(h)
        h = _dot_bf16(h, pw2_ref[0]) + vd[8]
        x = x + h

        # ---------------- FFN2 (half residual) ------------------------------
        h = _layer_norm(x, vd[9], vd[10])
        h = _swish(_dot_bf16(h, w21_ref[0]) + vff[1])
        h = _dot_bf16(h, w22_ref[0]) + vd[11]
        x = x + 0.5 * h

        # ---------------- final LayerNorm ------------------------------------
        x = _layer_norm(x, vd[12], vd[13])
        o_ref[bb] = x.astype(o_ref.dtype)
        return carry

    lax.fori_loop(0, bb_size, row_body, 0)


def _vmem_budget_and_tq():
    """Per-generation VMEM limit + attention query-chunk cap."""
    cap = 0
    try:
        cap = int(getattr(pltpu.get_tpu_info(), "vmem_capacity_bytes", 0))
    except Exception:
        cap = 0
    if cap >= 96 * 1024 * 1024:               # v5e / v6e class (128 MiB physical VMEM)
        return 96 * 1024 * 1024, 256
    return 48 * 1024 * 1024, 128              # v7x class (64 MiB) or unknown: conservative


def _pick_batch_block(B, T, D, vmem_limit):
    """Largest divisor of B whose resident activations stay a small slice of the VMEM budget."""
    row_bytes = T * D * (2 * 4 + 2 * 2)       # f32 resident out (x2 bufs) + bf16 seed in (x2)
    cap = max(1, (vmem_limit // 4) // max(1, row_bytes))
    cap = min(cap, 8)                         # bound per-grid-step row loop work
    best = 1
    for cand in range(1, B + 1):
        if B % cand == 0 and cand <= cap:
            best = cand
    return best


def decoder_forward(x, mask_bool, params, *, n_head, d_att,
                    batch_block=None, max_query_chunk=None):
    """Fused Conformer decoder. mask_bool: (B, T) bool, True = padded frame."""
    B, T, D = x.shape
    n_layers = params["w11"].shape[0]
    kernel_size = params["dw"].shape[1]
    inner = params["dw"].shape[2]
    hdk = n_head * d_att
    assert kernel_size % 2 == 1, "even conv kernels need asymmetric 'same' padding"  # TODO(synk)

    vmem_limit, tq_cap = _vmem_budget_and_tq()

    # Attention query-chunk size (multiple of 8 when chunking).
    tq = int(max_query_chunk) if max_query_chunk is not None else tq_cap
    tq = min(tq, T)
    if tq < T:
        tq = max(8, (tq // 8) * 8)
    n_chunks = -(-T // tq)

    # Batch block (amortizes per-layer weight DMA over Bb rows; must divide B).
    bb = int(batch_block) if batch_block else _pick_batch_block(B, T, D, vmem_limit)
    bb = max(1, min(bb, B))
    while B % bb != 0:
        bb -= 1
    nb = B // bb

    pad = (kernel_size - 1) // 2
    right = kernel_size - 1 - pad
    base = ((pad + 7) // 8) * 8 if pad > 0 else 0
    conv_rows = base + T + right

    mask_f = mask_bool.astype(jnp.float32)[:, None, :]       # (B, 1, T)
    weights = [params[name] for name in _WEIGHT_ORDER]

    def wspec(w):
        nd = w.ndim
        return pl.BlockSpec((1,) + w.shape[1:],
                            lambda b, l, nd=nd: (l,) + (0,) * (nd - 1))

    in_specs = [
        pl.BlockSpec((bb, 1, T), lambda b, l: (b, 0, 0)),    # key mask (fetched once per block)
        pl.BlockSpec((bb, T, D), lambda b, l: (b, 0, 0)),    # bf16 seed activations
    ] + [wspec(w) for w in weights]

    kernel = functools.partial(decoder_kernel, n_head=n_head, d_k=d_att,
                               kernel_size=kernel_size, tq=tq, n_chunks=n_chunks,
                               bb_size=bb)

    return pl.pallas_call(
        kernel,
        out_shape=jax.ShapeDtypeStruct((B, T, D), jnp.float32),
        grid=(nb, n_layers),
        in_specs=in_specs,
        # Output block index constant over the layer axis => activations resident in VMEM.
        out_specs=pl.BlockSpec((bb, T, D), lambda b, l: (b, 0, 0)),
        scratch_shapes=[
            pltpu.VMEM((conv_rows, inner), jnp.float32),     # padded depthwise-conv buffer
            pltpu.VMEM((n_head, T, d_att), jnp.float32),     # head-major Q (chunked attention)
            pltpu.VMEM((T, hdk), jnp.float32),               # lane-dense attention context
        ],
        compiler_params=pltpu.CompilerParams(
            dimension_semantics=("parallel", "arbitrary"),
            vmem_limit_bytes=vmem_limit,
        ),
    )(mask_f, x.astype(jnp.bfloat16), *weights)


def init_decoder_params(key, n_layers, d_model, d_att, n_head, ff_exp, conv_exp, K):
    d_ff = d_model * ff_exp
    inner = d_model * conv_exp
    hdk = n_head * d_att
    L = n_layers
    ks = iter(jax.random.split(key, 40))

    def mat(shape, scale=0.02, dtype=jnp.bfloat16):
        return (jax.random.normal(next(ks), shape, jnp.float32) * scale).astype(dtype)

    def vec(shape, scale=0.02):
        return jax.random.normal(next(ks), shape, jnp.float32) * scale

    def ln_pair():
        g = 1.0 + 0.05 * jax.random.normal(next(ks), (L, d_model), jnp.float32)
        b = vec((L, d_model))
        return g, b

    ln1_g, ln1_b = ln_pair()
    lna_g, lna_b = ln_pair()
    lnc_g, lnc_b = ln_pair()
    ln2_g, ln2_b = ln_pair()
    lnf_g, lnf_b = ln_pair()
    b12, bo, pw2_b, b22 = vec((L, d_model)), vec((L, d_model)), vec((L, d_model)), vec((L, d_model))

    vecs_d = jnp.stack([ln1_g, ln1_b, b12, lna_g, lna_b, bo,
                        lnc_g, lnc_b, pw2_b, ln2_g, ln2_b, b22, lnf_g, lnf_b], axis=1)
    vecs_ff = jnp.stack([vec((L, d_ff)), vec((L, d_ff))], axis=1)
    bqkv = jnp.stack([vec((L, hdk)) for _ in range(3)], axis=1)
    bpw1 = vec((L, 1, 2 * inner))

    # BatchNorm1d (eval) folded with (synthetic) running stats.
    bn_gamma = 1.0 + 0.05 * jax.random.normal(next(ks), (L, inner), jnp.float32)
    bn_beta = vec((L, inner))
    bn_mean = vec((L, inner))
    bn_var = 1.0 + 0.05 * jax.random.normal(next(ks), (L, inner), jnp.float32) ** 2
    bn_scale = bn_gamma * jax.lax.rsqrt(bn_var + 1e-5)
    bn_shift = bn_beta - bn_mean * bn_scale
    dw_b = vec((L, inner))
    vecs_conv = jnp.stack([dw_b, bn_scale, bn_shift], axis=1)

    return {
        "vecs_d": vecs_d, "vecs_ff": vecs_ff, "bqkv": bqkv,
        "bpw1": bpw1, "vecs_conv": vecs_conv,
        "w11": mat((L, d_model, d_ff)),
        "w12": mat((L, d_ff, d_model)),
        "wq": mat((L, d_model, hdk)),
        "wk": mat((L, d_model, hdk)),
        "wv": mat((L, d_model, hdk)),
        "wo": mat((L, hdk, d_model)),
        "pw1": mat((L, d_model, 2 * inner)),
        "dw": mat((L, K, inner), dtype=jnp.float32),
        "pw2": mat((L, inner, d_model)),
        "w21": mat((L, d_model, d_ff)),
        "w22": mat((L, d_ff, d_model)),
    }


def decoder_reference(x, mask_bool, params, *, n_head, d_att):
    """Pure-JAX float32 reference of the same forward pass (self-check)."""
    B, T, D = x.shape
    L = params["w11"].shape[0]
    K = params["dw"].shape[1]
    inner = params["dw"].shape[2]
    d_k = d_att
    neg = jnp.where(mask_bool, -1e9, 0.0).astype(jnp.float32)[:, None, None, :]  # (B,1,1,T)

    def ln(z, g, b):
        mu = z.mean(-1, keepdims=True)
        var = ((z - mu) ** 2).mean(-1, keepdims=True)
        return (z - mu) / jnp.sqrt(var + _LN_EPS) * g + b

    def swish(z):
        return z * jax.nn.sigmoid(z)

    def w(name, l):
        return params[name][l].astype(jnp.float32)

    x = x.astype(jnp.float32)
    for l in range(L):
        vd, vff = params["vecs_d"][l], params["vecs_ff"][l]
        bqkv, bpw1, vconv = params["bqkv"][l], params["bpw1"][l], params["vecs_conv"][l]

        h = ln(x, vd[0], vd[1])
        h = swish(h @ w("w11", l) + vff[0])
        x = x + 0.5 * (h @ w("w12", l) + vd[2])

        h = ln(x, vd[3], vd[4])
        q = (h @ w("wq", l) + bqkv[0]).reshape(B, T, n_head, d_k).transpose(0, 2, 1, 3)
        k = (h @ w("wk", l) + bqkv[1]).reshape(B, T, n_head, d_k).transpose(0, 2, 1, 3)
        v = (h @ w("wv", l) + bqkv[2]).reshape(B, T, n_head, d_k).transpose(0, 2, 1, 3)
        s = jnp.einsum("bhqd,bhkd->bhqk", q, k) / jnp.sqrt(jnp.float32(d_k)) + neg
        p = jax.nn.softmax(s, axis=-1)
        ctx = jnp.einsum("bhqk,bhkd->bhqd", p, v)
        attn = ctx.transpose(0, 2, 1, 3).reshape(B, T, n_head * d_k)
        x = x + (attn @ w("wo", l) + vd[5])

        h = ln(x, vd[6], vd[7])
        h = h @ w("pw1", l) + bpw1[0]
        h = h[..., :inner] * jax.nn.sigmoid(h[..., inner:])
        pad = (K - 1) // 2
        hp = jnp.pad(h, ((0, 0), (pad, K - 1 - pad), (0, 0)))
        dw = params["dw"][l]
        acc = jnp.zeros_like(h)
        for kk in range(K):
            acc = acc + hp[:, kk:kk + T, :] * dw[kk]
        h = acc + vconv[0]
        h = h * vconv[1] + vconv[2]
        h = swish(h)
        x = x + (h @ w("pw2", l) + vd[8])

        h = ln(x, vd[9], vd[10])
        h = swish(h @ w("w21", l) + vff[1])
        x = x + 0.5 * (h @ w("w22", l) + vd[11])

        x = ln(x, vd[12], vd[13])
    return x


if __name__ == "__main__":
    B = 2
    d_model, d_att, n_head = 32, 16, 2
    n_layers, K = 2, 3
    ff_exp, conv_exp = 2, 2

    key = jax.random.PRNGKey(0)
    kx, kp, kx2 = jax.random.split(key, 3)
    params = init_decoder_params(kp, n_layers, d_model, d_att, n_head,
                                 ff_exp, conv_exp, K)

    # --- run 1: short sequence (single-chunk attention path) ----------------
    T = 8
    x = jax.random.normal(kx, (B, T, d_model), jnp.float32)
    lens = jnp.array([T, T - 3], dtype=jnp.int32)
    mask = jnp.arange(T)[None, :] >= lens[:, None]           # True = padded frame

    out = decoder_forward(x, mask, params, n_head=n_head, d_att=d_att)
    out = jax.block_until_ready(out)
    ref = decoder_reference(x, mask, params, n_head=n_head, d_att=d_att)
    err = float(jnp.max(jnp.abs(out - ref)))
    assert out.shape == (B, T, d_model)
    assert bool(jnp.all(jnp.isfinite(out)))
    assert err < 0.1, f"kernel/reference mismatch (short): max|diff|={err}"

    # --- run 2: longer sequence with a forced small query chunk -------------
    # (exercises the fori_loop chunked-attention + scratch-writeback path)
    T2 = 24
    x2 = jax.random.normal(kx2, (B, T2, d_model), jnp.float32)
    lens2 = jnp.array([T2, T2 - 7], dtype=jnp.int32)
    mask2 = jnp.arange(T2)[None, :] >= lens2[:, None]

    out2 = decoder_forward(x2, mask2, params, n_head=n_head, d_att=d_att,
                           max_query_chunk=8)
    out2 = jax.block_until_ready(out2)
    ref2 = decoder_reference(x2, mask2, params, n_head=n_head, d_att=d_att)
    err2 = float(jnp.max(jnp.abs(out2 - ref2)))
    assert out2.shape == (B, T2, d_model)
    assert bool(jnp.all(jnp.isfinite(out2)))
    assert err2 < 0.1, f"kernel/reference mismatch (chunked): max|diff|={err2}"

    print("KERNEL_OK")
</pallas_src>

<mosaic_0001>
module attributes {stable_mosaic.version = 11 : i64} {
  func.func @decoder_kernel(%arg0: i32, %arg1: i32, %arg2: memref<2x1x8xf32, #tpu.memory_space<vmem>>, %arg3: memref<2x8x32xbf16, #tpu.memory_space<vmem>>, %arg4: memref<1x14x32xf32, #tpu.memory_space<vmem>>, %arg5: memref<1x2x64xf32, #tpu.memory_space<vmem>>, %arg6: memref<1x3x32xf32, #tpu.memory_space<vmem>>, %arg7: memref<1x1x128xf32, #tpu.memory_space<vmem>>, %arg8: memref<1x3x64xf32, #tpu.memory_space<vmem>>, %arg9: memref<1x32x64xbf16, #tpu.memory_space<vmem>>, %arg10: memref<1x64x32xbf16, #tpu.memory_space<vmem>>, %arg11: memref<1x32x32xbf16, #tpu.memory_space<vmem>>, %arg12: memref<1x32x32xbf16, #tpu.memory_space<vmem>>, %arg13: memref<1x32x32xbf16, #tpu.memory_space<vmem>>, %arg14: memref<1x32x32xbf16, #tpu.memory_space<vmem>>, %arg15: memref<1x32x128xbf16, #tpu.memory_space<vmem>>, %arg16: memref<1x3x64xf32, #tpu.memory_space<vmem>>, %arg17: memref<1x64x32xbf16, #tpu.memory_space<vmem>>, %arg18: memref<1x32x64xbf16, #tpu.memory_space<vmem>>, %arg19: memref<1x64x32xbf16, #tpu.memory_space<vmem>>, %arg20: memref<2x8x32xf32, #tpu.memory_space<vmem>>, %arg21: memref<17x64xf32, #tpu.memory_space<vmem>>, %arg22: memref<2x8x16xf32, #tpu.memory_space<vmem>>, %arg23: memref<8x32xf32, #tpu.memory_space<vmem>>) attributes {dimension_semantics = [#tpu.dimension_semantics<parallel>, #tpu.dimension_semantics<arbitrary>], iteration_bounds = array<i64: 1, 2>, scalar_prefetch = 0 : i64, scratch_operands = 3 : i64, tpu.core_type = #tpu.core_type<tc>, window_params = [{transform_indices = @transform_0, window_bounds = array<i64: 2, 1, 8>}, {transform_indices = @transform_1, window_bounds = array<i64: 2, 8, 32>}, {transform_indices = @transform_2, window_bounds = array<i64: 1, 14, 32>}, {transform_indices = @transform_3, window_bounds = array<i64: 1, 2, 64>}, {transform_indices = @transform_4, window_bounds = array<i64: 1, 3, 32>}, {transform_indices = @transform_5, window_bounds = array<i64: 1, 1, 128>}, {transform_indices = @transform_6, window_bounds = array<i64: 1, 3, 64>}, {transform_indices = @transform_7, window_bounds = array<i64: 1, 32, 64>}, {transform_indices = @transform_8, window_bounds = array<i64: 1, 64, 32>}, {transform_indices = @transform_9, window_bounds = array<i64: 1, 32, 32>}, {transform_indices = @transform_10, window_bounds = array<i64: 1, 32, 32>}, {transform_indices = @transform_11, window_bounds = array<i64: 1, 32, 32>}, {transform_indices = @transform_12, window_bounds = array<i64: 1, 32, 32>}, {transform_indices = @transform_13, window_bounds = array<i64: 1, 32, 128>}, {transform_indices = @transform_14, window_bounds = array<i64: 1, 3, 64>}, {transform_indices = @transform_15, window_bounds = array<i64: 1, 64, 32>}, {transform_indices = @transform_16, window_bounds = array<i64: 1, 32, 64>}, {transform_indices = @transform_17, window_bounds = array<i64: 1, 64, 32>}, {transform_indices = @transform_18, window_bounds = array<i64: 2, 8, 32>}]} {
    %c0_i32 = arith.constant 0 : i32
    %0 = arith.cmpi eq, %arg1, %c0_i32 : i32
    %1 = arith.extui %0 : i1 to i32
    %c0_i32_0 = arith.constant 0 : i32
    %2 = arith.cmpi ne, %1, %c0_i32_0 : i32
    scf.if %2 {
      %c0_17 = arith.constant 0 : index
      %c0_18 = arith.constant 0 : index
      %c0_19 = arith.constant 0 : index
      %14 = vector.load %arg3[%c0_17, %c0_18, %c0_19] : memref<2x8x32xbf16, #tpu.memory_space<vmem>>, vector<2x8x32xbf16>
      %15 = arith.extf %14 : vector<2x8x32xbf16> to vector<2x8x32xf32>
      %c0_20 = arith.constant 0 : index
      %c0_21 = arith.constant 0 : index
      %c0_22 = arith.constant 0 : index
      %16 = vector.load %arg20[%c0_20, %c0_21, %c0_22] : memref<2x8x32xf32, #tpu.memory_space<vmem>>, vector<2x8x32xf32>
      tpu.vector_store %arg20[%c0_20, %c0_21, %c0_22], %15 {strides = array<i32>} : memref<2x8x32xf32, #tpu.memory_space<vmem>>, vector<2x8x32xf32>,
      %cst_23 = arith.constant 0.000000e+00 : f32
      %17 = vector.broadcast %cst_23 : f32 to vector<8x64xf32>
      %c0_24 = arith.constant 0 : index
      %c0_25 = arith.constant 0 : index
      %18 = vector.load %arg21[%c0_24, %c0_25] : memref<17x64xf32, #tpu.memory_space<vmem>>, vector<8x64xf32>
      tpu.vector_store %arg21[%c0_24, %c0_25], %17 {strides = array<i32>} : memref<17x64xf32, #tpu.memory_space<vmem>>, vector<8x64xf32>,
      %cst_26 = arith.constant 0.000000e+00 : f32
      %19 = vector.broadcast %cst_26 : f32 to vector<1x64xf32>
      %c16 = arith.constant 16 : index
      %c0_27 = arith.constant 0 : index
      %20 = vector.load %arg21[%c16, %c0_27] : memref<17x64xf32, #tpu.memory_space<vmem>>, vector<1x64xf32>
      tpu.vector_store %arg21[%c16, %c0_27], %19 {strides = array<i32>} : memref<17x64xf32, #tpu.memory_space<vmem>>, vector<1x64xf32>,
    } else {
    }
    %c0 = arith.constant 0 : index
    %c0_1 = arith.constant 0 : index
    %c0_2 = arith.constant 0 : index
    %3 = vector.load %arg4[%c0, %c0_1, %c0_2] : memref<1x14x32xf32, #tpu.memory_space<vmem>>, vector<1x14x32xf32>
    %4 = vector.shape_cast %3 : vector<1x14x32xf32> to vector<14x32xf32>
    %c0_3 = arith.constant 0 : index
    %c0_4 = arith.constant 0 : index
    %c0_5 = arith.constant 0 : index
    %5 = vector.load %arg5[%c0_3, %c0_4, %c0_5] : memref<1x2x64xf32, #tpu.memory_space<vmem>>, vector<1x2x64xf32>
    %6 = vector.shape_cast %5 : vector<1x2x64xf32> to vector<2x64xf32>
    %c0_6 = arith.constant 0 : index
    %c0_7 = arith.constant 0 : index
    %c0_8 = arith.constant 0 : index
    %7 = vector.load %arg6[%c0_6, %c0_7, %c0_8] : memref<1x3x32xf32, #tpu.memory_space<vmem>>, vector<1x3x32xf32>
    %8 = vector.shape_cast %7 : vector<1x3x32xf32> to vector<3x32xf32>
    %c0_9 = arith.constant 0 : index
    %c0_10 = arith.constant 0 : index
    %c0_11 = arith.constant 0 : index
    %9 = vector.load %arg7[%c0_9, %c0_10, %c0_11] : memref<1x1x128xf32, #tpu.memory_space<vmem>>, vector<1x1x128xf32>
    %10 = vector.shape_cast %9 : vector<1x1x128xf32> to vector<1x128xf32>
    %c0_12 = arith.constant 0 : index
    %c0_13 = arith.constant 0 : index
    %c0_14 = arith.constant 0 : index
    %11 = vector.load %arg8[%c0_12, %c0_13, %c0_14] : memref<1x3x64xf32, #tpu.memory_space<vmem>>, vector<1x3x64xf32>
    %12 = vector.shape_cast %11 : vector<1x3x64xf32> to vector<3x64xf32>
    %cst = arith.constant 2.500000e-01 : f32
    %c0_i32_15 = arith.constant 0 : i32
    %c2_i32 = arith.constant 2 : i32
    %13 = arith.addi %c0_i32_15, %c2_i32 : i32
    %c1_i32 = arith.constant 1 : i32
    scf.for %arg24 = %c0_i32_15 to %13 step %c1_i32  : i32 {
      %14 = arith.index_cast %arg24 : i32 to index
      %c0_17 = arith.constant 0 : index
      %c0_18 = arith.constant 0 : index
      %15 = vector.load %arg20[%14, %c0_17, %c0_18] : memref<2x8x32xf32, #tpu.memory_space<vmem>>, vector<1x8x32xf32>
      %16 = vector.shape_cast %15 : vector<1x8x32xf32> to vector<8x32xf32>
      %17 = arith.index_cast %arg24 : i32 to index
      %c0_19 = arith.constant 0 : index
      %c0_20 = arith.constant 0 : index
      %18 = vector.load %arg2[%17, %c0_19, %c0_20] : memref<2x1x8xf32, #tpu.memory_space<vmem>>, vector<1x1x8xf32>
      %19 = vector.shape_cast %18 : vector<1x1x8xf32> to vector<1x8xf32>
      %cst_21 = arith.constant 5.000000e-01 : f32
      %20 = vector.broadcast %cst_21 : f32 to vector<1x8xf32>
      %21 = arith.cmpf ogt, %19, %20 : vector<1x8xf32>
      %cst_22 = arith.constant -1.000000e+09 : f32
      %cst_23 = arith.constant 0.000000e+00 : f32
      %22 = vector.broadcast %cst_22 : f32 to vector<1x8xf32>
      %23 = vector.broadcast %cst_23 : f32 to vector<1x8xf32>
      %24 = arith.select %21, %22, %23 : vector<1x8xi1>, vector<1x8xf32>
      %25 = vector.shape_cast %24 : vector<1x8xf32> to vector<1x1x8xf32>
      %26 = vector.extract_strided_slice %4 {offsets = [0, 0], sizes = [1, 32], strides = [1, 1]} : vector<14x32xf32> to vector<1x32xf32>
      %27 = vector.shape_cast %26 : vector<1x32xf32> to vector<32xf32>
      %28 = vector.extract_strided_slice %4 {offsets = [1, 0], sizes = [1, 32], strides = [1, 1]} : vector<14x32xf32> to vector<1x32xf32>
      %29 = vector.shape_cast %28 : vector<1x32xf32> to vector<32xf32>
      %cst_24 = arith.constant dense<0.000000e+00> : vector<8xf32>
      %30 = vector.multi_reduction <add>, %16, %cst_24 [1] : vector<8x32xf32> to vector<8xf32>
      %31 = vector.shape_cast %30 : vector<8xf32> to vector<8x1xf32>
      %cst_25 = arith.constant 3.200000e+01 : f32
      %32 = vector.broadcast %cst_25 : f32 to vector<8x1xf32>
      %33 = arith.divf %31, %32 : vector<8x1xf32>
      %34 = vector.broadcast %33 : vector<8x1xf32> to vector<8x32xf32>
      %35 = arith.subf %16, %34 : vector<8x32xf32>
      %36 = arith.mulf %35, %35 : vector<8x32xf32>
      %cst_26 = arith.constant dense<0.000000e+00> : vector<8xf32>
      %37 = vector.multi_reduction <add>, %36, %cst_26 [1] : vector<8x32xf32> to vector<8xf32>
      %38 = vector.shape_cast %37 : vector<8xf32> to vector<8x1xf32>
      %cst_27 = arith.constant 3.200000e+01 : f32
      %39 = vector.broadcast %cst_27 : f32 to vector<8x1xf32>
      %40 = arith.divf %38, %39 : vector<8x1xf32>
      %41 = vector.broadcast %33 : vector<8x1xf32> to vector<8x32xf32>
      %42 = arith.subf %16, %41 : vector<8x32xf32>
      %cst_28 = arith.constant 9.99999974E-6 : f32
      %43 = vector.broadcast %cst_28 : f32 to vector<8x1xf32>
      %44 = arith.addf %40, %43 : vector<8x1xf32>
      %45 = math.rsqrt %44 : vector<8x1xf32>
      %46 = vector.broadcast %45 : vector<8x1xf32> to vector<8x32xf32>
      %47 = arith.mulf %42, %46 : vector<8x32xf32>
      %48 = vector.shape_cast %27 : vector<32xf32> to vector<1x32xf32>
      %49 = vector.broadcast %48 : vector<1x32xf32> to vector<8x32xf32>
      %50 = arith.mulf %47, %49 : vector<8x32xf32>
      %51 = vector.shape_cast %29 : vector<32xf32> to vector<1x32xf32>
      %52 = vector.broadcast %51 : vector<1x32xf32> to vector<8x32xf32>
      %53 = arith.addf %50, %52 : vector<8x32xf32>
      %c0_29 = arith.constant 0 : index
      %c0_30 = arith.constant 0 : index
      %c0_31 = arith.constant 0 : index
      %54 = vector.load %arg9[%c0_29, %c0_30, %c0_31] : memref<1x32x64xbf16, #tpu.memory_space<vmem>>, vector<1x32x64xbf16>
      %55 = vector.shape_cast %54 : vector<1x32x64xbf16> to vector<32x64xbf16>
      %56 = arith.truncf %53 : vector<8x32xf32> to vector<8x32xbf16>
      %cst_32 = arith.constant dense<0.000000e+00> : vector<8x64xf32>
      %57 = tpu.matmul %56, %55, %cst_32 {dimension_numbers = #tpu.dot_dimension_numbers<[1], [0], [0], [1], [0, 0, 1, 1], [], []>} : vector<8x32xbf16>, vector<32x64xbf16>, vector<8x64xf32> -> vector<8x64xf32>
      %58 = vector.extract_strided_slice %6 {offsets = [0, 0], sizes = [1, 64], strides = [1, 1]} : vector<2x64xf32> to vector<1x64xf32>
      %59 = vector.shape_cast %58 : vector<1x64xf32> to vector<64xf32>
      %60 = vector.shape_cast %59 : vector<64xf32> to vector<1x64xf32>
      %61 = vector.broadcast %60 : vector<1x64xf32> to vector<8x64xf32>
      %62 = arith.addf %57, %61 : vector<8x64xf32>
      %63 = arith.negf %62 : vector<8x64xf32>
      %64 = math.exp %63 : vector<8x64xf32>
      %cst_33 = arith.constant 1.000000e+00 : f32
      %65 = vector.broadcast %cst_33 : f32 to vector<8x64xf32>
      %66 = arith.addf %65, %64 : vector<8x64xf32>
      %67 = arith.divf %65, %66 : vector<8x64xf32>
      %68 = arith.mulf %62, %67 : vector<8x64xf32>
      %c0_34 = arith.constant 0 : index
      %c0_35 = arith.constant 0 : index
      %c0_36 = arith.constant 0 : index
      %69 = vector.load %arg10[%c0_34, %c0_35, %c0_36] : memref<1x64x32xbf16, #tpu.memory_space<vmem>>, vector<1x64x32xbf16>
      %70 = vector.shape_cast %69 : vector<1x64x32xbf16> to vector<64x32xbf16>
      %71 = arith.truncf %68 : vector<8x64xf32> to vector<8x64xbf16>
      %cst_37 = arith.constant dense<0.000000e+00> : vector<8x32xf32>
      %72 = tpu.matmul %71, %70, %cst_37 {dimension_numbers = #tpu.dot_dimension_numbers<[1], [0], [0], [1], [0, 0, 1, 1], [], []>} : vector<8x64xbf16>, vector<64x32xbf16>, vector<8x32xf32> -> vector<8x32xf32>
      %73 = vector.extract_strided_slice %4 {offsets = [2, 0], sizes = [1, 32], strides = [1, 1]} : vector<14x32xf32> to vector<1x32xf32>
      %74 = vector.shape_cast %73 : vector<1x32xf32> to vector<32xf32>
      %75 = vector.shape_cast %74 : vector<32xf32> to vector<1x32xf32>
      %76 = vector.broadcast %75 : vector<1x32xf32> to vector<8x32xf32>
      %77 = arith.addf %72, %76 : vector<8x32xf32>
      %cst_38 = arith.constant 5.000000e-01 : f32
      %78 = vector.broadcast %cst_38 : f32 to vector<8x32xf32>
      %79 = arith.mulf %78, %77 : vector<8x32xf32>
      %80 = arith.addf %16, %79 : vector<8x32xf32>
      %81 = vector.extract_strided_slice %4 {offsets = [3, 0], sizes = [1, 32], strides = [1, 1]} : vector<14x32xf32> to vector<1x32xf32>
      %82 = vector.shape_cast %81 : vector<1x32xf32> to vector<32xf32>
      %83 = vector.extract_strided_slice %4 {offsets = [4, 0], sizes = [1, 32], strides = [1, 1]} : vector<14x32xf32> to vector<1x32xf32>
      %84 = vector.shape_cast %83 : vector<1x32xf32> to vector<32xf32>
      %cst_39 = arith.constant dense<0.000000e+00> : vector<8xf32>
      %85 = vector.multi_reduction <add>, %80, %cst_39 [1] : vector<8x32xf32> to vector<8xf32>
      %86 = vector.shape_cast %85 : vector<8xf32> to vector<8x1xf32>
      %cst_40 = arith.constant 3.200000e+01 : f32
      %87 = vector.broadcast %cst_40 : f32 to vector<8x1xf32>
      %88 = arith.divf %86, %87 : vector<8x1xf32>
      %89 = vector.broadcast %88 : vector<8x1xf32> to vector<8x32xf32>
      %90 = arith.subf %80, %89 : vector<8x32xf32>
      %91 = arith.mulf %90, %90 : vector<8x32xf32>
      %cst_41 = arith.constant dense<0.000000e+00> : vector<8xf32>
      %92 = vector.multi_reduction <add>, %91, %cst_41 [1] : vector<8x32xf32> to vector<8xf32>
      %93 = vector.shape_cast %92 : vector<8xf32> to vector<8x1xf32>
      %cst_42 = arith.constant 3.200000e+01 : f32
      %94 = vector.broadcast %cst_42 : f32 to vector<8x1xf32>
      %95 = arith.divf %93, %94 : vector<8x1xf32>
      %96 = vector.broadcast %88 : vector<8x1xf32> to vector<8x32xf32>
      %97 = arith.subf %80, %96 : vector<8x32xf32>
      %cst_43 = arith.constant 9.99999974E-6 : f32
      %98 = vector.broadcast %cst_43 : f32 to vector<8x1xf32>
      %99 = arith.addf %95, %98 : vector<8x1xf32>
      %100 = math.rsqrt %99 : vector<8x1xf32>
      %101 = vector.broadcast %100 : vector<8x1xf32> to vector<8x32xf32>
      %102 = arith.mulf %97, %101 : vector<8x32xf32>
      %103 = vector.shape_cast %82 : vector<32xf32> to vector<1x32xf32>
      %104 = vector.broadcast %103 : vector<1x32xf32> to vector<8x32xf32>
      %105 = arith.mulf %102, %104 : vector<8x32xf32>
      %106 = vector.shape_cast %84 : vector<32xf32> to vector<1x32xf32>
      %107 = vector.broadcast %106 : vector<1x32xf32> to vector<8x32xf32>
      %108 = arith.addf %105, %107 : vector<8x32xf32>
      %c0_44 = arith.constant 0 : index
      %c0_45 = arith.constant 0 : index
      %c0_46 = arith.constant 0 : index
      %109 = vector.load %arg11[%c0_44, %c0_45, %c0_46] : memref<1x32x32xbf16, #tpu.memory_space<vmem>>, vector<1x32x32xbf16>
      %110 = vector.shape_cast %109 : vector<1x32x32xbf16> to vector<32x32xbf16>
      %111 = arith.truncf %108 : vector<8x32xf32> to vector<8x32xbf16>
      %cst_47 = arith.constant dense<0.000000e+00> : vector<8x32xf32>
      %112 = tpu.matmul %111, %110, %cst_47 {dimension_numbers = #tpu.dot_dimension_numbers<[1], [0], [0], [1], [0, 0, 1, 1], [], []>} : vector<8x32xbf16>, vector<32x32xbf16>, vector<8x32xf32> -> vector<8x32xf32>
      %113 = vector.extract_strided_slice %8 {offsets = [0, 0], sizes = [1, 32], strides = [1, 1]} : vector<3x32xf32> to vector<1x32xf32>
      %114 = vector.shape_cast %113 : vector<1x32xf32> to vector<32xf32>
      %115 = vector.shape_cast %114 : vector<32xf32> to vector<1x32xf32>
      %116 = vector.broadcast %115 : vector<1x32xf32> to vector<8x32xf32>
      %117 = arith.addf %112, %116 : vector<8x32xf32>
      %c0_48 = arith.constant 0 : index
      %c0_49 = arith.constant 0 : index
      %c0_50 = arith.constant 0 : index
      %118 = vector.load %arg12[%c0_48, %c0_49, %c0_50] : memref<1x32x32xbf16, #tpu.memory_space<vmem>>, vector<1x32x32xbf16>
      %119 = vector.shape_cast %118 : vector<1x32x32xbf16> to vector<32x32xbf16>
      %120 = arith.truncf %108 : vector<8x32xf32> to vector<8x32xbf16>
      %cst_51 = arith.constant dense<0.000000e+00> : vector<8x32xf32>
      %121 = tpu.matmul %120, %119, %cst_51 {dimension_numbers = #tpu.dot_dimension_numbers<[1], [0], [0], [1], [0, 0, 1, 1], [], []>} : vector<8x32xbf16>, vector<32x32xbf16>, vector<8x32xf32> -> vector<8x32xf32>
      %122 = vector.extract_strided_slice %8 {offsets = [1, 0], sizes = [1, 32], strides = [1, 1]} : vector<3x32xf32> to vector<1x32xf32>
      %123 = vector.shape_cast %122 : vector<1x32xf32> to vector<32xf32>
      %124 = vector.shape_cast %123 : vector<32xf32> to vector<1x32xf32>
      %125 = vector.broadcast %124 : vector<1x32xf32> to vector<8x32xf32>
      %126 = arith.addf %121, %125 : vector<8x32xf32>
      %c0_52 = arith.constant 0 : index
      %c0_53 = arith.constant 0 : index
      %c0_54 = arith.constant 0 : index
      %127 = vector.load %arg13[%c0_52, %c0_53, %c0_54] : memref<1x32x32xbf16, #tpu.memory_space<vmem>>, vector<1x32x32xbf16>
      %128 = vector.shape_cast %127 : vector<1x32x32xbf16> to vector<32x32xbf16>
      %129 = arith.truncf %108 : vector<8x32xf32> to vector<8x32xbf16>
      %cst_55 = arith.constant dense<0.000000e+00> : vector<8x32xf32>
      %130 = tpu.matmul %129, %128, %cst_55 {dimension_numbers = #tpu.dot_dimension_numbers<[1], [0], [0], [1], [0, 0, 1, 1], [], []>} : vector<8x32xbf16>, vector<32x32xbf16>, vector<8x32xf32> -> vector<8x32xf32>
      %131 = vector.extract_strided_slice %8 {offsets = [2, 0], sizes = [1, 32], strides = [1, 1]} : vector<3x32xf32> to vector<1x32xf32>
      %132 = vector.shape_cast %131 : vector<1x32xf32> to vector<32xf32>
      %133 = vector.shape_cast %132 : vector<32xf32> to vector<1x32xf32>
      %134 = vector.broadcast %133 : vector<1x32xf32> to vector<8x32xf32>
      %135 = arith.addf %130, %134 : vector<8x32xf32>
      %136 = vector.shape_cast %117 : vector<8x32xf32> to vector<8x2x16xf32>
      %137 = tpu.transpose %136, [1, 0, 2] : vector<8x2x16xf32> -> vector<2x8x16xf32>
      %138 = vector.shape_cast %126 : vector<8x32xf32> to vector<8x2x16xf32>
      %139 = tpu.transpose %138, [1, 0, 2] : vector<8x2x16xf32> -> vector<2x8x16xf32>
      %140 = arith.truncf %139 : vector<2x8x16xf32> to vector<2x8x16xbf16>
      %141 = vector.shape_cast %135 : vector<8x32xf32> to vector<8x2x16xf32>
      %142 = tpu.transpose %141, [1, 0, 2] : vector<8x2x16xf32> -> vector<2x8x16xf32>
      %143 = arith.truncf %142 : vector<2x8x16xf32> to vector<2x8x16xbf16>
      %144 = arith.truncf %137 : vector<2x8x16xf32> to vector<2x8x16xbf16>
      "tpu.trace_start"() <{level = 10 : i32, message = "hqd,hkd->hqk"}> : () -> ()
      %cst_56 = arith.constant dense<0.000000e+00> : vector<2x8x8xf32>
      %145 = tpu.matmul %144, %140, %cst_56 {dimension_numbers = #tpu.dot_dimension_numbers<[2], [2], [1], [1], [0, 0, 0, 1, 1, 1], [0], [0]>} : vector<2x8x16xbf16>, vector<2x8x16xbf16>, vector<2x8x8xf32> -> vector<2x8x8xf32>
      "tpu.trace_stop"() : () -> ()
      %146 = vector.broadcast %cst : f32 to vector<2x8x8xf32>
      %147 = arith.mulf %145, %146 : vector<2x8x8xf32>
      %148 = vector.broadcast %25 : vector<1x1x8xf32> to vector<2x8x8xf32>
      %149 = arith.addf %147, %148 : vector<2x8x8xf32>
      %cst_57 = arith.constant dense<0xFF800000> : vector<2x8xf32>
      %150 = vector.multi_reduction <maximumf>, %149, %cst_57 [2] : vector<2x8x8xf32> to vector<2x8xf32>
      %151 = vector.shape_cast %150 : vector<2x8xf32> to vector<2x8x1xf32>
      %152 = vector.broadcast %151 : vector<2x8x1xf32> to vector<2x8x8xf32>
      %153 = arith.subf %149, %152 : vector<2x8x8xf32>
      %154 = math.exp %153 : vector<2x8x8xf32>
      %cst_58 = arith.constant dense<0.000000e+00> : vector<2x8xf32>
      %155 = vector.multi_reduction <add>, %154, %cst_58 [2] : vector<2x8x8xf32> to vector<2x8xf32>
      %156 = vector.shape_cast %155 : vector<2x8xf32> to vector<2x8x1xf32>
      %157 = tpu.reciprocal %156 {approx = true} : vector<2x8x1xf32> -> vector<2x8x1xf32>
      %158 = vector.broadcast %157 : vector<2x8x1xf32> to vector<2x8x8xf32>
      %159 = arith.mulf %154, %158 : vector<2x8x8xf32>
      %160 = arith.truncf %159 : vector<2x8x8xf32> to vector<2x8x8xbf16>
      "tpu.trace_start"() <{level = 10 : i32, message = "hqk,hkd->hqd"}> : () -> ()
      %cst_59 = arith.constant dense<0.000000e+00> : vector<2x8x16xf32>
      %161 = tpu.matmul %160, %143, %cst_59 {dimension_numbers = #tpu.dot_dimension_numbers<[2], [1], [1], [2], [0, 0, 0, 1, 1, 2], [0], [0]>} : vector<2x8x8xbf16>, vector<2x8x16xbf16>, vector<2x8x16xf32> -> vector<2x8x16xf32>
      "tpu.trace_stop"() : () -> ()
      %162 = tpu.transpose %161, [1, 0, 2] : vector<2x8x16xf32> -> vector<8x2x16xf32>
      %163 = vector.shape_cast %162 : vector<8x2x16xf32> to vector<8x32xf32>
      %c0_60 = arith.constant 0 : index
      %c0_61 = arith.constant 0 : index
      %c0_62 = arith.constant 0 : index
      %164 = vector.load %arg14[%c0_60, %c0_61, %c0_62] : memref<1x32x32xbf16, #tpu.memory_space<vmem>>, vector<1x32x32xbf16>
      %165 = vector.shape_cast %164 : vector<1x32x32xbf16> to vector<32x32xbf16>
      %166 = arith.truncf %163 : vector<8x32xf32> to vector<8x32xbf16>
      %cst_63 = arith.constant dense<0.000000e+00> : vector<8x32xf32>
      %167 = tpu.matmul %166, %165, %cst_63 {dimension_numbers = #tpu.dot_dimension_numbers<[1], [0], [0], [1], [0, 0, 1, 1], [], []>} : vector<8x32xbf16>, vector<32x32xbf16>, vector<8x32xf32> -> vector<8x32xf32>
      %168 = vector.extract_strided_slice %4 {offsets = [5, 0], sizes = [1, 32], strides = [1, 1]} : vector<14x32xf32> to vector<1x32xf32>
      %169 = vector.shape_cast %168 : vector<1x32xf32> to vector<32xf32>
      %170 = vector.shape_cast %169 : vector<32xf32> to vector<1x32xf32>
      %171 = vector.broadcast %170 : vector<1x32xf32> to vector<8x32xf32>
      %172 = arith.addf %167, %171 : vector<8x32xf32>
      %173 = arith.addf %80, %172 : vector<8x32xf32>
      %174 = vector.extract_strided_slice %4 {offsets = [6, 0], sizes = [1, 32], strides = [1, 1]} : vector<14x32xf32> to vector<1x32xf32>
      %175 = vector.shape_cast %174 : vector<1x32xf32> to vector<32xf32>
      %176 = vector.extract_strided_slice %4 {offsets = [7, 0], sizes = [1, 32], strides = [1, 1]} : vector<14x32xf32> to vector<1x32xf32>
      %177 = vector.shape_cast %176 : vector<1x32xf32> to vector<32xf32>
      %cst_64 = arith.constant dense<0.000000e+00> : vector<8xf32>
      %178 = vector.multi_reduction <add>, %173, %cst_64 [1] : vector<8x32xf32> to vector<8xf32>
      %179 = vector.shape_cast %178 : vector<8xf32> to vector<8x1xf32>
      %cst_65 = arith.constant 3.200000e+01 : f32
      %180 = vector.broadcast %cst_65 : f32 to vector<8x1xf32>
      %181 = arith.divf %179, %180 : vector<8x1xf32>
      %182 = vector.broadcast %181 : vector<8x1xf32> to vector<8x32xf32>
      %183 = arith.subf %173, %182 : vector<8x32xf32>
      %184 = arith.mulf %183, %183 : vector<8x32xf32>
      %cst_66 = arith.constant dense<0.000000e+00> : vector<8xf32>
      %185 = vector.multi_reduction <add>, %184, %cst_66 [1] : vector<8x32xf32> to vector<8xf32>
      %186 = vector.shape_cast %185 : vector<8xf32> to vector<8x1xf32>
      %cst_67 = arith.constant 3.200000e+01 : f32
      %187 = vector.broadcast %cst_67 : f32 to vector<8x1xf32>
      %188 = arith.divf %186, %187 : vector<8x1xf32>
      %189 = vector.broadcast %181 : vector<8x1xf32> to vector<8x32xf32>
      %190 = arith.subf %173, %189 : vector<8x32xf32>
      %cst_68 = arith.constant 9.99999974E-6 : f32
      %191 = vector.broadcast %cst_68 : f32 to vector<8x1xf32>
      %192 = arith.addf %188, %191 : vector<8x1xf32>
      %193 = math.rsqrt %192 : vector<8x1xf32>
      %194 = vector.broadcast %193 : vector<8x1xf32> to vector<8x32xf32>
      %195 = arith.mulf %190, %194 : vector<8x32xf32>
      %196 = vector.shape_cast %175 : vector<32xf32> to vector<1x32xf32>
      %197 = vector.broadcast %196 : vector<1x32xf32> to vector<8x32xf32>
      %198 = arith.mulf %195, %197 : vector<8x32xf32>
      %199 = vector.shape_cast %177 : vector<32xf32> to vector<1x32xf32>
      %200 = vector.broadcast %199 : vector<1x32xf32> to vector<8x32xf32>
      %201 = arith.addf %198, %200 : vector<8x32xf32>
      %c0_69 = arith.constant 0 : index
      %c0_70 = arith.constant 0 : index
      %c0_71 = arith.constant 0 : index
      %202 = vector.load %arg15[%c0_69, %c0_70, %c0_71] : memref<1x32x128xbf16, #tpu.memory_space<vmem>>, vector<1x32x128xbf16>
      %203 = vector.shape_cast %202 : vector<1x32x128xbf16> to vector<32x128xbf16>
      %204 = arith.truncf %201 : vector<8x32xf32> to vector<8x32xbf16>
      %cst_72 = arith.constant dense<0.000000e+00> : vector<8x128xf32>
      %205 = tpu.matmul %204, %203, %cst_72 {dimension_numbers = #tpu.dot_dimension_numbers<[1], [0], [0], [1], [0, 0, 1, 1], [], []>} : vector<8x32xbf16>, vector<32x128xbf16>, vector<8x128xf32> -> vector<8x128xf32>
      %206 = vector.shape_cast %10 : vector<1x128xf32> to vector<128xf32>
      %207 = vector.shape_cast %206 : vector<128xf32> to vector<1x128xf32>
      %208 = vector.broadcast %207 : vector<1x128xf32> to vector<8x128xf32>
      %209 = arith.addf %205, %208 : vector<8x128xf32>
      %210 = vector.extract_strided_slice %209 {offsets = [0, 0], sizes = [8, 64], strides = [1, 1]} : vector<8x128xf32> to vector<8x64xf32>
      %211 = vector.extract_strided_slice %209 {offsets = [0, 64], sizes = [8, 64], strides = [1, 1]} : vector<8x128xf32> to vector<8x64xf32>
      %212 = arith.negf %211 : vector<8x64xf32>
      %213 = math.exp %212 : vector<8x64xf32>
      %cst_73 = arith.constant 1.000000e+00 : f32
      %214 = vector.broadcast %cst_73 : f32 to vector<8x64xf32>
      %215 = arith.addf %214, %213 : vector<8x64xf32>
      %216 = arith.divf %214, %215 : vector<8x64xf32>
      %217 = arith.mulf %210, %216 : vector<8x64xf32>
      %c8 = arith.constant 8 : index
      %c0_74 = arith.constant 0 : index
      %218 = vector.load %arg21[%c8, %c0_74] : memref<17x64xf32, #tpu.memory_space<vmem>>, vector<8x64xf32>
      tpu.vector_store %arg21[%c8, %c0_74], %217 {strides = array<i32>} : memref<17x64xf32, #tpu.memory_space<vmem>>, vector<8x64xf32>,
      %c0_75 = arith.constant 0 : index
      %c0_76 = arith.constant 0 : index
      %c0_77 = arith.constant 0 : index
      %219 = vector.load %arg16[%c0_75, %c0_76, %c0_77] : memref<1x3x64xf32, #tpu.memory_space<vmem>>, vector<1x3x64xf32>
      %220 = vector.shape_cast %219 : vector<1x3x64xf32> to vector<3x64xf32>
      %cst_78 = arith.constant 0.000000e+00 : f32
      %221 = vector.broadcast %cst_78 : f32 to vector<8x64xf32>
      %c7 = arith.constant 7 : index
      %c0_79 = arith.constant 0 : index
      %222 = vector.load %arg21[%c7, %c0_79] : memref<17x64xf32, #tpu.memory_space<vmem>>, vector<8x64xf32>
      %223 = vector.extract_strided_slice %220 {offsets = [0, 0], sizes = [1, 64], strides = [1, 1]} : vector<3x64xf32> to vector<1x64xf32>
      %224 = vector.shape_cast %223 : vector<1x64xf32> to vector<64xf32>
      %225 = vector.shape_cast %224 : vector<64xf32> to vector<1x64xf32>
      %226 = vector.broadcast %225 : vector<1x64xf32> to vector<8x64xf32>
      %227 = arith.mulf %222, %226 : vector<8x64xf32>
      %228 = arith.addf %221, %227 : vector<8x64xf32>
      %c8_80 = arith.constant 8 : index
      %c0_81 = arith.constant 0 : index
      %229 = vector.load %arg21[%c8_80, %c0_81] : memref<17x64xf32, #tpu.memory_space<vmem>>, vector<8x64xf32>
      %230 = vector.extract_strided_slice %220 {offsets = [1, 0], sizes = [1, 64], strides = [1, 1]} : vector<3x64xf32> to vector<1x64xf32>
      %231 = vector.shape_cast %230 : vector<1x64xf32> to vector<64xf32>
      %232 = vector.shape_cast %231 : vector<64xf32> to vector<1x64xf32>
      %233 = vector.broadcast %232 : vector<1x64xf32> to vector<8x64xf32>
      %234 = arith.mulf %229, %233 : vector<8x64xf32>
      %235 = arith.addf %228, %234 : vector<8x64xf32>
      %c9 = arith.constant 9 : index
      %c0_82 = arith.constant 0 : index
      %236 = vector.load %arg21[%c9, %c0_82] : memref<17x64xf32, #tpu.memory_space<vmem>>, vector<8x64xf32>
      %237 = vector.extract_strided_slice %220 {offsets = [2, 0], sizes = [1, 64], strides = [1, 1]} : vector<3x64xf32> to vector<1x64xf32>
      %238 = vector.shape_cast %237 : vector<1x64xf32> to vector<64xf32>
      %239 = vector.shape_cast %238 : vector<64xf32> to vector<1x64xf32>
      %240 = vector.broadcast %239 : vector<1x64xf32> to vector<8x64xf32>
      %241 = arith.mulf %236, %240 : vector<8x64xf32>
      %242 = arith.addf %235, %241 : vector<8x64xf32>
      %243 = vector.extract_strided_slice %12 {offsets = [0, 0], sizes = [1, 64], strides = [1, 1]} : vector<3x64xf32> to vector<1x64xf32>
      %244 = vector.shape_cast %243 : vector<1x64xf32> to vector<64xf32>
      %245 = vector.shape_cast %244 : vector<64xf32> to vector<1x64xf32>
      %246 = vector.broadcast %245 : vector<1x64xf32> to vector<8x64xf32>
      %247 = arith.addf %242, %246 : vector<8x64xf32>
      %248 = vector.extract_strided_slice %12 {offsets = [1, 0], sizes = [1, 64], strides = [1, 1]} : vector<3x64xf32> to vector<1x64xf32>
      %249 = vector.shape_cast %248 : vector<1x64xf32> to vector<64xf32>
      %250 = vector.shape_cast %249 : vector<64xf32> to vector<1x64xf32>
      %251 = vector.broadcast %250 : vector<1x64xf32> to vector<8x64xf32>
      %252 = arith.mulf %247, %251 : vector<8x64xf32>
      %253 = vector.extract_strided_slice %12 {offsets = [2, 0], sizes = [1, 64], strides = [1, 1]} : vector<3x64xf32> to vector<1x64xf32>
      %254 = vector.shape_cast %253 : vector<1x64xf32> to vector<64xf32>
      %255 = vector.shape_cast %254 : vector<64xf32> to vector<1x64xf32>
      %256 = vector.broadcast %255 : vector<1x64xf32> to vector<8x64xf32>
      %257 = arith.addf %252, %256 : vector<8x64xf32>
      %258 = arith.negf %257 : vector<8x64xf32>
      %259 = math.exp %258 : vector<8x64xf32>
      %cst_83 = arith.constant 1.000000e+00 : f32
      %260 = vector.broadcast %cst_83 : f32 to vector<8x64xf32>
      %261 = arith.addf %260, %259 : vector<8x64xf32>
      %262 = arith.divf %260, %261 : vector<8x64xf32>
      %263 = arith.mulf %257, %262 : vector<8x64xf32>
      %c0_84 = arith.constant 0 : index
      %c0_85 = arith.constant 0 : index
      %c0_86 = arith.constant 0 : index
      %264 = vector.load %arg17[%c0_84, %c0_85, %c0_86] : memref<1x64x32xbf16, #tpu.memory_space<vmem>>, vector<1x64x32xbf16>
      %265 = vector.shape_cast %264 : vector<1x64x32xbf16> to vector<64x32xbf16>
      %266 = arith.truncf %263 : vector<8x64xf32> to vector<8x64xbf16>
      %cst_87 = arith.constant dense<0.000000e+00> : vector<8x32xf32>
      %267 = tpu.matmul %266, %265, %cst_87 {dimension_numbers = #tpu.dot_dimension_numbers<[1], [0], [0], [1], [0, 0, 1, 1], [], []>} : vector<8x64xbf16>, vector<64x32xbf16>, vector<8x32xf32> -> vector<8x32xf32>
      %268 = vector.extract_strided_slice %4 {offsets = [8, 0], sizes = [1, 32], strides = [1, 1]} : vector<14x32xf32> to vector<1x32xf32>
      %269 = vector.shape_cast %268 : vector<1x32xf32> to vector<32xf32>
      %270 = vector.shape_cast %269 : vector<32xf32> to vector<1x32xf32>
      %271 = vector.broadcast %270 : vector<1x32xf32> to vector<8x32xf32>
      %272 = arith.addf %267, %271 : vector<8x32xf32>
      %273 = arith.addf %173, %272 : vector<8x32xf32>
      %274 = vector.extract_strided_slice %4 {offsets = [9, 0], sizes = [1, 32], strides = [1, 1]} : vector<14x32xf32> to vector<1x32xf32>
      %275 = vector.shape_cast %274 : vector<1x32xf32> to vector<32xf32>
      %276 = vector.extract_strided_slice %4 {offsets = [10, 0], sizes = [1, 32], strides = [1, 1]} : vector<14x32xf32> to vector<1x32xf32>
      %277 = vector.shape_cast %276 : vector<1x32xf32> to vector<32xf32>
      %cst_88 = arith.constant dense<0.000000e+00> : vector<8xf32>
      %278 = vector.multi_reduction <add>, %273, %cst_88 [1] : vector<8x32xf32> to vector<8xf32>
      %279 = vector.shape_cast %278 : vector<8xf32> to vector<8x1xf32>
      %cst_89 = arith.constant 3.200000e+01 : f32
      %280 = vector.broadcast %cst_89 : f32 to vector<8x1xf32>
      %281 = arith.divf %279, %280 : vector<8x1xf32>
      %282 = vector.broadcast %281 : vector<8x1xf32> to vector<8x32xf32>
      %283 = arith.subf %273, %282 : vector<8x32xf32>
      %284 = arith.mulf %283, %283 : vector<8x32xf32>
      %cst_90 = arith.constant dense<0.000000e+00> : vector<8xf32>
      %285 = vector.multi_reduction <add>, %284, %cst_90 [1] : vector<8x32xf32> to vector<8xf32>
      %286 = vector.shape_cast %285 : vector<8xf32> to vector<8x1xf32>
      %cst_91 = arith.constant 3.200000e+01 : f32
      %287 = vector.broadcast %cst_91 : f32 to vector<8x1xf32>
      %288 = arith.divf %286, %287 : vector<8x1xf32>
      %289 = vector.broadcast %281 : vector<8x1xf32> to vector<8x32xf32>
      %290 = arith.subf %273, %289 : vector<8x32xf32>
      %cst_92 = arith.constant 9.99999974E-6 : f32
      %291 = vector.broadcast %cst_92 : f32 to vector<8x1xf32>
      %292 = arith.addf %288, %291 : vector<8x1xf32>
      %293 = math.rsqrt %292 : vector<8x1xf32>
      %294 = vector.broadcast %293 : vector<8x1xf32> to vector<8x32xf32>
      %295 = arith.mulf %290, %294 : vector<8x32xf32>
      %296 = vector.shape_cast %275 : vector<32xf32> to vector<1x32xf32>
      %297 = vector.broadcast %296 : vector<1x32xf32> to vector<8x32xf32>
      %298 = arith.mulf %295, %297 : vector<8x32xf32>
      %299 = vector.shape_cast %277 : vector<32xf32> to vector<1x32xf32>
      %300 = vector.broadcast %299 : vector<1x32xf32> to vector<8x32xf32>
      %301 = arith.addf %298, %300 : vector<8x32xf32>
      %c0_93 = arith.constant 0 : index
      %c0_94 = arith.constant 0 : index
      %c0_95 = arith.constant 0 : index
      %302 = vector.load %arg18[%c0_93, %c0_94, %c0_95] : memref<1x32x64xbf16, #tpu.memory_space<vmem>>, vector<1x32x64xbf16>
      %303 = vector.shape_cast %302 : vector<1x32x64xbf16> to vector<32x64xbf16>
      %304 = arith.truncf %301 : vector<8x32xf32> to vector<8x32xbf16>
      %cst_96 = arith.constant dense<0.000000e+00> : vector<8x64xf32>
      %305 = tpu.matmul %304, %303, %cst_96 {dimension_numbers = #tpu.dot_dimension_numbers<[1], [0], [0], [1], [0, 0, 1, 1], [], []>} : vector<8x32xbf16>, vector<32x64xbf16>, vector<8x64xf32> -> vector<8x64xf32>
      %306 = vector.extract_strided_slice %6 {offsets = [1, 0], sizes = [1, 64], strides = [1, 1]} : vector<2x64xf32> to vector<1x64xf32>
      %307 = vector.shape_cast %306 : vector<1x64xf32> to vector<64xf32>
      %308 = vector.shape_cast %307 : vector<64xf32> to vector<1x64xf32>
      %309 = vector.broadcast %308 : vector<1x64xf32> to vector<8x64xf32>
      %310 = arith.addf %305, %309 : vector<8x64xf32>
      %311 = arith.negf %310 : vector<8x64xf32>
      %312 = math.exp %311 : vector<8x64xf32>
      %cst_97 = arith.constant 1.000000e+00 : f32
      %313 = vector.broadcast %cst_97 : f32 to vector<8x64xf32>
      %314 = arith.addf %313, %312 : vector<8x64xf32>
      %315 = arith.divf %313, %314 : vector<8x64xf32>
      %316 = arith.mulf %310, %315 : vector<8x64xf32>
      %c0_98 = arith.constant 0 : index
      %c0_99 = arith.constant 0 : index
      %c0_100 = arith.constant 0 : index
      %317 = vector.load %arg19[%c0_98, %c0_99, %c0_100] : memref<1x64x32xbf16, #tpu.memory_space<vmem>>, vector<1x64x32xbf16>
      %318 = vector.shape_cast %317 : vector<1x64x32xbf16> to vector<64x32xbf16>
      %319 = arith.truncf %316 : vector<8x64xf32> to vector<8x64xbf16>
      %cst_101 = arith.constant dense<0.000000e+00> : vector<8x32xf32>
      %320 = tpu.matmul %319, %318, %cst_101 {dimension_numbers = #tpu.dot_dimension_numbers<[1], [0], [0], [1], [0, 0, 1, 1], [], []>} : vector<8x64xbf16>, vector<64x32xbf16>, vector<8x32xf32> -> vector<8x32xf32>
      %321 = vector.extract_strided_slice %4 {offsets = [11, 0], sizes = [1, 32], strides = [1, 1]} : vector<14x32xf32> to vector<1x32xf32>
      %322 = vector.shape_cast %321 : vector<1x32xf32> to vector<32xf32>
      %323 = vector.shape_cast %322 : vector<32xf32> to vector<1x32xf32>
      %324 = vector.broadcast %323 : vector<1x32xf32> to vector<8x32xf32>
      %325 = arith.addf %320, %324 : vector<8x32xf32>
      %cst_102 = arith.constant 5.000000e-01 : f32
      %326 = vector.broadcast %cst_102 : f32 to vector<8x32xf32>
      %327 = arith.mulf %326, %325 : vector<8x32xf32>
      %328 = arith.addf %273, %327 : vector<8x32xf32>
      %329 = vector.extract_strided_slice %4 {offsets = [12, 0], sizes = [1, 32], strides = [1, 1]} : vector<14x32xf32> to vector<1x32xf32>
      %330 = vector.shape_cast %329 : vector<1x32xf32> to vector<32xf32>
      %331 = vector.extract_strided_slice %4 {offsets = [13, 0], sizes = [1, 32], strides = [1, 1]} : vector<14x32xf32> to vector<1x32xf32>
      %332 = vector.shape_cast %331 : vector<1x32xf32> to vector<32xf32>
      %cst_103 = arith.constant dense<0.000000e+00> : vector<8xf32>
      %333 = vector.multi_reduction <add>, %328, %cst_103 [1] : vector<8x32xf32> to vector<8xf32>
      %334 = vector.shape_cast %333 : vector<8xf32> to vector<8x1xf32>
      %cst_104 = arith.constant 3.200000e+01 : f32
      %335 = vector.broadcast %cst_104 : f32 to vector<8x1xf32>
      %336 = arith.divf %334, %335 : vector<8x1xf32>
      %337 = vector.broadcast %336 : vector<8x1xf32> to vector<8x32xf32>
      %338 = arith.subf %328, %337 : vector<8x32xf32>
      %339 = arith.mulf %338, %338 : vector<8x32xf32>
      %cst_105 = arith.constant dense<0.000000e+00> : vector<8xf32>
      %340 = vector.multi_reduction <add>, %339, %cst_105 [1] : vector<8x32xf32> to vector<8xf32>
      %341 = vector.shape_cast %340 : vector<8xf32> to vector<8x1xf32>
      %cst_106 = arith.constant 3.200000e+01 : f32
      %342 = vector.broadcast %cst_106 : f32 to vector<8x1xf32>
      %343 = arith.divf %341, %342 : vector<8x1xf32>
      %344 = vector.broadcast %336 : vector<8x1xf32> to vector<8x32xf32>
      %345 = arith.subf %328, %344 : vector<8x32xf32>
      %cst_107 = arith.constant 9.99999974E-6 : f32
      %346 = vector.broadcast %cst_107 : f32 to vector<8x1xf32>
      %347 = arith.addf %343, %346 : vector<8x1xf32>
      %348 = math.rsqrt %347 : vector<8x1xf32>
      %349 = vector.broadcast %348 : vector<8x1xf32> to vector<8x32xf32>
      %350 = arith.mulf %345, %349 : vector<8x32xf32>
      %351 = vector.shape_cast %330 : vector<32xf32> to vector<1x32xf32>
      %352 = vector.broadcast %351 : vector<1x32xf32> to vector<8x32xf32>
      %353 = arith.mulf %350, %352 : vector<8x32xf32>
      %354 = vector.shape_cast %332 : vector<32xf32> to vector<1x32xf32>
      %355 = vector.broadcast %354 : vector<1x32xf32> to vector<8x32xf32>
      %356 = arith.addf %353, %355 : vector<8x32xf32>
      %357 = arith.index_cast %arg24 : i32 to index
      %c0_108 = arith.constant 0 : index
      %c0_109 = arith.constant 0 : index
      %358 = vector.load %arg20[%357, %c0_108, %c0_109] : memref<2x8x32xf32, #tpu.memory_space<vmem>>, vector<1x8x32xf32>
      %359 = vector.shape_cast %358 : vector<1x8x32xf32> to vector<8x32xf32>
      %360 = vector.shape_cast %356 : vector<8x32xf32> to vector<1x8x32xf32>
      tpu.vector_store %arg20[%357, %c0_108, %c0_109], %360 {strides = array<i32>} : memref<2x8x32xf32, #tpu.memory_space<vmem>>, vector<1x8x32xf32>,
    }
    %c2_i32_16 = arith.constant 2 : i32
    return
  }
  func.func @transform_0(%arg0: i32, %arg1: i32) -> (i32, i32, i32) {
    %c0_i32 = arith.constant 0 : i32
    %c0_i32_0 = arith.constant 0 : i32
    %c0_i32_1 = arith.constant 0 : i32
    return %arg0, %c0_i32, %c0_i32_0 : i32, i32, i32
  }
  func.func @transform_1(%arg0: i32, %arg1: i32) -> (i32, i32, i32) {
    %c0_i32 = arith.constant 0 : i32
    %c0_i32_0 = arith.constant 0 : i32
    %c0_i32_1 = arith.constant 0 : i32
    return %arg0, %c0_i32, %c0_i32_0 : i32, i32, i32
  }
  func.func @transform_2(%arg0: i32, %arg1: i32) -> (i32, i32, i32) {
    %c0_i32 = arith.constant 0 : i32
    %c0_i32_0 = arith.constant 0 : i32
    %c0_i32_1 = arith.constant 0 : i32
    return %arg1, %c0_i32, %c0_i32_0 : i32, i32, i32
  }
  func.func @transform_3(%arg0: i32, %arg1: i32) -> (i32, i32, i32) {
    %c0_i32 = arith.constant 0 : i32
    %c0_i32_0 = arith.constant 0 : i32
    %c0_i32_1 = arith.constant 0 : i32
    return %arg1, %c0_i32, %c0_i32_0 : i32, i32, i32
  }
  func.func @transform_4(%arg0: i32, %arg1: i32) -> (i32, i32, i32) {
    %c0_i32 = arith.constant 0 : i32
    %c0_i32_0 = arith.constant 0 : i32
    %c0_i32_1 = arith.constant 0 : i32
    return %arg1, %c0_i32, %c0_i32_0 : i32, i32, i32
  }
  func.func @transform_5(%arg0: i32, %arg1: i32) -> (i32, i32, i32) {
    %c0_i32 = arith.constant 0 : i32
    %c0_i32_0 = arith.constant 0 : i32
    %c0_i32_1 = arith.constant 0 : i32
    return %arg1, %c0_i32, %c0_i32_0 : i32, i32, i32
  }
  func.func @transform_6(%arg0: i32, %arg1: i32) -> (i32, i32, i32) {
    %c0_i32 = arith.constant 0 : i32
    %c0_i32_0 = arith.constant 0 : i32
    %c0_i32_1 = arith.constant 0 : i32
    return %arg1, %c0_i32, %c0_i32_0 : i32, i32, i32
  }
  func.func @transform_7(%arg0: i32, %arg1: i32) -> (i32, i32, i32) {
    %c0_i32 = arith.constant 0 : i32
    %c0_i32_0 = arith.constant 0 : i32
    %c0_i32_1 = arith.constant 0 : i32
    return %arg1, %c0_i32, %c0_i32_0 : i32, i32, i32
  }
  func.func @transform_8(%arg0: i32, %arg1: i32) -> (i32, i32, i32) {
    %c0_i32 = arith.constant 0 : i32
    %c0_i32_0 = arith.constant 0 : i32
    %c0_i32_1 = arith.constant 0 : i32
    return %arg1, %c0_i32, %c0_i32_0 : i32, i32, i32
  }
  func.func @transform_9(%arg0: i32, %arg1: i32) -> (i32, i32, i32) {
    %c0_i32 = arith.constant 0 : i32
    %c0_i32_0 = arith.constant 0 : i32
    %c0_i32_1 = arith.constant 0 : i32
    return %arg1, %c0_i32, %c0_i32_0 : i32, i32, i32
  }
  func.func @transform_10(%arg0: i32, %arg1: i32) -> (i32, i32, i32) {
    %c0_i32 = arith.constant 0 : i32
    %c0_i32_0 = arith.constant 0 : i32
    %c0_i32_1 = arith.constant 0 : i32
    return %arg1, %c0_i32, %c0_i32_0 : i32, i32, i32
  }
  func.func @transform_11(%arg0: i32, %arg1: i32) -> (i32, i32, i32) {
    %c0_i32 = arith.constant 0 : i32
    %c0_i32_0 = arith.constant 0 : i32
    %c0_i32_1 = arith.constant 0 : i32
    return %arg1, %c0_i32, %c0_i32_0 : i32, i32, i32
  }
  func.func @transform_12(%arg0: i32, %arg1: i32) -> (i32, i32, i32) {
    %c0_i32 = arith.constant 0 : i32
    %c0_i32_0 = arith.constant 0 : i32
    %c0_i32_1 = arith.constant 0 : i32
    return %arg1, %c0_i32, %c0_i32_0 : i32, i32, i32
  }
  func.func @transform_13(%arg0: i32, %arg1: i32) -> (i32, i32, i32) {
    %c0_i32 = arith.constant 0 : i32
    %c0_i32_0 = arith.constant 0 : i32
    %c0_i32_1 = arith.constant 0 : i32
    return %arg1, %c0_i32, %c0_i32_0 : i32, i32, i32
  }
  func.func @transform_14(%arg0: i32, %arg1: i32) -> (i32, i32, i32) {
    %c0_i32 = arith.constant 0 : i32
    %c0_i32_0 = arith.constant 0 : i32
    %c0_i32_1 = arith.constant 0 : i32
    return %arg1, %c0_i32, %c0_i32_0 : i32, i32, i32
  }
  func.func @transform_15(%arg0: i32, %arg1: i32) -> (i32, i32, i32) {
    %c0_i32 = arith.constant 0 : i32
    %c0_i32_0 = arith.constant 0 : i32
    %c0_i32_1 = arith.constant 0 : i32
    return %arg1, %c0_i32, %c0_i32_0 : i32, i32, i32
  }
  func.func @transform_16(%arg0: i32, %arg1: i32) -> (i32, i32, i32) {
    %c0_i32 = arith.constant 0 : i32
    %c0_i32_0 = arith.constant 0 : i32
    %c0_i32_1 = arith.constant 0 : i32
    return %arg1, %c0_i32, %c0_i32_0 : i32, i32, i32
  }
  func.func @transform_17(%arg0: i32, %arg1: i32) -> (i32, i32, i32) {
    %c0_i32 = arith.constant 0 : i32
    %c0_i32_0 = arith.constant 0 : i32
    %c0_i32_1 = arith.constant 0 : i32
    return %arg1, %c0_i32, %c0_i32_0 : i32, i32, i32
  }
  func.func @transform_18(%arg0: i32, %arg1: i32) -> (i32, i32, i32) {
    %c0_i32 = arith.constant 0 : i32
    %c0_i32_0 = arith.constant 0 : i32
    %c0_i32_1 = arith.constant 0 : i32
    return %arg0, %c0_i32, %c0_i32_0 : i32, i32, i32
  }
}

</mosaic_0001>

<llo_original>
// kernel: tpu_custom_call.1
$region0: #{tpu_custom_call.1}
  #allocation0 [shape = 'u32[]', space=smem, size = 0x4, offset = 0x4, fixed_abs, tag = 'smem constant byte address 0x4 - core index']
  #allocation1 [shape = 'u32[144,128]{1,0:T(1,128)}', space=vmem, size = 0x12000, scoped, tag = 'internal scratch']
  #allocation2 [shape = 'f32[17,64]{1,0:T(8,128)}', space=vmem, size = 0x3000, scoped, tag = 'scratch operand']
  #allocation3 [shape = 'f32[2,8,16]{2,1,0:T(8,128)}', space=vmem, size = 0x2000, scoped, tag = 'scratch operand']
  #allocation4 [shape = 'f32[8,32]{1,0:T(8,128)}', space=vmem, size = 0x1000, scoped, tag = 'scratch operand']
  %s0 = inlined_call_operand.vmem [shape: f32[2,1,8], index: 0, kind: input, shape index: {}]
  %s1 = inlined_call_operand.vmem [shape: bf16[2,8,32], index: 1, kind: input, shape index: {}]
  %s2 = inlined_call_operand.vmem [shape: f32[2,14,32], index: 2, kind: input, shape index: {}]
  %s3 = inlined_call_operand.vmem [shape: f32[2,2,64], index: 3, kind: input, shape index: {}]
  %s4 = inlined_call_operand.vmem [shape: f32[2,3,32], index: 4, kind: input, shape index: {}]
  %s5 = inlined_call_operand.vmem [shape: f32[2,1,128], index: 5, kind: input, shape index: {}]
  %s6 = inlined_call_operand.vmem [shape: f32[2,3,64], index: 6, kind: input, shape index: {}]
  %s7 = inlined_call_operand.vmem [shape: bf16[2,32,64], index: 7, kind: input, shape index: {}]
  %s8 = inlined_call_operand.vmem [shape: bf16[2,64,32], index: 8, kind: input, shape index: {}]
  %s9 = inlined_call_operand.vmem [shape: bf16[2,32,32], index: 9, kind: input, shape index: {}]
  %s10 = inlined_call_operand.vmem [shape: bf16[2,32,32], index: 10, kind: input, shape index: {}]
  %s11 = inlined_call_operand.vmem [shape: bf16[2,32,32], index: 11, kind: input, shape index: {}]
  %s12 = inlined_call_operand.vmem [shape: bf16[2,32,32], index: 12, kind: input, shape index: {}]
  %s13 = inlined_call_operand.vmem [shape: bf16[2,32,128], index: 13, kind: input, shape index: {}]
  %s14 = inlined_call_operand.vmem [shape: f32[2,3,64], index: 14, kind: input, shape index: {}]
  %s15 = inlined_call_operand.vmem [shape: bf16[2,64,32], index: 15, kind: input, shape index: {}]
  %s16 = inlined_call_operand.vmem [shape: bf16[2,32,64], index: 16, kind: input, shape index: {}]
  %s17 = inlined_call_operand.vmem [shape: bf16[2,64,32], index: 17, kind: input, shape index: {}]
  %s18 = inlined_call_operand.hbm [shape: f32[2,8,32], index: 18, kind: output, shape index: {}]
  %s19 = sld [smem:[#allocation0]]
  $region116: #{tpu_custom_call.1} parent=0
    _
  %s21 = ssub.s32 1, %s19
  %s22 = scalar_select 0, %s21, %s19
  $region1: #{tpu_custom_call.1} parent=0
    #allocation5 [shape = 'u8[8192]{0}', space=vmem, size = 0x2000, scoped, tag = 'output window, operand 0, single buffered']
    #allocation6 [shape = 's32[2]{0}', space=sflag, size = 0x8, scoped, tag = 'scoped memory for tpu_custom_call.1']
    %23 = vsyncpa [#allocation6], 0
    loop: start=0, step=1, limit=4
    $region2: #{tpu_custom_call.1} parent=1 // loop_pre_header
      _
    $region3: #{tpu_custom_call.1} parent=1 // loop_header
      %s25 = sphi 0, %s29
      %p26 = scmp.ge.s32.totalorder %s25, 4
      %s32 = sphi 0, %s44
      %s33 = sphi 0, %s40
      %s34 = sphi 0, %s32
      %s35 = sphi 0, %s33
      %s36 = sphi 0, %s34
      %s37 = sphi 0, %s35
      %s47 = sphi 0, %s49
      %s50 = sphi 0, %s47
      %s51 = sphi 0, %s50
      %s67 = sphi 0, %s51
      %s73 = sphi 0, %s75
      %s76 = sphi 0, %s73
      %s77 = sphi 0, %s76
      %s93 = sphi 0, %s77
      %s99 = sphi 0, %s101
      %s102 = sphi 0, %s99
      %s103 = sphi 0, %s102
      %s119 = sphi 0, %s103
      %s125 = sphi 0, %s127
      %s128 = sphi 0, %s125
      %s129 = sphi 0, %s128
      %s145 = sphi 0, %s129
      %s151 = sphi 0, %s153
      %s154 = sphi 0, %s151
      %s155 = sphi 0, %s154
      %s171 = sphi 0, %s155
      %s177 = sphi 0, %s179
      %s180 = sphi 0, %s177
      %s181 = sphi 0, %s180
      %s197 = sphi 0, %s181
      %s203 = sphi 0, %s205
      %s206 = sphi 0, %s203
      %s207 = sphi 0, %s206
      %s223 = sphi 0, %s207
      %s229 = sphi 0, %s231
      %s232 = sphi 0, %s229
      %s233 = sphi 0, %s232
      %s249 = sphi 0, %s233
      %s255 = sphi 0, %s257
      %s258 = sphi 0, %s255
      %s259 = sphi 0, %s258
      %s275 = sphi 0, %s259
      %s281 = sphi 0, %s283
      %s284 = sphi 0, %s281
      %s285 = sphi 0, %s284
      %s301 = sphi 0, %s285
      %s307 = sphi 0, %s309
      %s310 = sphi 0, %s307
      %s311 = sphi 0, %s310
      %s327 = sphi 0, %s311
      %s333 = sphi 0, %s335
      %s336 = sphi 0, %s333
      %s337 = sphi 0, %s336
      %s353 = sphi 0, %s337
      %s359 = sphi 0, %s361
      %s362 = sphi 0, %s359
      %s363 = sphi 0, %s362
      %s379 = sphi 0, %s363
      %s385 = sphi 0, %s387
      %s388 = sphi 0, %s385
      %s389 = sphi 0, %s388
      %s405 = sphi 0, %s389
      %s411 = sphi 0, %s413
      %s414 = sphi 0, %s411
      %s415 = sphi 0, %s414
      %s431 = sphi 0, %s415
      %s437 = sphi 0, %s439
      %s440 = sphi 0, %s437
      %s441 = sphi 0, %s440
      %s457 = sphi 0, %s441
      %s463 = sphi 0, %s465
      %s466 = sphi 0, %s463
      %s467 = sphi 0, %s466
      %s483 = sphi 0, %s467
      %s489 = sphi 0, %s491
      %s492 = sphi 0, %s489
      %s493 = sphi 0, %s492
      %s509 = sphi 0, %s493
      %s515 = sphi 0, %s517
      %s518 = sphi 0, %s515
      %s519 = sphi 0, %s518
      %s535 = sphi 0, %s519
    $region4: #{tpu_custom_call.1} parent=1 // loop_header_branch
      %28 = sbr.rel (%p26) target = $region8
    $region5: #{tpu_custom_call.1} parent=1 // loop_body
      %s30 = ssub.s32 %s25, 1
      %s31 = ssub.s32 %s25, 2
      %s38 = sadd.s32 1, %s33
      %p39 = scmp.ge.s32.totalorder %s38, 2
      %s40 = scalar_select %p39, 0, %s38
      %s41 = sadd.s32 1, %s32
      %s42 = scalar_select %p39, %s41, %s32
      %p43 = scmp.ge.s32.totalorder %s42, 1
      %s44 = scalar_select %p43, 0, %s42
      %s45 = ssub.s32 %s32, %s44
      %p46 = scmp.eq.s32.totalorder %s45, 0
      %s48 = sadd.s32 %s47, 1
      %s49 = scalar_select %p46, %s47, %s48
      %p52 = pneg %p46
      %p53 = scmp.eq.s32.totalorder %s25, 1
      %p54 = por %p52, %p53
      %p55 = scmp.ne.s32.totalorder %s47, %s50
      %p56 = scmp.eq.s32.totalorder %s25, 0
      %p57 = por %p55, %p56
      %p58 = scmp.ne.s32.totalorder %s47, %s50
      %p59 = scmp.eq.s32.totalorder %s30, 1
      %p60 = por %p58, %p59
      %p61 = scmp.ne.s32.totalorder %s50, %s51
      %p62 = scmp.eq.s32.totalorder %s30, 0
      %p63 = por %p61, %p62
      %p64 = scmp.ne.s32.totalorder %s50, %s51
      %p65 = scmp.eq.s32.totalorder %s31, 1
      %p66 = por %p64, %p65
      %p68 = scmp.ne.s32.totalorder %s51, %s67
      %p69 = scmp.eq.s32.totalorder %s31, 0
      %p70 = por %p68, %p69
      %s71 = ssub.s32 %s32, %s44
      %p72 = scmp.eq.s32.totalorder %s71, 0
      %s74 = sadd.s32 %s73, 1
      %s75 = scalar_select %p72, %s73, %s74
      %p78 = pneg %p72
      %p79 = scmp.eq.s32.totalorder %s25, 1
      %p80 = por %p78, %p79
      %p81 = scmp.ne.s32.totalorder %s73, %s76
      %p82 = scmp.eq.s32.totalorder %s25, 0
      %p83 = por %p81, %p82
      %p84 = scmp.ne.s32.totalorder %s73, %s76
      %p85 = scmp.eq.s32.totalorder %s30, 1
      %p86 = por %p84, %p85
      %p87 = scmp.ne.s32.totalorder %s76, %s77
      %p88 = scmp.eq.s32.totalorder %s30, 0
      %p89 = por %p87, %p88
      %p90 = scmp.ne.s32.totalorder %s76, %s77
      %p91 = scmp.eq.s32.totalorder %s31, 1
      %p92 = por %p90, %p91
      %p94 = scmp.ne.s32.totalorder %s77, %s93
      %p95 = scmp.eq.s32.totalorder %s31, 0
      %p96 = por %p94, %p95
      %s97 = ssub.s32 %s33, %s40
      %p98 = scmp.eq.s32.totalorder %s97, 0
      %s100 = sadd.s32 %s99, 1
      %s101 = scalar_select %p98, %s99, %s100
      %p104 = pneg %p98
      %p105 = scmp.eq.s32.totalorder %s25, 1
      %p106 = por %p104, %p105
      %p107 = scmp.ne.s32.totalorder %s99, %s102
      %p108 = scmp.eq.s32.totalorder %s25, 0
      %p109 = por %p107, %p108
      %p110 = scmp.ne.s32.totalorder %s99, %s102
      %p111 = scmp.eq.s32.totalorder %s30, 1
      %p112 = por %p110, %p111
      %p113 = scmp.ne.s32.totalorder %s102, %s103
      %p114 = scmp.eq.s32.totalorder %s30, 0
      %p115 = por %p113, %p114
      %p116 = scmp.ne.s32.totalorder %s102, %s103
      %p117 = scmp.eq.s32.totalorder %s31, 1
      %p118 = por %p116, %p117
      %p120 = scmp.ne.s32.totalorder %s103, %s119
      %p121 = scmp.eq.s32.totalorder %s31, 0
      %p122 = por %p120, %p121
      %s123 = ssub.s32 %s33, %s40
      %p124 = scmp.eq.s32.totalorder %s123, 0
      %s126 = sadd.s32 %s125, 1
      %s127 = scalar_select %p124, %s125, %s126
      %p130 = pneg %p124
      %p131 = scmp.eq.s32.totalorder %s25, 1
      %p132 = por %p130, %p131
      %p133 = scmp.ne.s32.totalorder %s125, %s128
      %p134 = scmp.eq.s32.totalorder %s25, 0
      %p135 = por %p133, %p134
      %p136 = scmp.ne.s32.totalorder %s125, %s128
      %p137 = scmp.eq.s32.totalorder %s30, 1
      %p138 = por %p136, %p137
      %p139 = scmp.ne.s32.totalorder %s128, %s129
      %p140 = scmp.eq.s32.totalorder %s30, 0
      %p141 = por %p139, %p140
      %p142 = scmp.ne.s32.totalorder %s128, %s129
      %p143 = scmp.eq.s32.totalorder %s31, 1
      %p144 = por %p142, %p143
      %p146 = scmp.ne.s32.totalorder %s129, %s145
      %p147 = scmp.eq.s32.totalorder %s31, 0
      %p148 = por %p146, %p147
      %s149 = ssub.s32 %s33, %s40
      %p150 = scmp.eq.s32.totalorder %s149, 0
      %s152 = sadd.s32 %s151, 1
      %s153 = scalar_select %p150, %s151, %s152
      %p156 = pneg %p150
      %p157 = scmp.eq.s32.totalorder %s25, 1
      %p158 = por %p156, %p157
      %p159 = scmp.ne.s32.totalorder %s151, %s154
      %p160 = scmp.eq.s32.totalorder %s25, 0
      %p161 = por %p159, %p160
      %p162 = scmp.ne.s32.totalorder %s151, %s154
      %p163 = scmp.eq.s32.totalorder %s30, 1
      %p164 = por %p162, %p163
      %p165 = scmp.ne.s32.totalorder %s154, %s155
      %p166 = scmp.eq.s32.totalorder %s30, 0
      %p167 = por %p165, %p166
      %p168 = scmp.ne.s32.totalorder %s154, %s155
      %p169 = scmp.eq.s32.totalorder %s31, 1
      %p170 = por %p168, %p169
      %p172 = scmp.ne.s32.totalorder %s155, %s171
      %p173 = scmp.eq.s32.totalorder %s31, 0
      %p174 = por %p172, %p173
      %s175 = ssub.s32 %s33, %s40
      %p176 = scmp.eq.s32.totalorder %s175, 0
      %s178 = sadd.s32 %s177, 1
      %s179 = scalar_select %p176, %s177, %s178
      %p182 = pneg %p176
      %p183 = scmp.eq.s32.totalorder %s25, 1
      %p184 = por %p182, %p183
      %p185 = scmp.ne.s32.totalorder %s177, %s180
      %p186 = scmp.eq.s32.totalorder %s25, 0
      %p187 = por %p185, %p186
      %p188 = scmp.ne.s32.totalorder %s177, %s180
      %p189 = scmp.eq.s32.totalorder %s30, 1
      %p190 = por %p188, %p189
      %p191 = scmp.ne.s32.totalorder %s180, %s181
      %p192 = scmp.eq.s32.totalorder %s30, 0
      %p193 = por %p191, %p192
      %p194 = scmp.ne.s32.totalorder %s180, %s181
      %p195 = scmp.eq.s32.totalorder %s31, 1
      %p196 = por %p194, %p195
      %p198 = scmp.ne.s32.totalorder %s181, %s197
      %p199 = scmp.eq.s32.totalorder %s31, 0
      %p200 = por %p198, %p199
      %s201 = ssub.s32 %s33, %s40
      %p202 = scmp.eq.s32.totalorder %s201, 0
      %s204 = sadd.s32 %s203, 1
      %s205 = scalar_select %p202, %s203, %s204
      %p208 = pneg %p202
      %p209 = scmp.eq.s32.totalorder %s25, 1
      %p210 = por %p208, %p209
      %p211 = scmp.ne.s32.totalorder %s203, %s206
      %p212 = scmp.eq.s32.totalorder %s25, 0
      %p213 = por %p211, %p212
      %p214 = scmp.ne.s32.totalorder %s203, %s206
      %p215 = scmp.eq.s32.totalorder %s30, 1
      %p216 = por %p214, %p215
      %p217 = scmp.ne.s32.totalorder %s206, %s207
      %p218 = scmp.eq.s32.totalorder %s30, 0
      %p219 = por %p217, %p218
      %p220 = scmp.ne.s32.totalorder %s206, %s207
      %p221 = scmp.eq.s32.totalorder %s31, 1
      %p222 = por %p220, %p221
      %p224 = scmp.ne.s32.totalorder %s207, %s223
      %p225 = scmp.eq.s32.totalorder %s31, 0
      %p226 = por %p224, %p225
      %s227 = ssub.s32 %s33, %s40
      %p228 = scmp.eq.s32.totalorder %s227, 0
      %s230 = sadd.s32 %s229, 1
      %s231 = scalar_select %p228, %s229, %s230
      %p234 = pneg %p228
      %p235 = scmp.eq.s32.totalorder %s25, 1
      %p236 = por %p234, %p235
      %p237 = scmp.ne.s32.totalorder %s229, %s232
      %p238 = scmp.eq.s32.totalorder %s25, 0
      %p239 = por %p237, %p238
      %p240 = scmp.ne.s32.totalorder %s229, %s232
      %p241 = scmp.eq.s32.totalorder %s30, 1
      %p242 = por %p240, %p241
      %p243 = scmp.ne.s32.totalorder %s232, %s233
      %p244 = scmp.eq.s32.totalorder %s30, 0
      %p245 = por %p243, %p244
      %p246 = scmp.ne.s32.totalorder %s232, %s233
      %p247 = scmp.eq.s32.totalorder %s31, 1
      %p248 = por %p246, %p247
      %p250 = scmp.ne.s32.totalorder %s233, %s249
      %p251 = scmp.eq.s32.totalorder %s31, 0
      %p252 = por %p250, %p251
      %s253 = ssub.s32 %s33, %s40
      %p254 = scmp.eq.s32.totalorder %s253, 0
      %s256 = sadd.s32 %s255, 1
      %s257 = scalar_select %p254, %s255, %s256
      %p260 = pneg %p254
      %p261 = scmp.eq.s32.totalorder %s25, 1
      %p262 = por %p260, %p261
      %p263 = scmp.ne.s32.totalorder %s255, %s258
      %p264 = scmp.eq.s32.totalorder %s25, 0
      %p265 = por %p263, %p264
      %p266 = scmp.ne.s32.totalorder %s255, %s258
      %p267 = scmp.eq.s32.totalorder %s30, 1
      %p268 = por %p266, %p267
      %p269 = scmp.ne.s32.totalorder %s258, %s259
      %p270 = scmp.eq.s32.totalorder %s30, 0
      %p271 = por %p269, %p270
      %p272 = scmp.ne.s32.totalorder %s258, %s259
      %p273 = scmp.eq.s32.totalorder %s31, 1
      %p274 = por %p272, %p273
      %p276 = scmp.ne.s32.totalorder %s259, %s275
      %p277 = scmp.eq.s32.totalorder %s31, 0
      %p278 = por %p276, %p277
      %s279 = ssub.s32 %s33, %s40
      %p280 = scmp.eq.s32.totalorder %s279, 0
      %s282 = sadd.s32 %s281, 1
      %s283 = scalar_select %p280, %s281, %s282
      %p286 = pneg %p280
      %p287 = scmp.eq.s32.totalorder %s25, 1
      %p288 = por %p286, %p287
      %p289 = scmp.ne.s32.totalorder %s281, %s284
      %p290 = scmp.eq.s32.totalorder %s25, 0
      %p291 = por %p289, %p290
      %p292 = scmp.ne.s32.totalorder %s281, %s284
      %p293 = scmp.eq.s32.totalorder %s30, 1
      %p294 = por %p292, %p293
      %p295 = scmp.ne.s32.totalorder %s284, %s285
      %p296 = scmp.eq.s32.totalorder %s30, 0
      %p297 = por %p295, %p296
      %p298 = scmp.ne.s32.totalorder %s284, %s285
      %p299 = scmp.eq.s32.totalorder %s31, 1
      %p300 = por %p298, %p299
      %p302 = scmp.ne.s32.totalorder %s285, %s301
      %p303 = scmp.eq.s32.totalorder %s31, 0
      %p304 = por %p302, %p303
      %s305 = ssub.s32 %s33, %s40
      %p306 = scmp.eq.s32.totalorder %s305, 0
      %s308 = sadd.s32 %s307, 1
      %s309 = scalar_select %p306, %s307, %s308
      %p312 = pneg %p306
      %p313 = scmp.eq.s32.totalorder %s25, 1
      %p314 = por %p312, %p313
      %p315 = scmp.ne.s32.totalorder %s307, %s310
      %p316 = scmp.eq.s32.totalorder %s25, 0
      %p317 = por %p315, %p316
      %p318 = scmp.ne.s32.totalorder %s307, %s310
      %p319 = scmp.eq.s32.totalorder %s30, 1
      %p320 = por %p318, %p319
      %p321 = scmp.ne.s32.totalorder %s310, %s311
      %p322 = scmp.eq.s32.totalorder %s30, 0
      %p323 = por %p321, %p322
      %p324 = scmp.ne.s32.totalorder %s310, %s311
      %p325 = scmp.eq.s32.totalorder %s31, 1
      %p326 = por %p324, %p325
      %p328 = scmp.ne.s32.totalorder %s311, %s327
      %p329 = scmp.eq.s32.totalorder %s31, 0
      %p330 = por %p328, %p329
      %s331 = ssub.s32 %s33, %s40
      %p332 = scmp.eq.s32.totalorder %s331, 0
      %s334 = sadd.s32 %s333, 1
      %s335 = scalar_select %p332, %s333, %s334
      %p338 = pneg %p332
      %p339 = scmp.eq.s32.totalorder %s25, 1
      %p340 = por %p338, %p339
      %p341 = scmp.ne.s32.totalorder %s333, %s336
      %p342 = scmp.eq.s32.totalorder %s25, 0
      %p343 = por %p341, %p342
      %p344 = scmp.ne.s32.totalorder %s333, %s336
      %p345 = scmp.eq.s32.totalorder %s30, 1
      %p346 = por %p344, %p345
      %p347 = scmp.ne.s32.totalorder %s336, %s337
      %p348 = scmp.eq.s32.totalorder %s30, 0
      %p349 = por %p347, %p348
      %p350 = scmp.ne.s32.totalorder %s336, %s337
      %p351 = scmp.eq.s32.totalorder %s31, 1
      %p352 = por %p350, %p351
      %p354 = scmp.ne.s32.totalorder %s337, %s353
      %p355 = scmp.eq.s32.totalorder %s31, 0
      %p356 = por %p354, %p355
      %s357 = ssub.s32 %s33, %s40
      %p358 = scmp.eq.s32.totalorder %s357, 0
      %s360 = sadd.s32 %s359, 1
      %s361 = scalar_select %p358, %s359, %s360
      %p364 = pneg %p358
      %p365 = scmp.eq.s32.totalorder %s25, 1
      %p366 = por %p364, %p365
      %p367 = scmp.ne.s32.totalorder %s359, %s362
      %p368 = scmp.eq.s32.totalorder %s25, 0
      %p369 = por %p367, %p368
      %p370 = scmp.ne.s32.totalorder %s359, %s362
      %p371 = scmp.eq.s32.totalorder %s30, 1
      %p372 = por %p370, %p371
      %p373 = scmp.ne.s32.totalorder %s362, %s363
      %p374 = scmp.eq.s32.totalorder %s30, 0
      %p375 = por %p373, %p374
      %p376 = scmp.ne.s32.totalorder %s362, %s363
      %p377 = scmp.eq.s32.totalorder %s31, 1
      %p378 = por %p376, %p377
      %p380 = scmp.ne.s32.totalorder %s363, %s379
      %p381 = scmp.eq.s32.totalorder %s31, 0
      %p382 = por %p380, %p381
      %s383 = ssub.s32 %s33, %s40
      %p384 = scmp.eq.s32.totalorder %s383, 0
      %s386 = sadd.s32 %s385, 1
      %s387 = scalar_select %p384, %s385, %s386
      %p390 = pneg %p384
      %p391 = scmp.eq.s32.totalorder %s25, 1
      %p392 = por %p390, %p391
      %p393 = scmp.ne.s32.totalorder %s385, %s388
      %p394 = scmp.eq.s32.totalorder %s25, 0
      %p395 = por %p393, %p394
      %p396 = scmp.ne.s32.totalorder %s385, %s388
      %p397 = scmp.eq.s32.totalorder %s30, 1
      %p398 = por %p396, %p397
      %p399 = scmp.ne.s32.totalorder %s388, %s389
      %p400 = scmp.eq.s32.totalorder %s30, 0
      %p401 = por %p399, %p400
      %p402 = scmp.ne.s32.totalorder %s388, %s389
      %p403 = scmp.eq.s32.totalorder %s31, 1
      %p404 = por %p402, %p403
      %p406 = scmp.ne.s32.totalorder %s389, %s405
      %p407 = scmp.eq.s32.totalorder %s31, 0
      %p408 = por %p406, %p407
      %s409 = ssub.s32 %s33, %s40
      %p410 = scmp.eq.s32.totalorder %s409, 0
      %s412 = sadd.s32 %s411, 1
      %s413 = scalar_select %p410, %s411, %s412
      %p416 = pneg %p410
      %p417 = scmp.eq.s32.totalorder %s25, 1
      %p418 = por %p416, %p417
      %p419 = scmp.ne.s32.totalorder %s411, %s414
      %p420 = scmp.eq.s32.totalorder %s25, 0
      %p421 = por %p419, %p420
      %p422 = scmp.ne.s32.totalorder %s411, %s414
      %p423 = scmp.eq.s32.totalorder %s30, 1
      %p424 = por %p422, %p423
      %p425 = scmp.ne.s32.totalorder %s414, %s415
      %p426 = scmp.eq.s32.totalorder %s30, 0
      %p427 = por %p425, %p426
      %p428 = scmp.ne.s32.totalorder %s414, %s415
      %p429 = scmp.eq.s32.totalorder %s31, 1
      %p430 = por %p428, %p429
      %p432 = scmp.ne.s32.totalorder %s415, %s431
      %p433 = scmp.eq.s32.totalorder %s31, 0
      %p434 = por %p432, %p433
      %s435 = ssub.s32 %s33, %s40
      %p436 = scmp.eq.s32.totalorder %s435, 0
      %s438 = sadd.s32 %s437, 1
      %s439 = scalar_select %p436, %s437, %s438
      %p442 = pneg %p436
      %p443 = scmp.eq.s32.totalorder %s25, 1
      %p444 = por %p442, %p443
      %p445 = scmp.ne.s32.totalorder %s437, %s440
      %p446 = scmp.eq.s32.totalorder %s25, 0
      %p447 = por %p445, %p446
      %p448 = scmp.ne.s32.totalorder %s437, %s440
      %p449 = scmp.eq.s32.totalorder %s30, 1
      %p450 = por %p448, %p449
      %p451 = scmp.ne.s32.totalorder %s440, %s441
      %p452 = scmp.eq.s32.totalorder %s30, 0
      %p453 = por %p451, %p452
      %p454 = scmp.ne.s32.totalorder %s440, %s441
      %p455 = scmp.eq.s32.totalorder %s31, 1
      %p456 = por %p454, %p455
      %p458 = scmp.ne.s32.totalorder %s441, %s457
      %p459 = scmp.eq.s32.totalorder %s31, 0
      %p460 = por %p458, %p459
      %s461 = ssub.s32 %s33, %s40
      %p462 = scmp.eq.s32.totalorder %s461, 0
      %s464 = sadd.s32 %s463, 1
      %s465 = scalar_select %p462, %s463, %s464
      %p468 = pneg %p462
      %p469 = scmp.eq.s32.totalorder %s25, 1
      %p470 = por %p468, %p469
      %p471 = scmp.ne.s32.totalorder %s463, %s466
      %p472 = scmp.eq.s32.totalorder %s25, 0
      %p473 = por %p471, %p472
      %p474 = scmp.ne.s32.totalorder %s463, %s466
      %p475 = scmp.eq.s32.totalorder %s30, 1
      %p476 = por %p474, %p475
      %p477 = scmp.ne.s32.totalorder %s466, %s467
      %p478 = scmp.eq.s32.totalorder %s30, 0
      %p479 = por %p477, %p478
      %p480 = scmp.ne.s32.totalorder %s466, %s467
      %p481 = scmp.eq.s32.totalorder %s31, 1
      %p482 = por %p480, %p481
      %p484 = scmp.ne.s32.totalorder %s467, %s483
      %p485 = scmp.eq.s32.totalorder %s31, 0
      %p486 = por %p484, %p485
      %s487 = ssub.s32 %s33, %s40
      %p488 = scmp.eq.s32.totalorder %s487, 0
      %s490 = sadd.s32 %s489, 1
      %s491 = scalar_select %p488, %s489, %s490
      %p494 = pneg %p488
      %p495 = scmp.eq.s32.totalorder %s25, 1
      %p496 = por %p494, %p495
      %p497 = scmp.ne.s32.totalorder %s489, %s492
      %p498 = scmp.eq.s32.totalorder %s25, 0
      %p499 = por %p497, %p498
      %p500 = scmp.ne.s32.totalorder %s489, %s492
      %p501 = scmp.eq.s32.totalorder %s30, 1
      %p502 = por %p500, %p501
      %p503 = scmp.ne.s32.totalorder %s492, %s493
      %p504 = scmp.eq.s32.totalorder %s30, 0
      %p505 = por %p503, %p504
      %p506 = scmp.ne.s32.totalorder %s492, %s493
      %p507 = scmp.eq.s32.totalorder %s31, 1
      %p508 = por %p506, %p507
      %p510 = scmp.ne.s32.totalorder %s493, %s509
      %p511 = scmp.eq.s32.totalorder %s31, 0
      %p512 = por %p510, %p511
      %s513 = ssub.s32 %s32, %s44
      %p514 = scmp.eq.s32.totalorder %s513, 0
      %s516 = sadd.s32 %s515, 1
      %s517 = scalar_select %p514, %s515, %s516
      %p520 = pneg %p514
      %p521 = scmp.eq.s32.totalorder %s25, 1
      %p522 = por %p520, %p521
      %p523 = scmp.ne.s32.totalorder %s515, %s518
      %p524 = scmp.eq.s32.totalorder %s25, 0
      %p525 = por %p523, %p524
      %p526 = scmp.ne.s32.totalorder %s515, %s518
      %p527 = scmp.eq.s32.totalorder %s30, 1
      %p528 = por %p526, %p527
      %p529 = scmp.ne.s32.totalorder %s518, %s519
      %p530 = scmp.eq.s32.totalorder %s30, 0
      %p531 = por %p529, %p530
      %p532 = scmp.ne.s32.totalorder %s518, %s519
      %p533 = scmp.eq.s32.totalorder %s31, 1
      %p534 = por %p532, %p533
      %p536 = scmp.ne.s32.totalorder %s519, %s535
      %p537 = scmp.eq.s32.totalorder %s31, 0
      %p538 = por %p536, %p537
      %p539 = scmp.le.s32.totalorder 1, %s25
      %p540 = scmp.lt.s32.totalorder %s25, 3
      %p541 = pnand %p539, %p540
      %p542 = pneg %p541
      // Predicated region
      $region9: #{tpu_custom_call.1} parent=5 // pred_check
        _
      $region10: #{tpu_custom_call.1} parent=5 // pred_check_branch
        %544 = sbr.rel (%p541) target = $region12
      $region11: #{tpu_custom_call.1} parent=5 // pred_region
        %s545 = ssub.s32 %s25, 1
        // Predicated region
        $region13: #{tpu_custom_call.1} parent=11 // pred_check
          %p546 = pneg %p63
        $region14: #{tpu_custom_call.1} parent=11 // pred_check_branch
          %548 = sbr.rel (%p546) target = $region16
        $region15: #{tpu_custom_call.1} parent=11 // pred_region
          %s549 = smul.u32 2, %s34
          %p550 = scmp.lt.s32.totalorder %s549, 1
          %s551 = scalar_select %p550, %s549, 1
          %s552 = scalar_lea.vmem %s0, %s551
          %s553 = smul.u32 2, %s34
        $region16: #{tpu_custom_call.1} parent=11 // pred_fallthru
          _
        // Predicated region
        $region17: #{tpu_custom_call.1} parent=11 // pred_check
          %p554 = pneg %p89
        $region18: #{tpu_custom_call.1} parent=11 // pred_check_branch
          %556 = sbr.rel (%p554) target = $region20
        $region19: #{tpu_custom_call.1} parent=11 // pred_region
          %s557 = smul.u32 2, %s34
          %p558 = scmp.lt.s32.totalorder %s557, 1
          %s559 = scalar_select %p558, %s557, 1
          %s560 = smul.addr %s559, 4
          %s561 = scalar_lea.vmem %s1, %s560
          %s562 = smul.u32 2, %s34
        $region20: #{tpu_custom_call.1} parent=11 // pred_fallthru
          _
      $region12: #{tpu_custom_call.1} parent=5 // pred_fallthru
        _
      %p563 = scmp.lt.s32.totalorder %s25, 2
      // Predicated region
      $region21: #{tpu_custom_call.1} parent=5 // pred_check
        %p564 = pneg %p563
      $region22: #{tpu_custom_call.1} parent=5 // pred_check_branch
        %566 = sbr.rel (%p564) target = $region24
      $region23: #{tpu_custom_call.1} parent=5 // pred_region
        // Predicated region
        $region25: #{tpu_custom_call.1} parent=23 // pred_check
          %p567 = pneg %p109
        $region26: #{tpu_custom_call.1} parent=23 // pred_check_branch
          %569 = sbr.rel (%p567) target = $region28
        $region27: #{tpu_custom_call.1} parent=23 // pred_region
          %p570 = scmp.lt.s32.totalorder %s33, 1
          %s571 = scalar_select %p570, %s33, 1
          %s572 = smul.addr %s571, 2
          %s573 = smul.addr %s572, 8
          %s574 = scalar_lea.vmem %s2, %s573
        $region28: #{tpu_custom_call.1} parent=23 // pred_fallthru
          _
        // Predicated region
        $region29: #{tpu_custom_call.1} parent=23 // pred_check
          %p575 = pneg %p135
        $region30: #{tpu_custom_call.1} parent=23 // pred_check_branch
          %577 = sbr.rel (%p575) target = $region32
        $region31: #{tpu_custom_call.1} parent=23 // pred_region
          %p578 = scmp.lt.s32.totalorder %s33, 1
          %s579 = scalar_select %p578, %s33, 1
          %s580 = smul.addr %s579, 2
          %s581 = scalar_lea.vmem %s3, %s580
        $region32: #{tpu_custom_call.1} parent=23 // pred_fallthru
          _
        // Predicated region
        $region33: #{tpu_custom_call.1} parent=23 // pred_check
          %p582 = pneg %p161
        $region34: #{tpu_custom_call.1} parent=23 // pred_check_branch
          %584 = sbr.rel (%p582) target = $region36
        $region35: #{tpu_custom_call.1} parent=23 // pred_region
          %p585 = scmp.lt.s32.totalorder %s33, 1
          %s586 = scalar_select %p585, %s33, 1
          %s587 = smul.addr %s586, 4
          %s588 = scalar_lea.vmem %s4, %s587
        $region36: #{tpu_custom_call.1} parent=23 // pred_fallthru
          _
        // Predicated region
        $region37: #{tpu_custom_call.1} parent=23 // pred_check
          %p589 = pneg %p187
        $region38: #{tpu_custom_call.1} parent=23 // pred_check_branch
          %591 = sbr.rel (%p589) target = $region40
        $region39: #{tpu_custom_call.1} parent=23 // pred_region
          %p592 = scmp.lt.s32.totalorder %s33, 1
          %s593 = scalar_select %p592, %s33, 1
          %s594 = scalar_lea.vmem %s5, %s593
        $region40: #{tpu_custom_call.1} parent=23 // pred_fallthru
          _
        // Predicated region
        $region41: #{tpu_custom_call.1} parent=23 // pred_check
          %p595 = pneg %p213
        $region42: #{tpu_custom_call.1} parent=23 // pred_check_branch
          %597 = sbr.rel (%p595) target = $region44
        $region43: #{tpu_custom_call.1} parent=23 // pred_region
          %p598 = scmp.lt.s32.totalorder %s33, 1
          %s599 = scalar_select %p598, %s33, 1
          %s600 = smul.addr %s599, 4
          %s601 = scalar_lea.vmem %s6, %s600
        $region44: #{tpu_custom_call.1} parent=23 // pred_fallthru
          _
        // Predicated region
        $region45: #{tpu_custom_call.1} parent=23 // pred_check
          %p602 = pneg %p239
        $region46: #{tpu_custom_call.1} parent=23 // pred_check_branch
          %604 = sbr.rel (%p602) target = $region48
        $region47: #{tpu_custom_call.1} parent=23 // pred_region
          %p605 = scmp.lt.s32.totalorder %s33, 1
          %s606 = scalar_select %p605, %s33, 1
          %s607 = smul.addr %s606, 4
          %s608 = smul.addr %s607, 4
          %s609 = scalar_lea.vmem %s7, %s608
        $region48: #{tpu_custom_call.1} parent=23 // pred_fallthru
          _
        // Predicated region
        $region49: #{tpu_custom_call.1} parent=23 // pred_check
          %p610 = pneg %p265
        $region50: #{tpu_custom_call.1} parent=23 // pred_check_branch
          %612 = sbr.rel (%p610) target = $region52
        $region51: #{tpu_custom_call.1} parent=23 // pred_region
          %p613 = scmp.lt.s32.totalorder %s33, 1
          %s614 = scalar_select %p613, %s33, 1
          %s615 = smul.addr %s614, 8
          %s616 = smul.addr %s615, 4
          %s617 = scalar_lea.vmem %s8, %s616
        $region52: #{tpu_custom_call.1} parent=23 // pred_fallthru
          _
        // Predicated region
        $region53: #{tpu_custom_call.1} parent=23 // pred_check
          %p618 = pneg %p291
        $region54: #{tpu_custom_call.1} parent=23 // pred_check_branch
          %620 = sbr.rel (%p618) target = $region56
        $region55: #{tpu_custom_call.1} parent=23 // pred_region
          %p621 = scmp.lt.s32.totalorder %s33, 1
          %s622 = scalar_select %p621, %s33, 1
          %s623 = smul.addr %s622, 4
          %s624 = smul.addr %s623, 4
          %s625 = scalar_lea.vmem %s9, %s624
        $region56: #{tpu_custom_call.1} parent=23 // pred_fallthru
          _
        // Predicated region
        $region57: #{tpu_custom_call.1} parent=23 // pred_check
          %p626 = pneg %p317
        $region58: #{tpu_custom_call.1} parent=23 // pred_check_branch
          %628 = sbr.rel (%p626) target = $region60
        $region59: #{tpu_custom_call.1} parent=23 // pred_region
          %p629 = scmp.lt.s32.totalorder %s33, 1
          %s630 = scalar_select %p629, %s33, 1
          %s631 = smul.addr %s630, 4
          %s632 = smul.addr %s631, 4
          %s633 = scalar_lea.vmem %s10, %s632
        $region60: #{tpu_custom_call.1} parent=23 // pred_fallthru
          _
        // Predicated region
        $region61: #{tpu_custom_call.1} parent=23 // pred_check
          %p634 = pneg %p343
        $region62: #{tpu_custom_call.1} parent=23 // pred_check_branch
          %636 = sbr.rel (%p634) target = $region64
        $region63: #{tpu_custom_call.1} parent=23 // pred_region
          %p637 = scmp.lt.s32.totalorder %s33, 1
          %s638 = scalar_select %p637, %s33, 1
          %s639 = smul.addr %s638, 4
          %s640 = smul.addr %s639, 4
          %s641 = scalar_lea.vmem %s11, %s640
        $region64: #{tpu_custom_call.1} parent=23 // pred_fallthru
          _
        // Predicated region
        $region65: #{tpu_custom_call.1} parent=23 // pred_check
          %p642 = pneg %p369
        $region66: #{tpu_custom_call.1} parent=23 // pred_check_branch
          %644 = sbr.rel (%p642) target = $region68
        $region67: #{tpu_custom_call.1} parent=23 // pred_region
          %p645 = scmp.lt.s32.totalorder %s33, 1
          %s646 = scalar_select %p645, %s33, 1
          %s647 = smul.addr %s646, 4
          %s648 = smul.addr %s647, 4
          %s649 = scalar_lea.vmem %s12, %s648
        $region68: #{tpu_custom_call.1} parent=23 // pred_fallthru
          _
        // Predicated region
        $region69: #{tpu_custom_call.1} parent=23 // pred_check
          %p650 = pneg %p395
        $region70: #{tpu_custom_call.1} parent=23 // pred_check_branch
          %652 = sbr.rel (%p650) target = $region72
        $region71: #{tpu_custom_call.1} parent=23 // pred_region
          %p653 = scmp.lt.s32.totalorder %s33, 1
          %s654 = scalar_select %p653, %s33, 1
          %s655 = smul.addr %s654, 4
          %s656 = smul.addr %s655, 4
          %s657 = scalar_lea.vmem %s13, %s656
        $region72: #{tpu_custom_call.1} parent=23 // pred_fallthru
          _
        // Predicated region
        $region73: #{tpu_custom_call.1} parent=23 // pred_check
          %p658 = pneg %p421
        $region74: #{tpu_custom_call.1} parent=23 // pred_check_branch
          %660 = sbr.rel (%p658) target = $region76
        $region75: #{tpu_custom_call.1} parent=23 // pred_region
          %p661 = scmp.lt.s32.totalorder %s33, 1
          %s662 = scalar_select %p661, %s33, 1
          %s663 = smul.addr %s662, 4
          %s664 = scalar_lea.vmem %s14, %s663
        $region76: #{tpu_custom_call.1} parent=23 // pred_fallthru
          _
        // Predicated region
        $region77: #{tpu_custom_call.1} parent=23 // pred_check
          %p665 = pneg %p447
        $region78: #{tpu_custom_call.1} parent=23 // pred_check_branch
          %667 = sbr.rel (%p665) target = $region80
        $region79: #{tpu_custom_call.1} parent=23 // pred_region
          %p668 = scmp.lt.s32.totalorder %s33, 1
          %s669 = scalar_select %p668, %s33, 1
          %s670 = smul.addr %s669, 8
          %s671 = smul.addr %s670, 4
          %s672 = scalar_lea.vmem %s15, %s671
        $region80: #{tpu_custom_call.1} parent=23 // pred_fallthru
          _
        // Predicated region
        $region81: #{tpu_custom_call.1} parent=23 // pred_check
          %p673 = pneg %p473
        $region82: #{tpu_custom_call.1} parent=23 // pred_check_branch
          %675 = sbr.rel (%p673) target = $region84
        $region83: #{tpu_custom_call.1} parent=23 // pred_region
          %p676 = scmp.lt.s32.totalorder %s33, 1
          %s677 = scalar_select %p676, %s33, 1
          %s678 = smul.addr %s677, 4
          %s679 = smul.addr %s678, 4
          %s680 = scalar_lea.vmem %s16, %s679
        $region84: #{tpu_custom_call.1} parent=23 // pred_fallthru
          _
        // Predicated region
        $region85: #{tpu_custom_call.1} parent=23 // pred_check
          %p681 = pneg %p499
        $region86: #{tpu_custom_call.1} parent=23 // pred_check_branch
          %683 = sbr.rel (%p681) target = $region88
        $region87: #{tpu_custom_call.1} parent=23 // pred_region
          %p684 = scmp.lt.s32.totalorder %s33, 1
          %s685 = scalar_select %p684, %s33, 1
          %s686 = smul.addr %s685, 8
          %s687 = smul.addr %s686, 4
          %s688 = scalar_lea.vmem %s17, %s687
        $region88: #{tpu_custom_call.1} parent=23 // pred_fallthru
          _
      $region24: #{tpu_custom_call.1} parent=5 // pred_fallthru
        _
      %p689 = scmp.le.s32.totalorder 1, %s25
      %p690 = scmp.lt.s32.totalorder %s25, 3
      %p691 = pnand %p689, %p690
      %p692 = pneg %p691
      // Predicated region
      $region89: #{tpu_custom_call.1} parent=5 // pred_check
        _
      $region90: #{tpu_custom_call.1} parent=5 // pred_check_branch
        %694 = sbr.rel (%p691) target = $region92
      $region91: #{tpu_custom_call.1} parent=5 // pred_region
        %s695 = ssub.s32 %s25, 1
        %s696 = smul.u32 2, %s34
        %p697 = scmp.lt.s32.totalorder %s696, 1
        %s698 = scalar_select %p697, %s696, 1
        %s699 = scalar_lea.vmem %s0, %s698
        %p700 = pneg %p63
        %p701 = pneg %p60
        %s702 = smul.u32 2, %s34
        %p703 = scmp.lt.s32.totalorder %s702, 1
        %s704 = scalar_select %p703, %s702, 1
        %s705 = smul.addr %s704, 4
        %s706 = scalar_lea.vmem %s1, %s705
        %p707 = pneg %p89
        %p708 = pneg %p86
        %p709 = scmp.lt.s32.totalorder %s35, 1
        %s710 = scalar_select %p709, %s35, 1
        %s711 = smul.addr %s710, 2
        %s712 = smul.addr %s711, 8
        %s713 = scalar_lea.vmem %s2, %s712
        %p714 = pneg %p115
        %p715 = pneg %p112
        %p716 = scmp.lt.s32.totalorder %s35, 1
        %s717 = scalar_select %p716, %s35, 1
        %s718 = smul.addr %s717, 2
        %s719 = scalar_lea.vmem %s3, %s718
        %p720 = pneg %p141
        %p721 = pneg %p138
        %p722 = scmp.lt.s32.totalorder %s35, 1
        %s723 = scalar_select %p722, %s35, 1
        %s724 = smul.addr %s723, 4
        %s725 = scalar_lea.vmem %s4, %s724
        %p726 = pneg %p167
        %p727 = pneg %p164
        %p728 = scmp.lt.s32.totalorder %s35, 1
        %s729 = scalar_select %p728, %s35, 1
        %s730 = scalar_lea.vmem %s5, %s729
        %p731 = pneg %p193
        %p732 = pneg %p190
        %p733 = scmp.lt.s32.totalorder %s35, 1
        %s734 = scalar_select %p733, %s35, 1
        %s735 = smul.addr %s734, 4
        %s736 = scalar_lea.vmem %s6, %s735
        %p737 = pneg %p219
        %p738 = pneg %p216
        %p739 = scmp.lt.s32.totalorder %s35, 1
        %s740 = scalar_select %p739, %s35, 1
        %s741 = smul.addr %s740, 4
        %s742 = smul.addr %s741, 4
        %s743 = scalar_lea.vmem %s7, %s742
        %p744 = pneg %p245
        %p745 = pneg %p242
        %p746 = scmp.lt.s32.totalorder %s35, 1
        %s747 = scalar_select %p746, %s35, 1
        %s748 = smul.addr %s747, 8
        %s749 = smul.addr %s748, 4
        %s750 = scalar_lea.vmem %s8, %s749
        %p751 = pneg %p271
        %p752 = pneg %p268
        %p753 = scmp.lt.s32.totalorder %s35, 1
        %s754 = scalar_select %p753, %s35, 1
        %s755 = smul.addr %s754, 4
        %s756 = smul.addr %s755, 4
        %s757 = scalar_lea.vmem %s9, %s756
        %p758 = pneg %p297
        %p759 = pneg %p294
        %p760 = scmp.lt.s32.totalorder %s35, 1
        %s761 = scalar_select %p760, %s35, 1
        %s762 = smul.addr %s761, 4
        %s763 = smul.addr %s762, 4
        %s764 = scalar_lea.vmem %s10, %s763
        %p765 = pneg %p323
        %p766 = pneg %p320
        %p767 = scmp.lt.s32.totalorder %s35, 1
        %s768 = scalar_select %p767, %s35, 1
        %s769 = smul.addr %s768, 4
        %s770 = smul.addr %s769, 4
        %s771 = scalar_lea.vmem %s11, %s770
        %p772 = pneg %p349
        %p773 = pneg %p346
        %p774 = scmp.lt.s32.totalorder %s35, 1
        %s775 = scalar_select %p774, %s35, 1
        %s776 = smul.addr %s775, 4
        %s777 = smul.addr %s776, 4
        %s778 = scalar_lea.vmem %s12, %s777
        %p779 = pneg %p375
        %p780 = pneg %p372
        %p781 = scmp.lt.s32.totalorder %s35, 1
        %s782 = scalar_select %p781, %s35, 1
        %s783 = smul.addr %s782, 4
        %s784 = smul.addr %s783, 4
        %s785 = scalar_lea.vmem %s13, %s784
        %p786 = pneg %p401
        %p787 = pneg %p398
        %p788 = scmp.lt.s32.totalorder %s35, 1
        %s789 = scalar_select %p788, %s35, 1
        %s790 = smul.addr %s789, 4
        %s791 = scalar_lea.vmem %s14, %s790
        %p792 = pneg %p427
        %p793 = pneg %p424
        %p794 = scmp.lt.s32.totalorder %s35, 1
        %s795 = scalar_select %p794, %s35, 1
        %s796 = smul.addr %s795, 8
        %s797 = smul.addr %s796, 4
        %s798 = scalar_lea.vmem %s15, %s797
        %p799 = pneg %p453
        %p800 = pneg %p450
        %p801 = scmp.lt.s32.totalorder %s35, 1
        %s802 = scalar_select %p801, %s35, 1
        %s803 = smul.addr %s802, 4
        %s804 = smul.addr %s803, 4
        %s805 = scalar_lea.vmem %s16, %s804
        %p806 = pneg %p479
        %p807 = pneg %p476
        %p808 = scmp.lt.s32.totalorder %s35, 1
        %s809 = scalar_select %p808, %s35, 1
        %s810 = smul.addr %s809, 8
        %s811 = smul.addr %s810, 4
        %s812 = scalar_lea.vmem %s17, %s811
        %p813 = pneg %p505
        %p814 = pneg %p502
        %p815 = pneg %p531
        %p816 = pneg %p528
        %s817 = smul.u32 2, %s34
        %p818 = scmp.lt.s32.totalorder %s817, 1
        %s819 = scalar_select %p818, %s817, 1
        %s820 = scalar_lea.vmem %s0, %s819
        %s821 = smul.u32 2, %s34
        %s822 = smul.u32 2, %s34
        %p823 = scmp.lt.s32.totalorder %s822, 1
        %s824 = scalar_select %p823, %s822, 1
        %s825 = smul.addr %s824, 4
        %s826 = scalar_lea.vmem %s1, %s825
        %s827 = smul.u32 2, %s34
        %p828 = scmp.lt.s32.totalorder %s35, 1
        %s829 = scalar_select %p828, %s35, 1
        %s830 = smul.addr %s829, 2
        %s831 = smul.addr %s830, 8
        %s832 = scalar_lea.vmem %s2, %s831
        %p833 = scmp.lt.s32.totalorder %s35, 1
        %s834 = scalar_select %p833, %s35, 1
        %s835 = smul.addr %s834, 2
        %s836 = scalar_lea.vmem %s3, %s835
        %p837 = scmp.lt.s32.totalorder %s35, 1
        %s838 = scalar_select %p837, %s35, 1
        %s839 = smul.addr %s838, 4
        %s840 = scalar_lea.vmem %s4, %s839
        %p841 = scmp.lt.s32.totalorder %s35, 1
        %s842 = scalar_select %p841, %s35, 1
        %s843 = scalar_lea.vmem %s5, %s842
        %p844 = scmp.lt.s32.totalorder %s35, 1
        %s845 = scalar_select %p844, %s35, 1
        %s846 = smul.addr %s845, 4
        %s847 = scalar_lea.vmem %s6, %s846
        %p848 = scmp.lt.s32.totalorder %s35, 1
        %s849 = scalar_select %p848, %s35, 1
        %s850 = smul.addr %s849, 4
        %s851 = smul.addr %s850, 4
        %s852 = scalar_lea.vmem %s7, %s851
        %p853 = scmp.lt.s32.totalorder %s35, 1
        %s854 = scalar_select %p853, %s35, 1
        %s855 = smul.addr %s854, 8
        %s856 = smul.addr %s855, 4
        %s857 = scalar_lea.vmem %s8, %s856
        %p858 = scmp.lt.s32.totalorder %s35, 1
        %s859 = scalar_select %p858, %s35, 1
        %s860 = smul.addr %s859, 4
        %s861 = smul.addr %s860, 4
        %s862 = scalar_lea.vmem %s9, %s861
        %p863 = scmp.lt.s32.totalorder %s35, 1
        %s864 = scalar_select %p863, %s35, 1
        %s865 = smul.addr %s864, 4
        %s866 = smul.addr %s865, 4
        %s867 = scalar_lea.vmem %s10, %s866
        %p868 = scmp.lt.s32.totalorder %s35, 1
        %s869 = scalar_select %p868, %s35, 1
        %s870 = smul.addr %s869, 4
        %s871 = smul.addr %s870, 4
        %s872 = scalar_lea.vmem %s11, %s871
        %p873 = scmp.lt.s32.totalorder %s35, 1
        %s874 = scalar_select %p873, %s35, 1
        %s875 = smul.addr %s874, 4
        %s876 = smul.addr %s875, 4
        %s877 = scalar_lea.vmem %s12, %s876
        %p878 = scmp.lt.s32.totalorder %s35, 1
        %s879 = scalar_select %p878, %s35, 1
        %s880 = smul.addr %s879, 4
        %s881 = smul.addr %s880, 4
        %s882 = scalar_lea.vmem %s13, %s881
        %p883 = scmp.lt.s32.totalorder %s35, 1
        %s884 = scalar_select %p883, %s35, 1
        %s885 = smul.addr %s884, 4
        %s886 = scalar_lea.vmem %s14, %s885
        %p887 = scmp.lt.s32.totalorder %s35, 1
        %s888 = scalar_select %p887, %s35, 1
        %s889 = smul.addr %s888, 8
        %s890 = smul.addr %s889, 4
        %s891 = scalar_lea.vmem %s15, %s890
        %p892 = scmp.lt.s32.totalorder %s35, 1
        %s893 = scalar_select %p892, %s35, 1
        %s894 = smul.addr %s893, 4
        %s895 = smul.addr %s894, 4
        %s896 = scalar_lea.vmem %s16, %s895
        %p897 = scmp.lt.s32.totalorder %s35, 1
        %s898 = scalar_select %p897, %s35, 1
        %s899 = smul.addr %s898, 8
        %s900 = smul.addr %s899, 4
        %s901 = scalar_lea.vmem %s17, %s900
        %s902 = smul.u32 2, %s34
        %p904 = scmp.eq.s32.totalorder %s35, 0
        // Predicated region
        $region93: #{tpu_custom_call.1} parent=91 // pred_check
          %p905 = pneg %p904
        $region94: #{tpu_custom_call.1} parent=91 // pred_check_branch
          %907 = sbr.rel (%p905) target = $region96
        $region95: #{tpu_custom_call.1} parent=91 // pred_region
          %v908 = vld [vmem:[%s826] sm:$0xf]
          %v909 = vld [vmem:[%s826 + $0x4] sm:$0xf]
          %v910 = vunpack.c.l.bf16 %v908
          %v911 = vunpack.c.l.bf16 %v909
          %vm912 = vcmask 261120
          %913 = vst.msk [vmem:[#allocation5] sm:$0xff] %vm912, %v910
          %914 = vst.msk [vmem:[#allocation5 + $0x8] sm:$0xff] %vm912, %v911
          %vm915 = vcmask 523264
          %916 = vst.msk [vmem:[#allocation2] sm:$0xff] %vm915, 0.0
          %vm917 = vcmask 516096
          %918 = vst.msk [vmem:[#allocation2 + $0x10] sm:$0x1] %vm917, 0.0
        $region96: #{tpu_custom_call.1} parent=91 // pred_fallthru
          _
        %v919 = vld [vmem:[%s832] sm:$0xff]
        %v920 = vld [vmem:[%s832 + $0x8] sm:$0x3f]
        %v921 = vld [vmem:[%s836] sm:$0x3]
        %v922 = vld [vmem:[%s840] sm:$0x7]
        %v923 = vld [vmem:[%s843] sm:$0x1]
        %v924 = vld [vmem:[%s847] sm:$0x7]
        loop: start=0, step=1, limit=2
        $region97: #{tpu_custom_call.1} parent=91 // loop_pre_header
          _
        $region98: #{tpu_custom_call.1} parent=91 // loop_header
          %s926 = sphi 0, %s930
          %p927 = scmp.ge.s32.totalorder %s926, 2
        $region99: #{tpu_custom_call.1} parent=91 // loop_header_branch
          %929 = sbr.rel (%p927) target = $region103
        $region100: #{tpu_custom_call.1} parent=91 // loop_body
          %s931 = smul.u32 %s926, 8
          %s932 = scalar_lea.vmem [#allocation5], %s931
          %v933 = vld [vmem:[%s932] sm:$0xff]
          %s934 = scalar_lea.vmem %s820, %s926
          %v935 = vld [vmem:[%s934] sm:$0x1]
          %vm936 = vcmp.gt.f32.partialorder %v935, 0.5
          %v937 = vsel %vm936, -1e+09, 0.0
          %vm938 = vcmask 261120
          %v939 = vsel %vm938, %v933, 0.0
          %940 = vadd.xlane.f32.xlu0 %v939
          %v941 = vpop.xlane.xlu0 %940
          %v942 = vrcp.pop 32.0
          %v943 = vmul.f32 %v941, %v942
          %v944 = vsub.f32 %v933, %v943
          %v945 = vmul.f32 %v944, %v944
          %v946 = vsel %vm938, %v945, 0.0
          %947 = vadd.xlane.f32.xlu0 %v946
          %v948 = vpop.xlane.xlu0 %947
          %v949 = vmul.f32 %v948, %v942
          %v950 = vadd.f32 %v949, 1e-05
          %v951 = vrsqrt.pop %v950
          %v952 = vmul.f32 %v944, %v951
          %v953 = vlaneseq
          %v954 = vshrl.u32 %v953, 7
          %v955 = vsub.s32 0, %v954
          %v956 = vrot.slane %v919, %v955
          %v957 = vmul.f32 %v952, %v956
          %v958 = vlaneseq
          %v959 = vshrl.u32 %v958, 7
          %v960 = vsub.s32 1, %v959
          %v961 = vrot.slane %v919, %v960
          %v962 = vadd.f32 %v957, %v961
          %v963 = vld [vmem:[%s852] sm:$0xf]
          %v964 = vld [vmem:[%s852 + $0x4] sm:$0xf]
          %v965 = vld [vmem:[%s852 + $0x8] sm:$0xf]
          %v966 = vld [vmem:[%s852 + $0xc] sm:$0xf]
          %v967 = vpack.c.bf16 %v962, %v962
          %v968 = vlaneseq
          %v969 = vshrl.u32 %v968, 7
          %v970 = vsub.s32 0, %v969
          %v971 = vrot.slane %v921, %v970
          %v976 = vunpack.c.l.b16 %v963
          %v977 = vunpack.c.l.b16 %v964
          %v978 = vunpack.c.l.b16 %v965
          %v979 = vunpack.c.l.b16 %v966
          %v980 = vpack.c.b16 %v977, %v976
          %v981 = vpack.c.b16 %v979, %v978
          %v985 = vsel %vm938, %v967, 0
          %987 = vmatprep.subr.bf16.mxu0 0
          %988 = vmatpush1.bf16.msra.mxu0 0
          %989 = vmatprep.subr.bf16.mxu0 0
          %990 = vmatpush1.bf16.msra.mxu0 0
          %991 = vmatprep.subr.bf16.mxu0 0
          %992 = vmatpush1.bf16.msra.mxu0 0
          %993 = vmatprep.subr.bf16.mxu0 0
          %994 = vmatpush1.bf16.msra.mxu0 0
          %995 = vmatprep.subr.bf16.mxu0 0
          %996 = vmatpush1.bf16.msra.mxu0 0
          %997 = vmatprep.subr.bf16.mxu0 0
          %998 = vmatpush1.bf16.msra.mxu0 0
          %999 = vmatprep.subr.bf16.mxu0 0
          %1000 = vmatpush1.bf16.msra.mxu0 %v981
          %1001 = vmatprep.subr.bf16.mxu0 0
          %1002 = vmatpush1.bf16.msra.mxu0 %v980
          %1003 = vmatprep.subr.bf16.mxu0 0
          %1004 = vmatpush2.bf16.msra.mxu0 0
          %1005 = vmatprep.subr.bf16.mxu0 0
          %1006 = vmatpush2.bf16.msra.mxu0 0
          %1007 = vmatprep.subr.bf16.mxu0 0
          %1008 = vmatpush2.bf16.msra.mxu0 0
          %1009 = vmatprep.subr.bf16.mxu0 0
          %1010 = vmatpush2.bf16.msra.mxu0 0
          %1011 = vmatprep.subr.bf16.mxu0 0
          %1012 = vmatpush2.bf16.msra.mxu0 0
          %1013 = vmatprep.subr.bf16.mxu0 0
          %1014 = vmatpush2.bf16.msra.mxu0 0
          %1015 = vmatprep.subr.bf16.mxu0 0
          %1016 = vmatpush2.bf16.msra.mxu0 0
          %1017 = vmatprep.subr.bf16.mxu0 0
          %1018 = vmatpush2.bf16.msra.mxu0 0
          %1019 = vmatprep.mubr.bf16.mxu0 0
          %1020 = vmatmul.mubr.bf16.gmra.mxu0 %v985
          %v1021 = vpop.f32.mrf.mxu0
          %v1022 = vadd.f32 %v971, %v1021
          %v1023 = vpop.f32.mrf.mxu0
          %v1024 = vpop.f32.mrf.mxu0
          %v1025 = vpop.f32.mrf.mxu0
          %1026 = vdwg.mxu0
          %v1027 = vxor.u32 %v1022, 2147483648
          %v1028 = vmul.f32 %v1027, 1.442695
          %v1029 = vpow.pop %v1028
          %v1030 = vadd.f32 %v1029, 1.0
          %v1031 = vrcp.pop %v1030
          %v1032 = vmul.f32 1.0, %v1031
          %v1033 = vmul.f32 %v1022, %v1032
          %v1034 = vld [vmem:[%s857] sm:$0xf]
          %v1035 = vld [vmem:[%s857 + $0x4] sm:$0xf]
          %v1036 = vld [vmem:[%s857 + $0x8] sm:$0xf]
          %v1037 = vld [vmem:[%s857 + $0xc] sm:$0xf]
          %v1038 = vld [vmem:[%s857 + $0x10] sm:$0xf]
          %v1039 = vld [vmem:[%s857 + $0x14] sm:$0xf]
          %v1040 = vld [vmem:[%s857 + $0x18] sm:$0xf]
          %v1041 = vld [vmem:[%s857 + $0x1c] sm:$0xf]
          %v1042 = vpack.c.bf16 %v1033, %v1033
          %v1043 = vlaneseq
          %v1044 = vshrl.u32 %v1043, 7
          %v1045 = vsub.s32 2, %v1044
          %v1046 = vrot.slane %v919, %v1045
          %v1055 = vunpack.c.l.b16 %v1034
          %v1056 = vunpack.c.l.b16 %v1035
          %v1057 = vunpack.c.l.b16 %v1036
          %v1058 = vunpack.c.l.b16 %v1037
          %v1059 = vunpack.c.l.b16 %v1038
          %v1060 = vunpack.c.l.b16 %v1039
          %v1061 = vunpack.c.l.b16 %v1040
          %v1062 = vunpack.c.l.b16 %v1041
          %v1063 = vpack.c.b16 %v1056, %v1055
          %v1064 = vpack.c.b16 %v1058, %v1057
          %v1065 = vpack.c.b16 %v1060, %v1059
          %v1066 = vpack.c.b16 %v1062, %v1061
          %vm1071 = vcmask 523264
          %v1073 = vsel %vm1071, %v1042, 0
          %1075 = vmatprep.subr.bf16.mxu0 0
          %1076 = vmatpush1.bf16.msra.mxu0 0
          %1077 = vmatprep.subr.bf16.mxu0 0
          %1078 = vmatpush1.bf16.msra.mxu0 0
          %1079 = vmatprep.subr.bf16.mxu0 0
          %1080 = vmatpush1.bf16.msra.mxu0 0
          %1081 = vmatprep.subr.bf16.mxu0 0
          %1082 = vmatpush1.bf16.msra.mxu0 0
          %1083 = vmatprep.subr.bf16.mxu0 0
          %1084 = vmatpush1.bf16.msra.mxu0 %v1066
          %1085 = vmatprep.subr.bf16.mxu0 0
          %1086 = vmatpush1.bf16.msra.mxu0 %v1065
          %1087 = vmatprep.subr.bf16.mxu0 0
          %1088 = vmatpush1.bf16.msra.mxu0 %v1064
          %1089 = vmatprep.subr.bf16.mxu0 0
          %1090 = vmatpush1.bf16.msra.mxu0 %v1063
          %1091 = vmatprep.subr.bf16.mxu0 0
          %1092 = vmatpush2.bf16.msra.mxu0 0
          %1093 = vmatprep.subr.bf16.mxu0 0
          %1094 = vmatpush2.bf16.msra.mxu0 0
          %1095 = vmatprep.subr.bf16.mxu0 0
          %1096 = vmatpush2.bf16.msra.mxu0 0
          %1097 = vmatprep.subr.bf16.mxu0 0
          %1098 = vmatpush2.bf16.msra.mxu0 0
          %1099 = vmatprep.subr.bf16.mxu0 0
          %1100 = vmatpush2.bf16.msra.mxu0 0
          %1101 = vmatprep.subr.bf16.mxu0 0
          %1102 = vmatpush2.bf16.msra.mxu0 0
          %1103 = vmatprep.subr.bf16.mxu0 0
          %1104 = vmatpush2.bf16.msra.mxu0 0
          %1105 = vmatprep.subr.bf16.mxu0 0
          %1106 = vmatpush2.bf16.msra.mxu0 0
          %1107 = vmatprep.mubr.bf16.mxu0 0
          %1108 = vmatmul.mubr.bf16.gmra.mxu0 %v1073
          %v1109 = vpop.f32.mrf.mxu0
          %v1110 = vadd.f32 %v1046, %v1109
          %v1111 = vpop.f32.mrf.mxu0
          %v1112 = vpop.f32.mrf.mxu0
          %v1113 = vpop.f32.mrf.mxu0
          %1114 = vdwg.mxu0
          %v1115 = vmul.f32 %v1110, 0.5
          %v1116 = vadd.f32 %v933, %v1115
          %v1117 = vsel %vm938, %v1116, 0.0
          %1118 = vadd.xlane.f32.xlu0 %v1117
          %v1119 = vpop.xlane.xlu0 %1118
          %v1120 = vmul.f32 %v1119, %v942
          %v1121 = vsub.f32 %v1116, %v1120
          %v1122 = vmul.f32 %v1121, %v1121
          %v1123 = vsel %vm938, %v1122, 0.0
          %1124 = vadd.xlane.f32.xlu0 %v1123
          %v1125 = vpop.xlane.xlu0 %1124
          %v1126 = vmul.f32 %v1125, %v942
          %v1127 = vadd.f32 %v1126, 1e-05
          %v1128 = vrsqrt.pop %v1127
          %v1129 = vmul.f32 %v1121, %v1128
          %v1130 = vlaneseq
          %v1131 = vshrl.u32 %v1130, 7
          %v1132 = vsub.s32 3, %v1131
          %v1133 = vrot.slane %v919, %v1132
          %v1134 = vmul.f32 %v1129, %v1133
          %v1135 = vlaneseq
          %v1136 = vshrl.u32 %v1135, 7
          %v1137 = vsub.s32 4, %v1136
          %v1138 = vrot.slane %v919, %v1137
          %v1139 = vadd.f32 %v1134, %v1138
          %v1140 = vld [vmem:[%s862] sm:$0xf]
          %v1141 = vld [vmem:[%s862 + $0x4] sm:$0xf]
          %v1142 = vld [vmem:[%s862 + $0x8] sm:$0xf]
          %v1143 = vld [vmem:[%s862 + $0xc] sm:$0xf]
          %v1144 = vpack.c.bf16 %v1139, %v1139
          %v1145 = vlaneseq
          %v1146 = vshrl.u32 %v1145, 7
          %v1147 = vsub.s32 0, %v1146
          %v1148 = vrot.slane %v922, %v1147
          %v1153 = vunpack.c.l.b16 %v1140
          %v1154 = vunpack.c.l.b16 %v1141
          %v1155 = vunpack.c.l.b16 %v1142
          %v1156 = vunpack.c.l.b16 %v1143
          %v1157 = vpack.c.b16 %v1154, %v1153
          %v1158 = vpack.c.b16 %v1156, %v1155
          %v1162 = vsel %vm938, %v1144, 0
          %1164 = vmatprep.subr.bf16.mxu0 0
          %1165 = vmatpush1.bf16.msra.mxu0 0
          %1166 = vmatprep.subr.bf16.mxu0 0
          %1167 = vmatpush1.bf16.msra.mxu0 0
          %1168 = vmatprep.subr.bf16.mxu0 0
          %1169 = vmatpush1.bf16.msra.mxu0 0
          %1170 = vmatprep.subr.bf16.mxu0 0
          %1171 = vmatpush1.bf16.msra.mxu0 0
          %1172 = vmatprep.subr.bf16.mxu0 0
          %1173 = vmatpush1.bf16.msra.mxu0 0
          %1174 = vmatprep.subr.bf16.mxu0 0
          %1175 = vmatpush1.bf16.msra.mxu0 0
          %1176 = vmatprep.subr.bf16.mxu0 0
          %1177 = vmatpush1.bf16.msra.mxu0 %v1158
          %1178 = vmatprep.subr.bf16.mxu0 0
          %1179 = vmatpush1.bf16.msra.mxu0 %v1157
          %1180 = vmatprep.subr.bf16.mxu0 0
          %1181 = vmatpush2.bf16.msra.mxu0 0
          %1182 = vmatprep.subr.bf16.mxu0 0
          %1183 = vmatpush2.bf16.msra.mxu0 0
          %1184 = vmatprep.subr.bf16.mxu0 0
          %1185 = vmatpush2.bf16.msra.mxu0 0
          %1186 = vmatprep.subr.bf16.mxu0 0
          %1187 = vmatpush2.bf16.msra.mxu0 0
          %1188 = vmatprep.subr.bf16.mxu0 0
          %1189 = vmatpush2.bf16.msra.mxu0 0
          %1190 = vmatprep.subr.bf16.mxu0 0
          %1191 = vmatpush2.bf16.msra.mxu0 0
          %1192 = vmatprep.subr.bf16.mxu0 0
          %1193 = vmatpush2.bf16.msra.mxu0 0
          %1194 = vmatprep.subr.bf16.mxu0 0
          %1195 = vmatpush2.bf16.msra.mxu0 0
          %1196 = vmatprep.mubr.bf16.mxu0 0
          %1197 = vmatmul.mubr.bf16.gmra.mxu0 %v1162
          %v1198 = vpop.f32.mrf.mxu0
          %v1199 = vadd.f32 %v1148, %v1198
          %v1200 = vpop.f32.mrf.mxu0
          %v1201 = vpop.f32.mrf.mxu0
          %v1202 = vpop.f32.mrf.mxu0
          %1203 = vdwg.mxu0
          %v1204 = vld [vmem:[%s867] sm:$0xf]
          %v1205 = vld [vmem:[%s867 + $0x4] sm:$0xf]
          %v1206 = vld [vmem:[%s867 + $0x8] sm:$0xf]
          %v1207 = vld [vmem:[%s867 + $0xc] sm:$0xf]
          %v1208 = vlaneseq
          %v1209 = vshrl.u32 %v1208, 7
          %v1210 = vsub.s32 1, %v1209
          %v1211 = vrot.slane %v922, %v1210
          %v1216 = vunpack.c.l.b16 %v1204
          %v1217 = vunpack.c.l.b16 %v1205
          %v1218 = vunpack.c.l.b16 %v1206
          %v1219 = vunpack.c.l.b16 %v1207
          %v1220 = vpack.c.b16 %v1217, %v1216
          %v1221 = vpack.c.b16 %v1219, %v1218
          %1224 = vmatprep.subr.bf16.mxu0 0
          %1225 = vmatpush1.bf16.msra.mxu0 0
          %1226 = vmatprep.subr.bf16.mxu0 0
          %1227 = vmatpush1.bf16.msra.mxu0 0
          %1228 = vmatprep.subr.bf16.mxu0 0
          %1229 = vmatpush1.bf16.msra.mxu0 0
          %1230 = vmatprep.subr.bf16.mxu0 0
          %1231 = vmatpush1.bf16.msra.mxu0 0
          %1232 = vmatprep.subr.bf16.mxu0 0
          %1233 = vmatpush1.bf16.msra.mxu0 0
          %1234 = vmatprep.subr.bf16.mxu0 0
          %1235 = vmatpush1.bf16.msra.mxu0 0
          %1236 = vmatprep.subr.bf16.mxu0 0
          %1237 = vmatpush1.bf16.msra.mxu0 %v1221
          %1238 = vmatprep.subr.bf16.mxu0 0
          %1239 = vmatpush1.bf16.msra.mxu0 %v1220
          %1240 = vmatprep.subr.bf16.mxu0 0
          %1241 = vmatpush2.bf16.msra.mxu0 0
          %1242 = vmatprep.subr.bf16.mxu0 0
          %1243 = vmatpush2.bf16.msra.mxu0 0
          %1244 = vmatprep.subr.bf16.mxu0 0
          %1245 = vmatpush2.bf16.msra.mxu0 0
          %1246 = vmatprep.subr.bf16.mxu0 0
          %1247 = vmatpush2.bf16.msra.mxu0 0
          %1248 = vmatprep.subr.bf16.mxu0 0
          %1249 = vmatpush2.bf16.msra.mxu0 0
          %1250 = vmatprep.subr.bf16.mxu0 0
          %1251 = vmatpush2.bf16.msra.mxu0 0
          %1252 = vmatprep.subr.bf16.mxu0 0
          %1253 = vmatpush2.bf16.msra.mxu0 0
          %1254 = vmatprep.subr.bf16.mxu0 0
          %1255 = vmatpush2.bf16.msra.mxu0 0
          %1256 = vmatprep.mubr.bf16.mxu0 0
          %1257 = vmatmul.mubr.bf16.gmra.mxu0 %v1162
          %v1258 = vpop.f32.mrf.mxu0
          %v1259 = vadd.f32 %v1211, %v1258
          %v1260 = vpop.f32.mrf.mxu0
          %v1261 = vpop.f32.mrf.mxu0
          %v1262 = vpop.f32.mrf.mxu0
          %1263 = vdwg.mxu0
          %v1264 = vld [vmem:[%s872] sm:$0xf]
          %v1265 = vld [vmem:[%s872 + $0x4] sm:$0xf]
          %v1266 = vld [vmem:[%s872 + $0x8] sm:$0xf]
          %v1267 = vld [vmem:[%s872 + $0xc] sm:$0xf]
          %v1268 = vlaneseq
          %v1269 = vshrl.u32 %v1268, 7
          %v1270 = vsub.s32 2, %v1269
          %v1271 = vrot.slane %v922, %v1270
          %v1276 = vunpack.c.l.b16 %v1264
          %v1277 = vunpack.c.l.b16 %v1265
          %v1278 = vunpack.c.l.b16 %v1266
          %v1279 = vunpack.c.l.b16 %v1267
          %v1280 = vpack.c.b16 %v1277, %v1276
          %v1281 = vpack.c.b16 %v1279, %v1278
          %1284 = vmatprep.subr.bf16.mxu0 0
          %1285 = vmatpush1.bf16.msra.mxu0 0
          %1286 = vmatprep.subr.bf16.mxu0 0
          %1287 = vmatpush1.bf16.msra.mxu0 0
          %1288 = vmatprep.subr.bf16.mxu0 0
          %1289 = vmatpush1.bf16.msra.mxu0 0
          %1290 = vmatprep.subr.bf16.mxu0 0
          %1291 = vmatpush1.bf16.msra.mxu0 0
          %1292 = vmatprep.subr.bf16.mxu0 0
          %1293 = vmatpush1.bf16.msra.mxu0 0
          %1294 = vmatprep.subr.bf16.mxu0 0
          %1295 = vmatpush1.bf16.msra.mxu0 0
          %1296 = vmatprep.subr.bf16.mxu0 0
          %1297 = vmatpush1.bf16.msra.mxu0 %v1281
          %1298 = vmatprep.subr.bf16.mxu0 0
          %1299 = vmatpush1.bf16.msra.mxu0 %v1280
          %1300 = vmatprep.subr.bf16.mxu0 0
          %1301 = vmatpush2.bf16.msra.mxu0 0
          %1302 = vmatprep.subr.bf16.mxu0 0
          %1303 = vmatpush2.bf16.msra.mxu0 0
          %1304 = vmatprep.subr.bf16.mxu0 0
          %1305 = vmatpush2.bf16.msra.mxu0 0
          %1306 = vmatprep.subr.bf16.mxu0 0
          %1307 = vmatpush2.bf16.msra.mxu0 0
          %1308 = vmatprep.subr.bf16.mxu0 0
          %1309 = vmatpush2.bf16.msra.mxu0 0
          %1310 = vmatprep.subr.bf16.mxu0 0
          %1311 = vmatpush2.bf16.msra.mxu0 0
          %1312 = vmatprep.subr.bf16.mxu0 0
          %1313 = vmatpush2.bf16.msra.mxu0 0
          %1314 = vmatprep.subr.bf16.mxu0 0
          %1315 = vmatpush2.bf16.msra.mxu0 0
          %1316 = vmatprep.mubr.bf16.mxu0 0
          %1317 = vmatmul.mubr.bf16.gmra.mxu0 %v1162
          %v1318 = vpop.f32.mrf.mxu0
          %v1319 = vadd.f32 %v1271, %v1318
          %v1320 = vpop.f32.mrf.mxu0
          %v1321 = vpop.f32.mrf.mxu0
          %v1322 = vpop.f32.mrf.mxu0
          %1323 = vdwg.mxu0
          %1325 = vrot.lane.b32.xlu0 %v1199, 112
          %v1326 = vpop.permute.xlu0 %1325
          %v1328 = vcombine.high %v1199, 0.0
          %v1330 = vunpack.c.l.s4 1983009808
          %v1331 = vunpack.c.0.s8 %v1330
          %v1332 = vlaneseq
          %v1333 = vshrl.u32 %v1332, 7
          %v1334 = vsub.s32 %v1331, %v1333
          %v1335 = vrot.slane %v1199, %v1334
          %v1337 = vunpack.c.l.s4 1983009808
          %v1338 = vunpack.c.0.s8 %v1337
          %v1339 = vlaneseq
          %v1340 = vshrl.u32 %v1339, 7
          %v1341 = vsub.s32 %v1338, %v1340
          %v1342 = vrot.slane %v1328, %v1341
          %v1343 = vcombine.high %v1326, 0.0
          %v1345 = vunpack.c.l.s4 1983009808
          %v1346 = vunpack.c.0.s8 %v1345
          %v1347 = vlaneseq
          %v1348 = vshrl.u32 %v1347, 7
          %v1349 = vsub.s32 %v1346, %v1348
          %v1350 = vrot.slane %v1326, %v1349
          %v1352 = vunpack.c.l.s4 1983009808
          %v1353 = vunpack.c.0.s8 %v1352
          %v1354 = vlaneseq
          %v1355 = vshrl.u32 %v1354, 7
          %v1356 = vsub.s32 %v1353, %v1355
          %v1357 = vrot.slane %v1343, %v1356
          %v1358 = vcombine.low %v1335, %v1350
          %v1359 = vcombine.high %v1335, %v1350
          %v1361 = vunpack.c.l.s4 1934713408
          %v1362 = vunpack.c.0.s8 %v1361
          %v1363 = vlaneseq
          %v1364 = vshrl.u32 %v1363, 7
          %v1365 = vsub.s32 %v1362, %v1364
          %v1366 = vrot.slane %v1358, %v1365
          %v1368 = vunpack.c.l.s4 1934713408
          %v1369 = vunpack.c.0.s8 %v1368
          %v1370 = vlaneseq
          %v1371 = vshrl.u32 %v1370, 7
          %v1372 = vsub.s32 %v1369, %v1371
          %v1373 = vrot.slane %v1359, %v1372
          %v1374 = vcombine.low %v1342, %v1357
          %v1375 = vcombine.high %v1342, %v1357
          %v1377 = vunpack.c.l.s4 1934713408
          %v1378 = vunpack.c.0.s8 %v1377
          %v1379 = vlaneseq
          %v1380 = vshrl.u32 %v1379, 7
          %v1381 = vsub.s32 %v1378, %v1380
          %v1382 = vrot.slane %v1374, %v1381
          %v1384 = vunpack.c.l.s4 1934713408
          %v1385 = vunpack.c.0.s8 %v1384
          %v1386 = vlaneseq
          %v1387 = vshrl.u32 %v1386, 7
          %v1388 = vsub.s32 %v1385, %v1387
          %v1389 = vrot.slane %v1375, %v1388
          %v1390 = vcombine.high %v1366, 0.0
          %v1391 = vcombine.high %v1373, 0.0
          %v1392 = vcombine.high %v1382, 0.0
          %v1393 = vcombine.high %v1389, 0.0
          %v1394 = vcombine.low %v1366, %v1373
          %v1396 = vunpack.c.l.s4 1983009808
          %v1397 = vunpack.c.0.s8 %v1396
          %v1398 = vlaneseq
          %v1399 = vshrl.u32 %v1398, 7
          %v1400 = vsub.s32 %v1397, %v1399
          %v1401 = vrot.slane %v1394, %v1400
          %v1402 = vcombine.low %v1390, %v1391
          %v1404 = vunpack.c.l.s4 1983009808
          %v1405 = vunpack.c.0.s8 %v1404
          %v1406 = vlaneseq
          %v1407 = vshrl.u32 %v1406, 7
          %v1408 = vsub.s32 %v1405, %v1407
          %v1409 = vrot.slane %v1402, %v1408
          %v1410 = vcombine.low %v1382, %v1389
          %v1412 = vunpack.c.l.s4 1983009808
          %v1413 = vunpack.c.0.s8 %v1412
          %v1414 = vlaneseq
          %v1415 = vshrl.u32 %v1414, 7
          %v1416 = vsub.s32 %v1413, %v1415
          %v1417 = vrot.slane %v1410, %v1416
          %v1418 = vcombine.low %v1392, %v1393
          %v1420 = vunpack.c.l.s4 1983009808
          %v1421 = vunpack.c.0.s8 %v1420
          %v1422 = vlaneseq
          %v1423 = vshrl.u32 %v1422, 7
          %v1424 = vsub.s32 %v1421, %v1423
          %v1425 = vrot.slane %v1418, %v1424
          %v1426 = vcombine.low %v1401, %v1409
          %v1428 = vunpack.c.l.s4 1934713408
          %v1429 = vunpack.c.0.s8 %v1428
          %v1430 = vlaneseq
          %v1431 = vshrl.u32 %v1430, 7
          %v1432 = vsub.s32 %v1429, %v1431
          %v1433 = vrot.slane %v1426, %v1432
          %v1434 = vcombine.low %v1417, %v1425
          %v1436 = vunpack.c.l.s4 1934713408
          %v1437 = vunpack.c.0.s8 %v1436
          %v1438 = vlaneseq
          %v1439 = vshrl.u32 %v1438, 7
          %v1440 = vsub.s32 %v1437, %v1439
          %v1441 = vrot.slane %v1434, %v1440
          %v1442 = vcombine.low %v1433, %v1441
          %v1443 = vcombine.high %v1433, %v1441
          %1445 = vrot.lane.b32.xlu0 %v1259, 112
          %v1446 = vpop.permute.xlu0 %1445
          %v1448 = vcombine.high %v1259, 0.0
          %v1450 = vunpack.c.l.s4 1983009808
          %v1451 = vunpack.c.0.s8 %v1450
          %v1452 = vlaneseq
          %v1453 = vshrl.u32 %v1452, 7
          %v1454 = vsub.s32 %v1451, %v1453
          %v1455 = vrot.slane %v1259, %v1454
          %v1457 = vunpack.c.l.s4 1983009808
          %v1458 = vunpack.c.0.s8 %v1457
          %v1459 = vlaneseq
          %v1460 = vshrl.u32 %v1459, 7
          %v1461 = vsub.s32 %v1458, %v1460
          %v1462 = vrot.slane %v1448, %v1461
          %v1463 = vcombine.high %v1446, 0.0
          %v1465 = vunpack.c.l.s4 1983009808
          %v1466 = vunpack.c.0.s8 %v1465
          %v1467 = vlaneseq
          %v1468 = vshrl.u32 %v1467, 7
          %v1469 = vsub.s32 %v1466, %v1468
          %v1470 = vrot.slane %v1446, %v1469
          %v1472 = vunpack.c.l.s4 1983009808
          %v1473 = vunpack.c.0.s8 %v1472
          %v1474 = vlaneseq
          %v1475 = vshrl.u32 %v1474, 7
          %v1476 = vsub.s32 %v1473, %v1475
          %v1477 = vrot.slane %v1463, %v1476
          %v1478 = vcombine.low %v1455, %v1470
          %v1479 = vcombine.high %v1455, %v1470
          %v1481 = vunpack.c.l.s4 1934713408
          %v1482 = vunpack.c.0.s8 %v1481
          %v1483 = vlaneseq
          %v1484 = vshrl.u32 %v1483, 7
          %v1485 = vsub.s32 %v1482, %v1484
          %v1486 = vrot.slane %v1478, %v1485
          %v1488 = vunpack.c.l.s4 1934713408
          %v1489 = vunpack.c.0.s8 %v1488
          %v1490 = vlaneseq
          %v1491 = vshrl.u32 %v1490, 7
          %v1492 = vsub.s32 %v1489, %v1491
          %v1493 = vrot.slane %v1479, %v1492
          %v1494 = vcombine.low %v1462, %v1477
          %v1495 = vcombine.high %v1462, %v1477
          %v1497 = vunpack.c.l.s4 1934713408
          %v1498 = vunpack.c.0.s8 %v1497
          %v1499 = vlaneseq
          %v1500 = vshrl.u32 %v1499, 7
          %v1501 = vsub.s32 %v1498, %v1500
          %v1502 = vrot.slane %v1494, %v1501
          %v1504 = vunpack.c.l.s4 1934713408
          %v1505 = vunpack.c.0.s8 %v1504
          %v1506 = vlaneseq
          %v1507 = vshrl.u32 %v1506, 7
          %v1508 = vsub.s32 %v1505, %v1507
          %v1509 = vrot.slane %v1495, %v1508
          %v1510 = vcombine.high %v1486, 0.0
          %v1511 = vcombine.high %v1493, 0.0
          %v1512 = vcombine.high %v1502, 0.0
          %v1513 = vcombine.high %v1509, 0.0
          %v1514 = vcombine.low %v1486, %v1493
          %v1516 = vunpack.c.l.s4 1983009808
          %v1517 = vunpack.c.0.s8 %v1516
          %v1518 = vlaneseq
          %v1519 = vshrl.u32 %v1518, 7
          %v1520 = vsub.s32 %v1517, %v1519
          %v1521 = vrot.slane %v1514, %v1520
          %v1522 = vcombine.low %v1510, %v1511
          %v1524 = vunpack.c.l.s4 1983009808
          %v1525 = vunpack.c.0.s8 %v1524
          %v1526 = vlaneseq
          %v1527 = vshrl.u32 %v1526, 7
          %v1528 = vsub.s32 %v1525, %v1527
          %v1529 = vrot.slane %v1522, %v1528
          %v1530 = vcombine.low %v1502, %v1509
          %v1532 = vunpack.c.l.s4 1983009808
          %v1533 = vunpack.c.0.s8 %v1532
          %v1534 = vlaneseq
          %v1535 = vshrl.u32 %v1534, 7
          %v1536 = vsub.s32 %v1533, %v1535
          %v1537 = vrot.slane %v1530, %v1536
          %v1538 = vcombine.low %v1512, %v1513
          %v1540 = vunpack.c.l.s4 1983009808
          %v1541 = vunpack.c.0.s8 %v1540
          %v1542 = vlaneseq
          %v1543 = vshrl.u32 %v1542, 7
          %v1544 = vsub.s32 %v1541, %v1543
          %v1545 = vrot.slane %v1538, %v1544
          %v1546 = vcombine.low %v1521, %v1529
          %v1548 = vunpack.c.l.s4 1934713408
          %v1549 = vunpack.c.0.s8 %v1548
          %v1550 = vlaneseq
          %v1551 = vshrl.u32 %v1550, 7
          %v1552 = vsub.s32 %v1549, %v1551
          %v1553 = vrot.slane %v1546, %v1552
          %v1554 = vcombine.low %v1537, %v1545
          %v1556 = vunpack.c.l.s4 1934713408
          %v1557 = vunpack.c.0.s8 %v1556
          %v1558 = vlaneseq
          %v1559 = vshrl.u32 %v1558, 7
          %v1560 = vsub.s32 %v1557, %v1559
          %v1561 = vrot.slane %v1554, %v1560
          %v1562 = vcombine.low %v1553, %v1561
          %v1563 = vcombine.high %v1553, %v1561
          %v1564 = vpack.c.bf16 %v1562, %v1562
          %v1565 = vpack.c.bf16 %v1563, %v1563
          %1567 = vrot.lane.b32.xlu0 %v1319, 112
          %v1568 = vpop.permute.xlu0 %1567
          %v1570 = vcombine.high %v1319, 0.0
          %v1572 = vunpack.c.l.s4 1983009808
          %v1573 = vunpack.c.0.s8 %v1572
          %v1574 = vlaneseq
          %v1575 = vshrl.u32 %v1574, 7
          %v1576 = vsub.s32 %v1573, %v1575
          %v1577 = vrot.slane %v1319, %v1576
          %v1579 = vunpack.c.l.s4 1983009808
          %v1580 = vunpack.c.0.s8 %v1579
          %v1581 = vlaneseq
          %v1582 = vshrl.u32 %v1581, 7
          %v1583 = vsub.s32 %v1580, %v1582
          %v1584 = vrot.slane %v1570, %v1583
          %v1585 = vcombine.high %v1568, 0.0
          %v1587 = vunpack.c.l.s4 1983009808
          %v1588 = vunpack.c.0.s8 %v1587
          %v1589 = vlaneseq
          %v1590 = vshrl.u32 %v1589, 7
          %v1591 = vsub.s32 %v1588, %v1590
          %v1592 = vrot.slane %v1568, %v1591
          %v1594 = vunpack.c.l.s4 1983009808
          %v1595 = vunpack.c.0.s8 %v1594
          %v1596 = vlaneseq
          %v1597 = vshrl.u32 %v1596, 7
          %v1598 = vsub.s32 %v1595, %v1597
          %v1599 = vrot.slane %v1585, %v1598
          %v1600 = vcombine.low %v1577, %v1592
          %v1601 = vcombine.high %v1577, %v1592
          %v1603 = vunpack.c.l.s4 1934713408
          %v1604 = vunpack.c.0.s8 %v1603
          %v1605 = vlaneseq
          %v1606 = vshrl.u32 %v1605, 7
          %v1607 = vsub.s32 %v1604, %v1606
          %v1608 = vrot.slane %v1600, %v1607
          %v1610 = vunpack.c.l.s4 1934713408
          %v1611 = vunpack.c.0.s8 %v1610
          %v1612 = vlaneseq
          %v1613 = vshrl.u32 %v1612, 7
          %v1614 = vsub.s32 %v1611, %v1613
          %v1615 = vrot.slane %v1601, %v1614
          %v1616 = vcombine.low %v1584, %v1599
          %v1617 = vcombine.high %v1584, %v1599
          %v1619 = vunpack.c.l.s4 1934713408
          %v1620 = vunpack.c.0.s8 %v1619
          %v1621 = vlaneseq
          %v1622 = vshrl.u32 %v1621, 7
          %v1623 = vsub.s32 %v1620, %v1622
          %v1624 = vrot.slane %v1616, %v1623
          %v1626 = vunpack.c.l.s4 1934713408
          %v1627 = vunpack.c.0.s8 %v1626
          %v1628 = vlaneseq
          %v1629 = vshrl.u32 %v1628, 7
          %v1630 = vsub.s32 %v1627, %v1629
          %v1631 = vrot.slane %v1617, %v1630
          %v1632 = vcombine.high %v1608, 0.0
          %v1633 = vcombine.high %v1615, 0.0
          %v1634 = vcombine.high %v1624, 0.0
          %v1635 = vcombine.high %v1631, 0.0
          %v1636 = vcombine.low %v1608, %v1615
          %v1638 = vunpack.c.l.s4 1983009808
          %v1639 = vunpack.c.0.s8 %v1638
          %v1640 = vlaneseq
          %v1641 = vshrl.u32 %v1640, 7
          %v1642 = vsub.s32 %v1639, %v1641
          %v1643 = vrot.slane %v1636, %v1642
          %v1644 = vcombine.low %v1632, %v1633
          %v1646 = vunpack.c.l.s4 1983009808
          %v1647 = vunpack.c.0.s8 %v1646
          %v1648 = vlaneseq
          %v1649 = vshrl.u32 %v1648, 7
          %v1650 = vsub.s32 %v1647, %v1649
          %v1651 = vrot.slane %v1644, %v1650
          %v1652 = vcombine.low %v1624, %v1631
          %v1654 = vunpack.c.l.s4 1983009808
          %v1655 = vunpack.c.0.s8 %v1654
          %v1656 = vlaneseq
          %v1657 = vshrl.u32 %v1656, 7
          %v1658 = vsub.s32 %v1655, %v1657
          %v1659 = vrot.slane %v1652, %v1658
          %v1660 = vcombine.low %v1634, %v1635
          %v1662 = vunpack.c.l.s4 1983009808
          %v1663 = vunpack.c.0.s8 %v1662
          %v1664 = vlaneseq
          %v1665 = vshrl.u32 %v1664, 7
          %v1666 = vsub.s32 %v1663, %v1665
          %v1667 = vrot.slane %v1660, %v1666
          %v1668 = vcombine.low %v1643, %v1651
          %v1670 = vunpack.c.l.s4 1934713408
          %v1671 = vunpack.c.0.s8 %v1670
          %v1672 = vlaneseq
          %v1673 = vshrl.u32 %v1672, 7
          %v1674 = vsub.s32 %v1671, %v1673
          %v1675 = vrot.slane %v1668, %v1674
          %v1676 = vcombine.low %v1659, %v1667
          %v1678 = vunpack.c.l.s4 1934713408
          %v1679 = vunpack.c.0.s8 %v1678
          %v1680 = vlaneseq
          %v1681 = vshrl.u32 %v1680, 7
          %v1682 = vsub.s32 %v1679, %v1681
          %v1683 = vrot.slane %v1676, %v1682
          %v1684 = vcombine.low %v1675, %v1683
          %v1685 = vcombine.high %v1675, %v1683
          %v1686 = vpack.c.bf16 %v1684, %v1684
          %v1687 = vpack.c.bf16 %v1685, %v1685
          %v1688 = vpack.c.bf16 %v1442, %v1442
          %v1689 = vpack.c.bf16 %v1443, %v1443
          %vm1690 = vcmask 130048
          %v1692 = vsel %vm1690, %v1688, 0
          %v1695 = vsel %vm1690, %v1564, 0
          %1697 = vmatprep.subr.bf16.mxu0 0
          %1698 = vmatpush1.bf16.xpose.msra.mxu0 0
          %1699 = vmatprep.subr.bf16.mxu0 0
          %1700 = vmatpush1.bf16.xpose.msra.mxu0 0
          %1701 = vmatprep.subr.bf16.mxu0 0
          %1702 = vmatpush1.bf16.xpose.msra.mxu0 0
          %1703 = vmatprep.subr.bf16.mxu0 0
          %1704 = vmatpush1.bf16.xpose.msra.mxu0 0
          %1705 = vmatprep.subr.bf16.mxu0 0
          %1706 = vmatpush1.bf16.xpose.msra.mxu0 0
          %1707 = vmatprep.subr.bf16.mxu0 0
          %1708 = vmatpush1.bf16.xpose.msra.mxu0 0
          %1709 = vmatprep.subr.bf16.mxu0 0
          %1710 = vmatpush1.bf16.xpose.msra.mxu0 0
          %1711 = vmatprep.subr.bf16.mxu0 0
          %1712 = vmatpush1.bf16.xpose.msra.mxu0 %v1695
          %1713 = vmatprep.subr.bf16.mxu0 0
          %1714 = vmatpush2.bf16.xpose.msra.mxu0 0
          %1715 = vmatprep.subr.bf16.mxu0 0
          %1716 = vmatpush2.bf16.xpose.msra.mxu0 0
          %1717 = vmatprep.subr.bf16.mxu0 0
          %1718 = vmatpush2.bf16.xpose.msra.mxu0 0
          %1719 = vmatprep.subr.bf16.mxu0 0
          %1720 = vmatpush2.bf16.xpose.msra.mxu0 0
          %1721 = vmatprep.subr.bf16.mxu0 0
          %1722 = vmatpush2.bf16.xpose.msra.mxu0 0
          %1723 = vmatprep.subr.bf16.mxu0 0
          %1724 = vmatpush2.bf16.xpose.msra.mxu0 0
          %1725 = vmatprep.subr.bf16.mxu0 0
          %1726 = vmatpush2.bf16.xpose.msra.mxu0 0
          %1727 = vmatprep.subr.bf16.mxu0 0
          %1728 = vmatpush2.bf16.xpose.msra.mxu0 0
          %1729 = vmatprep.mubr.bf16.mxu0 0
          %1730 = vmatmul.mubr.bf16.gmra.mxu0 %v1692
          %v1731 = vpop.f32.mrf.mxu0
          %v1732 = vadd.f32 0.0, %v1731
          %v1733 = vpop.f32.mrf.mxu0
          %v1734 = vpop.f32.mrf.mxu0
          %v1735 = vpop.f32.mrf.mxu0
          %1736 = vdwg.mxu0
          %v1738 = vsel %vm1690, %v1689, 0
          %v1741 = vsel %vm1690, %v1565, 0
          %1743 = vmatprep.subr.bf16.mxu0 0
          %1744 = vmatpush1.bf16.xpose.msra.mxu0 0
          %1745 = vmatprep.subr.bf16.mxu0 0
          %1746 = vmatpush1.bf16.xpose.msra.mxu0 0
          %1747 = vmatprep.subr.bf16.mxu0 0
          %1748 = vmatpush1.bf16.xpose.msra.mxu0 0
          %1749 = vmatprep.subr.bf16.mxu0 0
          %1750 = vmatpush1.bf16.xpose.msra.mxu0 0
          %1751 = vmatprep.subr.bf16.mxu0 0
          %1752 = vmatpush1.bf16.xpose.msra.mxu0 0
          %1753 = vmatprep.subr.bf16.mxu0 0
          %1754 = vmatpush1.bf16.xpose.msra.mxu0 0
          %1755 = vmatprep.subr.bf16.mxu0 0
          %1756 = vmatpush1.bf16.xpose.msra.mxu0 0
          %1757 = vmatprep.subr.bf16.mxu0 0
          %1758 = vmatpush1.bf16.xpose.msra.mxu0 %v1741
          %1759 = vmatprep.subr.bf16.mxu0 0
          %1760 = vmatpush2.bf16.xpose.msra.mxu0 0
          %1761 = vmatprep.subr.bf16.mxu0 0
          %1762 = vmatpush2.bf16.xpose.msra.mxu0 0
          %1763 = vmatprep.subr.bf16.mxu0 0
          %1764 = vmatpush2.bf16.xpose.msra.mxu0 0
          %1765 = vmatprep.subr.bf16.mxu0 0
          %1766 = vmatpush2.bf16.xpose.msra.mxu0 0
          %1767 = vmatprep.subr.bf16.mxu0 0
          %1768 = vmatpush2.bf16.xpose.msra.mxu0 0
          %1769 = vmatprep.subr.bf16.mxu0 0
          %1770 = vmatpush2.bf16.xpose.msra.mxu0 0
          %1771 = vmatprep.subr.bf16.mxu0 0
          %1772 = vmatpush2.bf16.xpose.msra.mxu0 0
          %1773 = vmatprep.subr.bf16.mxu0 0
          %1774 = vmatpush2.bf16.xpose.msra.mxu0 0
          %1775 = vmatprep.mubr.bf16.mxu0 0
          %1776 = vmatmul.mubr.bf16.gmra.mxu0 %v1738
          %v1777 = vpop.f32.mrf.mxu0
          %v1778 = vadd.f32 0.0, %v1777
          %v1779 = vpop.f32.mrf.mxu0
          %v1780 = vpop.f32.mrf.mxu0
          %v1781 = vpop.f32.mrf.mxu0
          %1782 = vdwg.mxu0
          %v1783 = vmul.f32 %v1732, 0.25
          %v1784 = vmul.f32 %v1778, 0.25
          %v1786 = vlaneseq
          %v1787 = vshrl.u32 %v1786, 7
          %v1788 = vsub.s32 0, %v1787
          %v1789 = vrot.slane %v937, %v1788
          %v1791 = vadd.f32 %v1783, %v1789
          %v1792 = vadd.f32 %v1784, %v1789
          %vm1793 = vcmask 64512
          %v1794 = vsel %vm1793, %v1791, -inf
          %1795 = vmax.xlane.f32.xlu0 %v1794
          %v1796 = vpop.xlane.xlu0 %1795
          %v1797 = vsel %vm1793, %v1792, -inf
          %1798 = vmax.xlane.f32.xlu0 %v1797
          %v1799 = vpop.xlane.xlu0 %1798
          %v1800 = vsub.f32 %v1791, %v1796
          %v1801 = vsub.f32 %v1792, %v1799
          %v1802 = vmul.f32 %v1800, 1.442695
          %v1803 = vpow.pop %v1802
          %v1804 = vmul.f32 %v1801, 1.442695
          %v1805 = vpow.pop %v1804
          %v1806 = vsel %vm1793, %v1803, 0.0
          %1807 = vadd.xlane.f32.xlu0 %v1806
          %v1808 = vpop.xlane.xlu0 %1807
          %v1809 = vsel %vm1793, %v1805, 0.0
          %1810 = vadd.xlane.f32.xlu0 %v1809
          %v1811 = vpop.xlane.xlu0 %1810
          %v1812 = vrcp.pop %v1808
          %v1813 = vrcp.pop %v1811
          %v1814 = vmul.f32 %v1803, %v1812
          %v1815 = vmul.f32 %v1805, %v1813
          %v1816 = vpack.c.bf16 %v1814, %v1814
          %v1817 = vpack.c.bf16 %v1815, %v1815
          %v1819 = vsel %vm1793, %v1816, 0
          %vm1821 = vcmask 1043456
          %v1823 = vsel %vm1821, %v1686, 0
          %1825 = vmatprep.subr.bf16.mxu0 0
          %1826 = vmatpush1.bf16.msra.mxu0 0
          %1827 = vmatprep.subr.bf16.mxu0 0
          %1828 = vmatpush1.bf16.msra.mxu0 0
          %1829 = vmatprep.subr.bf16.mxu0 0
          %1830 = vmatpush1.bf16.msra.mxu0 0
          %1831 = vmatprep.subr.bf16.mxu0 0
          %1832 = vmatpush1.bf16.msra.mxu0 0
          %1833 = vmatprep.subr.bf16.mxu0 0
          %1834 = vmatpush1.bf16.msra.mxu0 0
          %1835 = vmatprep.subr.bf16.mxu0 0
          %1836 = vmatpush1.bf16.msra.mxu0 0
          %1837 = vmatprep.subr.bf16.mxu0 0
          %1838 = vmatpush1.bf16.msra.mxu0 0
          %1839 = vmatprep.subr.bf16.mxu0 0
          %1840 = vmatpush1.bf16.msra.mxu0 %v1823
          %1841 = vmatprep.subr.bf16.mxu0 0
          %1842 = vmatpush2.bf16.msra.mxu0 0
          %1843 = vmatprep.subr.bf16.mxu0 0
          %1844 = vmatpush2.bf16.msra.mxu0 0
          %1845 = vmatprep.subr.bf16.mxu0 0
          %1846 = vmatpush2.bf16.msra.mxu0 0
          %1847 = vmatprep.subr.bf16.mxu0 0
          %1848 = vmatpush2.bf16.msra.mxu0 0
          %1849 = vmatprep.subr.bf16.mxu0 0
          %1850 = vmatpush2.bf16.msra.mxu0 0
          %1851 = vmatprep.subr.bf16.mxu0 0
          %1852 = vmatpush2.bf16.msra.mxu0 0
          %1853 = vmatprep.subr.bf16.mxu0 0
          %1854 = vmatpush2.bf16.msra.mxu0 0
          %1855 = vmatprep.subr.bf16.mxu0 0
          %1856 = vmatpush2.bf16.msra.mxu0 0
          %1857 = vmatprep.mubr.bf16.mxu0 0
          %1858 = vmatmul.mubr.bf16.gmra.mxu0 %v1819
          %v1859 = vpop.f32.mrf.mxu0
          %v1860 = vadd.f32 0.0, %v1859
          %v1861 = vpop.f32.mrf.mxu0
          %v1862 = vpop.f32.mrf.mxu0
          %v1863 = vpop.f32.mrf.mxu0
          %1864 = vdwg.mxu0
          %v1866 = vsel %vm1793, %v1817, 0
          %v1869 = vsel %vm1821, %v1687, 0
          %1871 = vmatprep.subr.bf16.mxu0 0
          %1872 = vmatpush1.bf16.msra.mxu0 0
          %1873 = vmatprep.subr.bf16.mxu0 0
          %1874 = vmatpush1.bf16.msra.mxu0 0
          %1875 = vmatprep.subr.bf16.mxu0 0
          %1876 = vmatpush1.bf16.msra.mxu0 0
          %1877 = vmatprep.subr.bf16.mxu0 0
          %1878 = vmatpush1.bf16.msra.mxu0 0
          %1879 = vmatprep.subr.bf16.mxu0 0
          %1880 = vmatpush1.bf16.msra.mxu0 0
          %1881 = vmatprep.subr.bf16.mxu0 0
          %1882 = vmatpush1.bf16.msra.mxu0 0
          %1883 = vmatprep.subr.bf16.mxu0 0
          %1884 = vmatpush1.bf16.msra.mxu0 0
          %1885 = vmatprep.subr.bf16.mxu0 0
          %1886 = vmatpush1.bf16.msra.mxu0 %v1869
          %1887 = vmatprep.subr.bf16.mxu0 0
          %1888 = vmatpush2.bf16.msra.mxu0 0
          %1889 = vmatprep.subr.bf16.mxu0 0
          %1890 = vmatpush2.bf16.msra.mxu0 0
          %1891 = vmatprep.subr.bf16.mxu0 0
          %1892 = vmatpush2.bf16.msra.mxu0 0
          %1893 = vmatprep.subr.bf16.mxu0 0
          %1894 = vmatpush2.bf16.msra.mxu0 0
          %1895 = vmatprep.subr.bf16.mxu0 0
          %1896 = vmatpush2.bf16.msra.mxu0 0
          %1897 = vmatprep.subr.bf16.mxu0 0
          %1898 = vmatpush2.bf16.msra.mxu0 0
          %1899 = vmatprep.subr.bf16.mxu0 0
          %1900 = vmatpush2.bf16.msra.mxu0 0
          %1901 = vmatprep.subr.bf16.mxu0 0
          %1902 = vmatpush2.bf16.msra.mxu0 0
          %1903 = vmatprep.mubr.bf16.mxu0 0
          %1904 = vmatmul.mubr.bf16.gmra.mxu0 %v1866
          %v1905 = vpop.f32.mrf.mxu0
          %v1906 = vadd.f32 0.0, %v1905
          %v1907 = vpop.f32.mrf.mxu0
          %v1908 = vpop.f32.mrf.mxu0
          %v1909 = vpop.f32.mrf.mxu0
          %1910 = vdwg.mxu0
          %v1911 = vcombine.high %v1860, 0.0
          %v1913 = vunpack.c.l.s4 1983009808
          %v1914 = vunpack.c.0.s8 %v1913
          %v1915 = vlaneseq
          %v1916 = vshrl.u32 %v1915, 7
          %v1917 = vsub.s32 %v1914, %v1916
          %v1918 = vrot.slane %v1860, %v1917
          %v1920 = vunpack.c.l.s4 1983009808
          %v1921 = vunpack.c.0.s8 %v1920
          %v1922 = vlaneseq
          %v1923 = vshrl.u32 %v1922, 7
          %v1924 = vsub.s32 %v1921, %v1923
          %v1925 = vrot.slane %v1911, %v1924
          %v1926 = vcombine.high %v1906, 0.0
          %v1928 = vunpack.c.l.s4 1983009808
          %v1929 = vunpack.c.0.s8 %v1928
          %v1930 = vlaneseq
          %v1931 = vshrl.u32 %v1930, 7
          %v1932 = vsub.s32 %v1929, %v1931
          %v1933 = vrot.slane %v1906, %v1932
          %v1935 = vunpack.c.l.s4 1983009808
          %v1936 = vunpack.c.0.s8 %v1935
          %v1937 = vlaneseq
          %v1938 = vshrl.u32 %v1937, 7
          %v1939 = vsub.s32 %v1936, %v1938
          %v1940 = vrot.slane %v1926, %v1939
          %v1941 = vcombine.low %v1918, %v1933
          %v1942 = vcombine.high %v1918, %v1933
          %v1944 = vunpack.c.l.s4 1934713408
          %v1945 = vunpack.c.0.s8 %v1944
          %v1946 = vlaneseq
          %v1947 = vshrl.u32 %v1946, 7
          %v1948 = vsub.s32 %v1945, %v1947
          %v1949 = vrot.slane %v1941, %v1948
          %v1951 = vunpack.c.l.s4 1934713408
          %v1952 = vunpack.c.0.s8 %v1951
          %v1953 = vlaneseq
          %v1954 = vshrl.u32 %v1953, 7
          %v1955 = vsub.s32 %v1952, %v1954
          %v1956 = vrot.slane %v1942, %v1955
          %v1957 = vcombine.low %v1925, %v1940
          %v1958 = vcombine.high %v1925, %v1940
          %v1960 = vunpack.c.l.s4 1934713408
          %v1961 = vunpack.c.0.s8 %v1960
          %v1962 = vlaneseq
          %v1963 = vshrl.u32 %v1962, 7
          %v1964 = vsub.s32 %v1961, %v1963
          %v1965 = vrot.slane %v1957, %v1964
          %v1967 = vunpack.c.l.s4 1934713408
          %v1968 = vunpack.c.0.s8 %v1967
          %v1969 = vlaneseq
          %v1970 = vshrl.u32 %v1969, 7
          %v1971 = vsub.s32 %v1968, %v1970
          %v1972 = vrot.slane %v1958, %v1971
          %v1973 = vcombine.high %v1949, 0.0
          %v1974 = vcombine.high %v1956, 0.0
          %v1975 = vcombine.high %v1965, 0.0
          %v1976 = vcombine.high %v1972, 0.0
          %v1977 = vcombine.low %v1949, %v1956
          %v1979 = vunpack.c.l.s4 1983009808
          %v1980 = vunpack.c.0.s8 %v1979
          %v1981 = vlaneseq
          %v1982 = vshrl.u32 %v1981, 7
          %v1983 = vsub.s32 %v1980, %v1982
          %v1984 = vrot.slane %v1977, %v1983
          %v1985 = vcombine.low %v1973, %v1974
          %v1987 = vunpack.c.l.s4 1983009808
          %v1988 = vunpack.c.0.s8 %v1987
          %v1989 = vlaneseq
          %v1990 = vshrl.u32 %v1989, 7
          %v1991 = vsub.s32 %v1988, %v1990
          %v1992 = vrot.slane %v1985, %v1991
          %v1993 = vcombine.low %v1965, %v1972
          %v1995 = vunpack.c.l.s4 1983009808
          %v1996 = vunpack.c.0.s8 %v1995
          %v1997 = vlaneseq
          %v1998 = vshrl.u32 %v1997, 7
          %v1999 = vsub.s32 %v1996, %v1998
          %v2000 = vrot.slane %v1993, %v1999
          %v2001 = vcombine.low %v1975, %v1976
          %v2003 = vunpack.c.l.s4 1983009808
          %v2004 = vunpack.c.0.s8 %v2003
          %v2005 = vlaneseq
          %v2006 = vshrl.u32 %v2005, 7
          %v2007 = vsub.s32 %v2004, %v2006
          %v2008 = vrot.slane %v2001, %v2007
          %v2009 = vcombine.low %v1984, %v1992
          %v2011 = vunpack.c.l.s4 1934713408
          %v2012 = vunpack.c.0.s8 %v2011
          %v2013 = vlaneseq
          %v2014 = vshrl.u32 %v2013, 7
          %v2015 = vsub.s32 %v2012, %v2014
          %v2016 = vrot.slane %v2009, %v2015
          %v2017 = vcombine.low %v2000, %v2008
          %v2019 = vunpack.c.l.s4 1934713408
          %v2020 = vunpack.c.0.s8 %v2019
          %v2021 = vlaneseq
          %v2022 = vshrl.u32 %v2021, 7
          %v2023 = vsub.s32 %v2020, %v2022
          %v2024 = vrot.slane %v2017, %v2023
          %v2025 = vcombine.low %v2016, %v2024
          %v2026 = vcombine.high %v2016, %v2024
          %2028 = vrot.lane.b32.xlu0 %v2026, 16
          %v2029 = vpop.permute.xlu0 %2028
          %v2031 = vsel %vm1690, %v2025, %v2029
          %v2032 = vld [vmem:[%s877] sm:$0xf]
          %v2033 = vld [vmem:[%s877 + $0x4] sm:$0xf]
          %v2034 = vld [vmem:[%s877 + $0x8] sm:$0xf]
          %v2035 = vld [vmem:[%s877 + $0xc] sm:$0xf]
          %v2036 = vpack.c.bf16 %v2031, %v2031
          %v2037 = vlaneseq
          %v2038 = vshrl.u32 %v2037, 7
          %v2039 = vsub.s32 5, %v2038
          %v2040 = vrot.slane %v919, %v2039
          %v2045 = vunpack.c.l.b16 %v2032
          %v2046 = vunpack.c.l.b16 %v2033
          %v2047 = vunpack.c.l.b16 %v2034
          %v2048 = vunpack.c.l.b16 %v2035
          %v2049 = vpack.c.b16 %v2046, %v2045
          %v2050 = vpack.c.b16 %v2048, %v2047
          %v2054 = vsel %vm938, %v2036, 0
          %2056 = vmatprep.subr.bf16.mxu0 0
          %2057 = vmatpush1.bf16.msra.mxu0 0
          %2058 = vmatprep.subr.bf16.mxu0 0
          %2059 = vmatpush1.bf16.msra.mxu0 0
          %2060 = vmatprep.subr.bf16.mxu0 0
          %2061 = vmatpush1.bf16.msra.mxu0 0
          %2062 = vmatprep.subr.bf16.mxu0 0
          %2063 = vmatpush1.bf16.msra.mxu0 0
          %2064 = vmatprep.subr.bf16.mxu0 0
          %2065 = vmatpush1.bf16.msra.mxu0 0
          %2066 = vmatprep.subr.bf16.mxu0 0
          %2067 = vmatpush1.bf16.msra.mxu0 0
          %2068 = vmatprep.subr.bf16.mxu0 0
          %2069 = vmatpush1.bf16.msra.mxu0 %v2050
          %2070 = vmatprep.subr.bf16.mxu0 0
          %2071 = vmatpush1.bf16.msra.mxu0 %v2049
          %2072 = vmatprep.subr.bf16.mxu0 0
          %2073 = vmatpush2.bf16.msra.mxu0 0
          %2074 = vmatprep.subr.bf16.mxu0 0
          %2075 = vmatpush2.bf16.msra.mxu0 0
          %2076 = vmatprep.subr.bf16.mxu0 0
          %2077 = vmatpush2.bf16.msra.mxu0 0
          %2078 = vmatprep.subr.bf16.mxu0 0
          %2079 = vmatpush2.bf16.msra.mxu0 0
          %2080 = vmatprep.subr.bf16.mxu0 0
          %2081 = vmatpush2.bf16.msra.mxu0 0
          %2082 = vmatprep.subr.bf16.mxu0 0
          %2083 = vmatpush2.bf16.msra.mxu0 0
          %2084 = vmatprep.subr.bf16.mxu0 0
          %2085 = vmatpush2.bf16.msra.mxu0 0
          %2086 = vmatprep.subr.bf16.mxu0 0
          %2087 = vmatpush2.bf16.msra.mxu0 0
          %2088 = vmatprep.mubr.bf16.mxu0 0
          %2089 = vmatmul.mubr.bf16.gmra.mxu0 %v2054
          %v2090 = vpop.f32.mrf.mxu0
          %v2091 = vadd.f32 %v2040, %v2090
          %v2092 = vpop.f32.mrf.mxu0
          %v2093 = vpop.f32.mrf.mxu0
          %v2094 = vpop.f32.mrf.mxu0
          %2095 = vdwg.mxu0
          %v2096 = vadd.f32 %v1116, %v2091
          %v2097 = vsel %vm938, %v2096, 0.0
          %2098 = vadd.xlane.f32.xlu0 %v2097
          %v2099 = vpop.xlane.xlu0 %2098
          %v2100 = vmul.f32 %v2099, %v942
          %v2101 = vsub.f32 %v2096, %v2100
          %v2102 = vmul.f32 %v2101, %v2101
          %v2103 = vsel %vm938, %v2102, 0.0
          %2104 = vadd.xlane.f32.xlu0 %v2103
          %v2105 = vpop.xlane.xlu0 %2104
          %v2106 = vmul.f32 %v2105, %v942
          %v2107 = vadd.f32 %v2106, 1e-05
          %v2108 = vrsqrt.pop %v2107
          %v2109 = vmul.f32 %v2101, %v2108
          %v2110 = vlaneseq
          %v2111 = vshrl.u32 %v2110, 7
          %v2112 = vsub.s32 6, %v2111
          %v2113 = vrot.slane %v919, %v2112
          %v2114 = vmul.f32 %v2109, %v2113
          %v2115 = vlaneseq
          %v2116 = vshrl.u32 %v2115, 7
          %v2117 = vsub.s32 7, %v2116
          %v2118 = vrot.slane %v919, %v2117
          %v2119 = vadd.f32 %v2114, %v2118
          %v2120 = vld [vmem:[%s882] sm:$0xf]
          %v2121 = vld [vmem:[%s882 + $0x4] sm:$0xf]
          %v2122 = vld [vmem:[%s882 + $0x8] sm:$0xf]
          %v2123 = vld [vmem:[%s882 + $0xc] sm:$0xf]
          %v2124 = vpack.c.bf16 %v2119, %v2119
          %v2126 = vlaneseq
          %v2127 = vshrl.u32 %v2126, 7
          %v2128 = vsub.s32 0, %v2127
          %v2129 = vrot.slane %v923, %v2128
          %v2135 = vunpack.c.l.b16 %v2120
          %v2136 = vunpack.c.l.b16 %v2121
          %v2137 = vunpack.c.l.b16 %v2122
          %v2138 = vunpack.c.l.b16 %v2123
          %v2139 = vpack.c.b16 %v2136, %v2135
          %v2140 = vpack.c.b16 %v2138, %v2137
          %v2144 = vsel %vm938, %v2124, 0
          %2146 = vmatprep.subr.bf16.mxu0 0
          %2147 = vmatpush1.bf16.msra.mxu0 0
          %2148 = vmatprep.subr.bf16.mxu0 0
          %2149 = vmatpush1.bf16.msra.mxu0 0
          %2150 = vmatprep.subr.bf16.mxu0 0
          %2151 = vmatpush1.bf16.msra.mxu0 0
          %2152 = vmatprep.subr.bf16.mxu0 0
          %2153 = vmatpush1.bf16.msra.mxu0 0
          %2154 = vmatprep.subr.bf16.mxu0 0
          %2155 = vmatpush1.bf16.msra.mxu0 0
          %2156 = vmatprep.subr.bf16.mxu0 0
          %2157 = vmatpush1.bf16.msra.mxu0 0
          %2158 = vmatprep.subr.bf16.mxu0 0
          %2159 = vmatpush1.bf16.msra.mxu0 %v2140
          %2160 = vmatprep.subr.bf16.mxu0 0
          %2161 = vmatpush1.bf16.msra.mxu0 %v2139
          %2162 = vmatprep.subr.bf16.mxu0 0
          %2163 = vmatpush2.bf16.msra.mxu0 0
          %2164 = vmatprep.subr.bf16.mxu0 0
          %2165 = vmatpush2.bf16.msra.mxu0 0
          %2166 = vmatprep.subr.bf16.mxu0 0
          %2167 = vmatpush2.bf16.msra.mxu0 0
          %2168 = vmatprep.subr.bf16.mxu0 0
          %2169 = vmatpush2.bf16.msra.mxu0 0
          %2170 = vmatprep.subr.bf16.mxu0 0
          %2171 = vmatpush2.bf16.msra.mxu0 0
          %2172 = vmatprep.subr.bf16.mxu0 0
          %2173 = vmatpush2.bf16.msra.mxu0 0
          %2174 = vmatprep.subr.bf16.mxu0 0
          %2175 = vmatpush2.bf16.msra.mxu0 0
          %2176 = vmatprep.subr.bf16.mxu0 0
          %2177 = vmatpush2.bf16.msra.mxu0 0
          %2178 = vmatprep.mubr.bf16.mxu0 0
          %2179 = vmatmul.mubr.bf16.gmra.mxu0 %v2144
          %v2180 = vpop.f32.mrf.mxu0
          %v2181 = vadd.f32 %v2129, %v2180
          %v2182 = vpop.f32.mrf.mxu0
          %v2183 = vpop.f32.mrf.mxu0
          %v2184 = vpop.f32.mrf.mxu0
          %2185 = vdwg.mxu0
          %v2186 = vxor.u32 %v2181, 2147483648
          %v2187 = vmul.f32 %v2186, 1.442695
          %v2188 = vpow.pop %v2187
          %v2189 = vadd.f32 %v2188, 1.0
          %v2190 = vrcp.pop %v2189
          %v2191 = vmul.f32 1.0, %v2190
          %2193 = vrot.lane.b32.xlu0 %v2191, 64
          %v2194 = vpop.permute.xlu0 %2193
          %v2196 = vmul.f32 %v2181, %v2194
          %2197 = vst.msk [vmem:[#allocation2 + $0x8] sm:$0xff] %vm1071, %v2196
          %v2198 = vld [vmem:[%s886] sm:$0x7]
          %v2199 = vld [vmem:[#allocation2 + $0x7] sm:$0xff]
          %v2200 = vlaneseq
          %v2201 = vshrl.u32 %v2200, 7
          %v2202 = vsub.s32 0, %v2201
          %v2203 = vrot.slane %v2198, %v2202
          %v2204 = vmul.f32 %v2199, %v2203
          %v2205 = vadd.f32 %v2204, 0.0
          %v2206 = vld [vmem:[#allocation2 + $0x8] sm:$0xff]
          %v2207 = vlaneseq
          %v2208 = vshrl.u32 %v2207, 7
          %v2209 = vsub.s32 1, %v2208
          %v2210 = vrot.slane %v2198, %v2209
          %v2211 = vmul.f32 %v2206, %v2210
          %v2212 = vadd.f32 %v2205, %v2211
          %v2213 = vld [vmem:[#allocation2 + $0x9] sm:$0xff]
          %v2214 = vlaneseq
          %v2215 = vshrl.u32 %v2214, 7
          %v2216 = vsub.s32 2, %v2215
          %v2217 = vrot.slane %v2198, %v2216
          %v2218 = vmul.f32 %v2213, %v2217
          %v2219 = vadd.f32 %v2212, %v2218
          %v2220 = vlaneseq
          %v2221 = vshrl.u32 %v2220, 7
          %v2222 = vsub.s32 0, %v2221
          %v2223 = vrot.slane %v924, %v2222
          %v2224 = vadd.f32 %v2219, %v2223
          %v2225 = vlaneseq
          %v2226 = vshrl.u32 %v2225, 7
          %v2227 = vsub.s32 1, %v2226
          %v2228 = vrot.slane %v924, %v2227
          %v2229 = vmul.f32 %v2224, %v2228
          %v2230 = vlaneseq
          %v2231 = vshrl.u32 %v2230, 7
          %v2232 = vsub.s32 2, %v2231
          %v2233 = vrot.slane %v924, %v2232
          %v2234 = vadd.f32 %v2229, %v2233
          %v2235 = vxor.u32 %v2234, 2147483648
          %v2236 = vmul.f32 %v2235, 1.442695
          %v2237 = vpow.pop %v2236
          %v2238 = vadd.f32 %v2237, 1.0
          %v2239 = vrcp.pop %v2238
          %v2240 = vmul.f32 1.0, %v2239
          %v2241 = vmul.f32 %v2234, %v2240
          %v2242 = vld [vmem:[%s891] sm:$0xf]
          %v2243 = vld [vmem:[%s891 + $0x4] sm:$0xf]
          %v2244 = vld [vmem:[%s891 + $0x8] sm:$0xf]
          %v2245 = vld [vmem:[%s891 + $0xc] sm:$0xf]
          %v2246 = vld [vmem:[%s891 + $0x10] sm:$0xf]
          %v2247 = vld [vmem:[%s891 + $0x14] sm:$0xf]
          %v2248 = vld [vmem:[%s891 + $0x18] sm:$0xf]
          %v2249 = vld [vmem:[%s891 + $0x1c] sm:$0xf]
          %v2250 = vpack.c.bf16 %v2241, %v2241
          %v2251 = vlaneseq
          %v2252 = vshrl.u32 %v2251, 7
          %v2253 = vsub.s32 0, %v2252
          %v2254 = vrot.slane %v920, %v2253
          %v2263 = vunpack.c.l.b16 %v2242
          %v2264 = vunpack.c.l.b16 %v2243
          %v2265 = vunpack.c.l.b16 %v2244
          %v2266 = vunpack.c.l.b16 %v2245
          %v2267 = vunpack.c.l.b16 %v2246
          %v2268 = vunpack.c.l.b16 %v2247
          %v2269 = vunpack.c.l.b16 %v2248
          %v2270 = vunpack.c.l.b16 %v2249
          %v2271 = vpack.c.b16 %v2264, %v2263
          %v2272 = vpack.c.b16 %v2266, %v2265
          %v2273 = vpack.c.b16 %v2268, %v2267
          %v2274 = vpack.c.b16 %v2270, %v2269
          %v2280 = vsel %vm1071, %v2250, 0
          %2282 = vmatprep.subr.bf16.mxu0 0
          %2283 = vmatpush1.bf16.msra.mxu0 0
          %2284 = vmatprep.subr.bf16.mxu0 0
          %2285 = vmatpush1.bf16.msra.mxu0 0
          %2286 = vmatprep.subr.bf16.mxu0 0
          %2287 = vmatpush1.bf16.msra.mxu0 0
          %2288 = vmatprep.subr.bf16.mxu0 0
          %2289 = vmatpush1.bf16.msra.mxu0 0
          %2290 = vmatprep.subr.bf16.mxu0 0
          %2291 = vmatpush1.bf16.msra.mxu0 %v2274
          %2292 = vmatprep.subr.bf16.mxu0 0
          %2293 = vmatpush1.bf16.msra.mxu0 %v2273
          %2294 = vmatprep.subr.bf16.mxu0 0
          %2295 = vmatpush1.bf16.msra.mxu0 %v2272
          %2296 = vmatprep.subr.bf16.mxu0 0
          %2297 = vmatpush1.bf16.msra.mxu0 %v2271
          %2298 = vmatprep.subr.bf16.mxu0 0
          %2299 = vmatpush2.bf16.msra.mxu0 0
          %2300 = vmatprep.subr.bf16.mxu0 0
          %2301 = vmatpush2.bf16.msra.mxu0 0
          %2302 = vmatprep.subr.bf16.mxu0 0
          %2303 = vmatpush2.bf16.msra.mxu0 0
          %2304 = vmatprep.subr.bf16.mxu0 0
          %2305 = vmatpush2.bf16.msra.mxu0 0
          %2306 = vmatprep.subr.bf16.mxu0 0
          %2307 = vmatpush2.bf16.msra.mxu0 0
          %2308 = vmatprep.subr.bf16.mxu0 0
          %2309 = vmatpush2.bf16.msra.mxu0 0
          %2310 = vmatprep.subr.bf16.mxu0 0
          %2311 = vmatpush2.bf16.msra.mxu0 0
          %2312 = vmatprep.subr.bf16.mxu0 0
          %2313 = vmatpush2.bf16.msra.mxu0 0
          %2314 = vmatprep.mubr.bf16.mxu0 0
          %2315 = vmatmul.mubr.bf16.gmra.mxu0 %v2280
          %v2316 = vpop.f32.mrf.mxu0
          %v2317 = vadd.f32 %v2254, %v2316
          %v2318 = vpop.f32.mrf.mxu0
          %v2319 = vpop.f32.mrf.mxu0
          %v2320 = vpop.f32.mrf.mxu0
          %2321 = vdwg.mxu0
          %v2322 = vadd.f32 %v2096, %v2317
          %v2323 = vsel %vm938, %v2322, 0.0
          %2324 = vadd.xlane.f32.xlu0 %v2323
          %v2325 = vpop.xlane.xlu0 %2324
          %v2326 = vmul.f32 %v2325, %v942
          %v2327 = vsub.f32 %v2322, %v2326
          %v2328 = vmul.f32 %v2327, %v2327
          %v2329 = vsel %vm938, %v2328, 0.0
          %2330 = vadd.xlane.f32.xlu0 %v2329
          %v2331 = vpop.xlane.xlu0 %2330
          %v2332 = vmul.f32 %v2331, %v942
          %v2333 = vadd.f32 %v2332, 1e-05
          %v2334 = vrsqrt.pop %v2333
          %v2335 = vmul.f32 %v2327, %v2334
          %v2336 = vlaneseq
          %v2337 = vshrl.u32 %v2336, 7
          %v2338 = vsub.s32 1, %v2337
          %v2339 = vrot.slane %v920, %v2338
          %v2340 = vmul.f32 %v2335, %v2339
          %v2341 = vlaneseq
          %v2342 = vshrl.u32 %v2341, 7
          %v2343 = vsub.s32 2, %v2342
          %v2344 = vrot.slane %v920, %v2343
          %v2345 = vadd.f32 %v2340, %v2344
          %v2346 = vld [vmem:[%s896] sm:$0xf]
          %v2347 = vld [vmem:[%s896 + $0x4] sm:$0xf]
          %v2348 = vld [vmem:[%s896 + $0x8] sm:$0xf]
          %v2349 = vld [vmem:[%s896 + $0xc] sm:$0xf]
          %v2350 = vpack.c.bf16 %v2345, %v2345
          %v2351 = vlaneseq
          %v2352 = vshrl.u32 %v2351, 7
          %v2353 = vsub.s32 1, %v2352
          %v2354 = vrot.slane %v921, %v2353
          %v2359 = vunpack.c.l.b16 %v2346
          %v2360 = vunpack.c.l.b16 %v2347
          %v2361 = vunpack.c.l.b16 %v2348
          %v2362 = vunpack.c.l.b16 %v2349
          %v2363 = vpack.c.b16 %v2360, %v2359
          %v2364 = vpack.c.b16 %v2362, %v2361
          %v2368 = vsel %vm938, %v2350, 0
          %2370 = vmatprep.subr.bf16.mxu0 0
          %2371 = vmatpush1.bf16.msra.mxu0 0
          %2372 = vmatprep.subr.bf16.mxu0 0
          %2373 = vmatpush1.bf16.msra.mxu0 0
          %2374 = vmatprep.subr.bf16.mxu0 0
          %2375 = vmatpush1.bf16.msra.mxu0 0
          %2376 = vmatprep.subr.bf16.mxu0 0
          %2377 = vmatpush1.bf16.msra.mxu0 0
          %2378 = vmatprep.subr.bf16.mxu0 0
          %2379 = vmatpush1.bf16.msra.mxu0 0
          %2380 = vmatprep.subr.bf16.mxu0 0
          %2381 = vmatpush1.bf16.msra.mxu0 0
          %2382 = vmatprep.subr.bf16.mxu0 0
          %2383 = vmatpush1.bf16.msra.mxu0 %v2364
          %2384 = vmatprep.subr.bf16.mxu0 0
          %2385 = vmatpush1.bf16.msra.mxu0 %v2363
          %2386 = vmatprep.subr.bf16.mxu0 0
          %2387 = vmatpush2.bf16.msra.mxu0 0
          %2388 = vmatprep.subr.bf16.mxu0 0
          %2389 = vmatpush2.bf16.msra.mxu0 0
          %2390 = vmatprep.subr.bf16.mxu0 0
          %2391 = vmatpush2.bf16.msra.mxu0 0
          %2392 = vmatprep.subr.bf16.mxu0 0
          %2393 = vmatpush2.bf16.msra.mxu0 0
          %2394 = vmatprep.subr.bf16.mxu0 0
          %2395 = vmatpush2.bf16.msra.mxu0 0
          %2396 = vmatprep.subr.bf16.mxu0 0
          %2397 = vmatpush2.bf16.msra.mxu0 0
          %2398 = vmatprep.subr.bf16.mxu0 0
          %2399 = vmatpush2.bf16.msra.mxu0 0
          %2400 = vmatprep.subr.bf16.mxu0 0
          %2401 = vmatpush2.bf16.msra.mxu0 0
          %2402 = vmatprep.mubr.bf16.mxu0 0
          %2403 = vmatmul.mubr.bf16.gmra.mxu0 %v2368
          %v2404 = vpop.f32.mrf.mxu0
          %v2405 = vadd.f32 %v2354, %v2404
          %v2406 = vpop.f32.mrf.mxu0
          %v2407 = vpop.f32.mrf.mxu0
          %v2408 = vpop.f32.mrf.mxu0
          %2409 = vdwg.mxu0
          %v2410 = vxor.u32 %v2405, 2147483648
          %v2411 = vmul.f32 %v2410, 1.442695
          %v2412 = vpow.pop %v2411
          %v2413 = vadd.f32 %v2412, 1.0
          %v2414 = vrcp.pop %v2413
          %v2415 = vmul.f32 1.0, %v2414
          %v2416 = vmul.f32 %v2405, %v2415
          %v2417 = vld [vmem:[%s901] sm:$0xf]
          %v2418 = vld [vmem:[%s901 + $0x4] sm:$0xf]
          %v2419 = vld [vmem:[%s901 + $0x8] sm:$0xf]
          %v2420 = vld [vmem:[%s901 + $0xc] sm:$0xf]
          %v2421 = vld [vmem:[%s901 + $0x10] sm:$0xf]
          %v2422 = vld [vmem:[%s901 + $0x14] sm:$0xf]
          %v2423 = vld [vmem:[%s901 + $0x18] sm:$0xf]
          %v2424 = vld [vmem:[%s901 + $0x1c] sm:$0xf]
          %v2425 = vpack.c.bf16 %v2416, %v2416
          %v2426 = vlaneseq
          %v2427 = vshrl.u32 %v2426, 7
          %v2428 = vsub.s32 3, %v2427
          %v2429 = vrot.slane %v920, %v2428
          %v2438 = vunpack.c.l.b16 %v2417
          %v2439 = vunpack.c.l.b16 %v2418
          %v2440 = vunpack.c.l.b16 %v2419
          %v2441 = vunpack.c.l.b16 %v2420
          %v2442 = vunpack.c.l.b16 %v2421
          %v2443 = vunpack.c.l.b16 %v2422
          %v2444 = vunpack.c.l.b16 %v2423
          %v2445 = vunpack.c.l.b16 %v2424
          %v2446 = vpack.c.b16 %v2439, %v2438
          %v2447 = vpack.c.b16 %v2441, %v2440
          %v2448 = vpack.c.b16 %v2443, %v2442
          %v2449 = vpack.c.b16 %v2445, %v2444
          %v2455 = vsel %vm1071, %v2425, 0
          %2457 = vmatprep.subr.bf16.mxu0 0
          %2458 = vmatpush1.bf16.msra.mxu0 0
          %2459 = vmatprep.subr.bf16.mxu0 0
          %2460 = vmatpush1.bf16.msra.mxu0 0
          %2461 = vmatprep.subr.bf16.mxu0 0
          %2462 = vmatpush1.bf16.msra.mxu0 0
          %2463 = vmatprep.subr.bf16.mxu0 0
          %2464 = vmatpush1.bf16.msra.mxu0 0
          %2465 = vmatprep.subr.bf16.mxu0 0
          %2466 = vmatpush1.bf16.msra.mxu0 %v2449
          %2467 = vmatprep.subr.bf16.mxu0 0
          %2468 = vmatpush1.bf16.msra.mxu0 %v2448
          %2469 = vmatprep.subr.bf16.mxu0 0
          %2470 = vmatpush1.bf16.msra.mxu0 %v2447
          %2471 = vmatprep.subr.bf16.mxu0 0
          %2472 = vmatpush1.bf16.msra.mxu0 %v2446
          %2473 = vmatprep.subr.bf16.mxu0 0
          %2474 = vmatpush2.bf16.msra.mxu0 0
          %2475 = vmatprep.subr.bf16.mxu0 0
          %2476 = vmatpush2.bf16.msra.mxu0 0
          %2477 = vmatprep.subr.bf16.mxu0 0
          %2478 = vmatpush2.bf16.msra.mxu0 0
          %2479 = vmatprep.subr.bf16.mxu0 0
          %2480 = vmatpush2.bf16.msra.mxu0 0
          %2481 = vmatprep.subr.bf16.mxu0 0
          %2482 = vmatpush2.bf16.msra.mxu0 0
          %2483 = vmatprep.subr.bf16.mxu0 0
          %2484 = vmatpush2.bf16.msra.mxu0 0
          %2485 = vmatprep.subr.bf16.mxu0 0
          %2486 = vmatpush2.bf16.msra.mxu0 0
          %2487 = vmatprep.subr.bf16.mxu0 0
          %2488 = vmatpush2.bf16.msra.mxu0 0
          %2489 = vmatprep.mubr.bf16.mxu0 0
          %2490 = vmatmul.mubr.bf16.gmra.mxu0 %v2455
          %v2491 = vpop.f32.mrf.mxu0
          %v2492 = vadd.f32 %v2429, %v2491
          %v2493 = vpop.f32.mrf.mxu0
          %v2494 = vpop.f32.mrf.mxu0
          %v2495 = vpop.f32.mrf.mxu0
          %2496 = vdwg.mxu0
          %v2497 = vmul.f32 %v2492, 0.5
          %v2498 = vadd.f32 %v2322, %v2497
          %v2499 = vsel %vm938, %v2498, 0.0
          %2500 = vadd.xlane.f32.xlu0 %v2499
          %v2501 = vpop.xlane.xlu0 %2500
          %v2502 = vmul.f32 %v2501, %v942
          %v2503 = vsub.f32 %v2498, %v2502
          %v2504 = vmul.f32 %v2503, %v2503
          %v2505 = vsel %vm938, %v2504, 0.0
          %2506 = vadd.xlane.f32.xlu0 %v2505
          %v2507 = vpop.xlane.xlu0 %2506
          %v2508 = vmul.f32 %v2507, %v942
          %v2509 = vadd.f32 %v2508, 1e-05
          %v2510 = vrsqrt.pop %v2509
          %v2511 = vmul.f32 %v2503, %v2510
          %v2512 = vlaneseq
          %v2513 = vshrl.u32 %v2512, 7
          %v2514 = vsub.s32 4, %v2513
          %v2515 = vrot.slane %v920, %v2514
          %v2516 = vmul.f32 %v2511, %v2515
          %v2517 = vlaneseq
          %v2518 = vshrl.u32 %v2517, 7
          %v2519 = vsub.s32 5, %v2518
          %v2520 = vrot.slane %v920, %v2519
          %v2521 = vadd.f32 %v2516, %v2520
          %2522 = vst.msk [vmem:[%s932] sm:$0xff] %vm938, %v2521
        $region101: #{tpu_custom_call.1} parent=91 // loop_footer
          %s930 = sadd.s32 1, %s926
        $region102: #{tpu_custom_call.1} parent=91 // loop_footer_branch
          %925 = sbr.rel target = $region98
        $region103: #{tpu_custom_call.1} parent=91 // loop_exit
          _
        // Predicated region
        $region104: #{tpu_custom_call.1} parent=91 // pred_check
          %p2523 = pneg %p528
        $region105: #{tpu_custom_call.1} parent=91 // pred_check_branch
          %2525 = sbr.rel (%p2523) target = $region107
        $region106: #{tpu_custom_call.1} parent=91 // pred_region
          %s2526 = smul.u32 2, %s34
          %s2528 = ssub.s32 256, 256
          %2529 = vsyncadd [#allocation6], %s2528
          %s2530 = smul.addr %s2526, 128
          %s2531 = scalar_lea.hbm %s18, %s2530
          %s2532 = sshll.u32 [#allocation5], 4
          %s2533 = int_to_ptr.vmem [resolvable:$true] %s2532
          %2538 = dma.vmem_to_hbm [thread:$0]  %s2533, 256, %s2531, [#allocation6], 128, 128, 8
        $region107: #{tpu_custom_call.1} parent=91 // pred_fallthru
          _
        // Predicated region
        $region108: #{tpu_custom_call.1} parent=91 // pred_check
          %p2539 = pneg %p528
        $region109: #{tpu_custom_call.1} parent=91 // pred_check_branch
          %2541 = sbr.rel (%p2539) target = $region111
        $region110: #{tpu_custom_call.1} parent=91 // pred_region
          %2542 = dma.done [#allocation6], 256
        $region111: #{tpu_custom_call.1} parent=91 // pred_fallthru
          _
      $region92: #{tpu_custom_call.1} parent=5 // pred_fallthru
        _
      %p2543 = scmp.le.s32.totalorder 2, %s25
      // Predicated region
      $region112: #{tpu_custom_call.1} parent=5 // pred_check
        %p2544 = pneg %p2543
      $region113: #{tpu_custom_call.1} parent=5 // pred_check_branch
        %2546 = sbr.rel (%p2544) target = $region115
      $region114: #{tpu_custom_call.1} parent=5 // pred_region
        %s2547 = ssub.s32 %s25, 2
      $region115: #{tpu_custom_call.1} parent=5 // pred_fallthru
        _
    $region6: #{tpu_custom_call.1} parent=1 // loop_footer
      %s29 = sadd.s32 1, %s25
    $region7: #{tpu_custom_call.1} parent=1 // loop_footer_branch
      %24 = sbr.rel target = $region3
    $region8: #{tpu_custom_call.1} parent=1 // loop_exit
      _
    %2548 = vsyncpa [#allocation6], 1
    %s2549 = scalar_lea.sflag [#allocation6], 1
    %2550 = vsyncpa %s2549, 1

</llo_original>
